<compile_context>
chip_gen: v5e
topology: v5e:2x2
jax: 0.10.0
libtpu: 0.0.40
codegen_flags: <defaults>
</compile_context>

<pallas_src>
import functools

import jax
import jax.numpy as jnp
from jax.experimental import pallas as pl
from jax.experimental.pallas import tpu as pltpu

_BN_EPS = 1e-5


# ---------------------------------------------------------------------------
# Kernel builder:  [BN -> ReLU ->] Linear [-> batch-stat accumulation]
# ---------------------------------------------------------------------------
def _make_layer_kernel(*, apply_bn_relu, compute_stats, inv_n):
    def kernel(*refs):
        idx = 0
        x_ref = refs[idx]; idx += 1
        if apply_bn_relu:
            mean_ref, rstd_ref, gamma_ref, beta_ref = refs[idx:idx + 4]; idx += 4
        w_ref, b_ref = refs[idx:idx + 2]; idx += 2
        z_ref = refs[idx]; idx += 1
        if compute_stats:
            mean_out_ref, rstd_out_ref = refs[idx:idx + 2]; idx += 2
            sum_sc, sumsq_sc = refs[idx:idx + 2]; idx += 2

        x = x_ref[...]                                        # f32 row tile
        if apply_bn_relu:
            # BatchNorm1d (batch stats of the previous layer's output) + ReLU, f32.
            x = (x - mean_ref[...]) * rstd_ref[...] * gamma_ref[...] + beta_ref[...]
            x = jnp.maximum(x, 0.0)

        # bf16 x bf16 -> f32 accumulate on the MXU.
        z = jnp.dot(x.astype(jnp.bfloat16), w_ref[...],
                    preferred_element_type=jnp.float32) + b_ref[...]
        z_ref[...] = z

        if compute_stats:
            step = pl.program_id(0)

            @pl.when(step == 0)
            def _init():
                sum_sc[...] = jnp.zeros_like(sum_sc)
                sumsq_sc[...] = jnp.zeros_like(sumsq_sc)

            # Single-pass batch stats: accumulate sum and sum(z^2) per feature.
            sum_sc[...] += jnp.sum(z, axis=0, keepdims=True)
            sumsq_sc[...] += jnp.sum(z * z, axis=0, keepdims=True)

            @pl.when(step == pl.num_programs(0) - 1)
            def _finalize():
                mean = sum_sc[...] * inv_n
                var = sumsq_sc[...] * inv_n - mean * mean      # biased variance
                mean_out_ref[...] = mean
                rstd_out_ref[...] = jax.lax.rsqrt(var + _BN_EPS)

    return kernel


# ---------------------------------------------------------------------------
# pallas_call wrapper (one call per layer)
# ---------------------------------------------------------------------------
def _vmem_limit_bytes(tile_rows, in_f, out_f):
    need = (2 * tile_rows * in_f * 4        # double-buffered input row tile (f32)
            + 2 * tile_rows * out_f * 4     # double-buffered output row tile (f32)
            + in_f * out_f * 2              # resident bf16 weights
            + 16 * (in_f + out_f) * 4       # bias / BN vectors / stats scratch
            + (2 << 20))                    # headroom
    # 48 MiB cap keeps it safe on v7x (64 MiB physical VMEM).
    return int(min(max(need, 16 << 20), 48 << 20))


def fused_layer(x, w, b, bn=None, *, compute_stats, tile_rows):
    """One MLP layer:  y = (relu(batchnorm(x)) if bn else x) @ W + b.

    bn = (mean, rstd, gamma, beta) for the *input* x (stats of previous layer).
    If compute_stats, also returns (mean, rstd) of y over the batch dimension.
    """
    n, in_f = x.shape
    out_f = w.shape[1]
    assert n % tile_rows == 0, "demo requires N % tile_rows == 0"
    assert in_f % 128 == 0 and out_f % 128 == 0 and tile_rows % 8 == 0
    # TODO(synk): ragged N / non-128-multiple feature dims (real ogbn-products:
    # in_feats=100, n_classes=47) need padding plus row-masking in the stats
    # accumulation; demo shapes are chosen lane-dense.

    apply_bn_relu = bn is not None
    kernel = _make_layer_kernel(apply_bn_relu=apply_bn_relu,
                                compute_stats=compute_stats,
                                inv_n=1.0 / n)

    inputs = [x]
    in_specs = [pl.BlockSpec((tile_rows, in_f), lambda i: (i, 0))]
    if apply_bn_relu:
        for arr in bn:                                     # mean, rstd, gamma, beta
            inputs.append(arr)
            in_specs.append(pl.BlockSpec((1, in_f), lambda i: (0, 0)))
    inputs += [w, b]
    in_specs += [pl.BlockSpec((in_f, out_f), lambda i: (0, 0)),   # VMEM-resident
                 pl.BlockSpec((1, out_f), lambda i: (0, 0))]

    out_shape = [jax.ShapeDtypeStruct((n, out_f), jnp.float32)]
    out_specs = [pl.BlockSpec((tile_rows, out_f), lambda i: (i, 0))]
    scratch_shapes = []
    if compute_stats:
        out_shape += [jax.ShapeDtypeStruct((1, out_f), jnp.float32),
                      jax.ShapeDtypeStruct((1, out_f), jnp.float32)]
        out_specs += [pl.BlockSpec((1, out_f), lambda i: (0, 0)),
                      pl.BlockSpec((1, out_f), lambda i: (0, 0))]
        scratch_shapes = [pltpu.VMEM((1, out_f), jnp.float32),
                          pltpu.VMEM((1, out_f), jnp.float32)]

    # Stats accumulation needs a sequential row axis; the final (stat-free)
    # layer can shard its row axis across TensorCores.
    semantics = ("arbitrary",) if compute_stats else ("parallel",)

    outs = pl.pallas_call(
        kernel,
        out_shape=tuple(out_shape),
        grid_spec=pltpu.PrefetchScalarGridSpec(
            num_scalar_prefetch=0,
            grid=(n // tile_rows,),
            in_specs=in_specs,
            out_specs=tuple(out_specs),
            scratch_shapes=scratch_shapes,
        ),
        compiler_params=pltpu.CompilerParams(
            dimension_semantics=semantics,
            vmem_limit_bytes=_vmem_limit_bytes(tile_rows, in_f, out_f),
        ),
    )(*inputs)

    if compute_stats:
        z, mean, rstd = outs
        return z, mean, rstd
    return outs[0]


# ---------------------------------------------------------------------------
# Parameters + forward (matches MLP module defaults: dropout=0, residual=False)
# ---------------------------------------------------------------------------
def init_mlp_params(key, in_feats, n_classes, n_layers, n_hidden):
    params = []
    for i in range(n_layers):
        in_hidden = n_hidden if i > 0 else in_feats
        out_hidden = n_hidden if i < n_layers - 1 else n_classes
        key, kw, kb = jax.random.split(key, 3)
        # nn.Linear default init: U(-1/sqrt(fan_in), 1/sqrt(fan_in))
        bound = 1.0 / (in_hidden ** 0.5)
        w = jax.random.uniform(kw, (in_hidden, out_hidden), jnp.float32,
                               minval=-bound, maxval=bound)
        b = jax.random.uniform(kb, (1, out_hidden), jnp.float32,
                               minval=-bound, maxval=bound)
        layer = {"w": w.astype(jnp.bfloat16), "b": b}      # bf16 weights for MXU
        if i < n_layers - 1:
            # BatchNorm1d default affine params.
            layer["gamma"] = jnp.ones((1, out_hidden), jnp.float32)
            layer["beta"] = jnp.zeros((1, out_hidden), jnp.float32)
        params.append(layer)
    return params


def mlp_forward(h, params, *, tile_rows):
    # input_drop / dropout have p=0.0 (module defaults) -> identity.
    # residual=False (module default) -> no skip connections.
    # TODO(synk): non-zero dropout would need pltpu.prng_random_bits masking.
    n_layers = len(params)
    bn_in = None
    for i, layer in enumerate(params):
        is_last = (i == n_layers - 1)
        if is_last:
            h = fused_layer(h, layer["w"], layer["b"], bn_in,
                            compute_stats=False, tile_rows=tile_rows)
        else:
            h, mean, rstd = fused_layer(h, layer["w"], layer["b"], bn_in,
                                        compute_stats=True, tile_rows=tile_rows)
            bn_in = (mean, rstd, layer["gamma"], layer["beta"])
    return h


# ---------------------------------------------------------------------------
if __name__ == "__main__":
    # Lane-dense demo shapes (feature dims multiples of 128, rows multiple of 8).
    # At real ogbn-products scale: tile_rows >= 512 (v5e/v6e), <= ~1024 on v7x
    # (64 MiB VMEM), and pad in_feats=100 -> 128, n_classes=47 -> 128.
    N, IN_FEATS, N_HIDDEN, N_CLASSES, N_LAYERS = 512, 128, 256, 128, 3
    TILE_ROWS = 128

    key = jax.random.PRNGKey(0)
    key, kx = jax.random.split(key)
    h = jax.random.normal(kx, (N, IN_FEATS), jnp.float32)
    params = init_mlp_params(key, IN_FEATS, N_CLASSES, N_LAYERS, N_HIDDEN)

    fwd = jax.jit(functools.partial(mlp_forward, tile_rows=TILE_ROWS))
    out = fwd(h, params)
    jax.block_until_ready(out)

    assert out.shape == (N, N_CLASSES), out.shape
    assert out.dtype == jnp.float32, out.dtype
    print("KERNEL_OK")
</pallas_src>

<mosaic_0001>
module attributes {stable_mosaic.version = 11 : i64} {
  func.func @kernel(%arg0: i32, %arg1: memref<128x256xf32, #tpu.memory_space<vmem>>, %arg2: memref<1x256xf32, #tpu.memory_space<vmem>>, %arg3: memref<1x256xf32, #tpu.memory_space<vmem>>, %arg4: memref<1x256xf32, #tpu.memory_space<vmem>>, %arg5: memref<1x256xf32, #tpu.memory_space<vmem>>, %arg6: memref<256x128xbf16, #tpu.memory_space<vmem>>, %arg7: memref<1x128xf32, #tpu.memory_space<vmem>>, %arg8: memref<128x128xf32, #tpu.memory_space<vmem>>) attributes {dimension_semantics = [#tpu.dimension_semantics<parallel>], iteration_bounds = array<i64: 4>, scalar_prefetch = 0 : i64, scratch_operands = 0 : i64, tpu.core_type = #tpu.core_type<tc>, window_params = [{transform_indices = @transform_0, window_bounds = array<i64: 128, 256>}, {pipeline_mode = #tpu.pipeline_mode<synchronous>, transform_indices = @transform_1, window_bounds = array<i64: 1, 256>}, {pipeline_mode = #tpu.pipeline_mode<synchronous>, transform_indices = @transform_2, window_bounds = array<i64: 1, 256>}, {pipeline_mode = #tpu.pipeline_mode<synchronous>, transform_indices = @transform_3, window_bounds = array<i64: 1, 256>}, {pipeline_mode = #tpu.pipeline_mode<synchronous>, transform_indices = @transform_4, window_bounds = array<i64: 1, 256>}, {pipeline_mode = #tpu.pipeline_mode<synchronous>, transform_indices = @transform_5, window_bounds = array<i64: 256, 128>}, {pipeline_mode = #tpu.pipeline_mode<synchronous>, transform_indices = @transform_6, window_bounds = array<i64: 1, 128>}, {transform_indices = @transform_7, window_bounds = array<i64: 128, 128>}]} {
    %c0 = arith.constant 0 : index
    %c0_0 = arith.constant 0 : index
    %0 = vector.load %arg1[%c0, %c0_0] : memref<128x256xf32, #tpu.memory_space<vmem>>, vector<128x256xf32>
    %c0_1 = arith.constant 0 : index
    %c0_2 = arith.constant 0 : index
    %1 = vector.load %arg2[%c0_1, %c0_2] : memref<1x256xf32, #tpu.memory_space<vmem>>, vector<1x256xf32>
    %2 = vector.broadcast %1 : vector<1x256xf32> to vector<128x256xf32>
    %3 = arith.subf %0, %2 : vector<128x256xf32>
    %c0_3 = arith.constant 0 : index
    %c0_4 = arith.constant 0 : index
    %4 = vector.load %arg3[%c0_3, %c0_4] : memref<1x256xf32, #tpu.memory_space<vmem>>, vector<1x256xf32>
    %5 = vector.broadcast %4 : vector<1x256xf32> to vector<128x256xf32>
    %6 = arith.mulf %3, %5 : vector<128x256xf32>
    %c0_5 = arith.constant 0 : index
    %c0_6 = arith.constant 0 : index
    %7 = vector.load %arg4[%c0_5, %c0_6] : memref<1x256xf32, #tpu.memory_space<vmem>>, vector<1x256xf32>
    %8 = vector.broadcast %7 : vector<1x256xf32> to vector<128x256xf32>
    %9 = arith.mulf %6, %8 : vector<128x256xf32>
    %c0_7 = arith.constant 0 : index
    %c0_8 = arith.constant 0 : index
    %10 = vector.load %arg5[%c0_7, %c0_8] : memref<1x256xf32, #tpu.memory_space<vmem>>, vector<1x256xf32>
    %11 = vector.broadcast %10 : vector<1x256xf32> to vector<128x256xf32>
    %12 = arith.addf %9, %11 : vector<128x256xf32>
    %cst = arith.constant 0.000000e+00 : f32
    %13 = vector.broadcast %cst : f32 to vector<128x256xf32>
    %14 = arith.maximumf %12, %13 : vector<128x256xf32>
    %15 = arith.truncf %14 : vector<128x256xf32> to vector<128x256xbf16>
    %c0_9 = arith.constant 0 : index
    %c0_10 = arith.constant 0 : index
    %16 = vector.load %arg6[%c0_9, %c0_10] : memref<256x128xbf16, #tpu.memory_space<vmem>>, vector<256x128xbf16>
    %cst_11 = arith.constant dense<0.000000e+00> : vector<128x128xf32>
    %17 = tpu.matmul %15, %16, %cst_11 {dimension_numbers = #tpu.dot_dimension_numbers<[1], [0], [0], [1], [0, 0, 1, 1], [], []>} : vector<128x256xbf16>, vector<256x128xbf16>, vector<128x128xf32> -> vector<128x128xf32>
    %c0_12 = arith.constant 0 : index
    %c0_13 = arith.constant 0 : index
    %18 = vector.load %arg7[%c0_12, %c0_13] : memref<1x128xf32, #tpu.memory_space<vmem>>, vector<1x128xf32>
    %19 = vector.broadcast %18 : vector<1x128xf32> to vector<128x128xf32>
    %20 = arith.addf %17, %19 : vector<128x128xf32>
    %c0_14 = arith.constant 0 : index
    %c0_15 = arith.constant 0 : index
    %21 = vector.load %arg8[%c0_14, %c0_15] : memref<128x128xf32, #tpu.memory_space<vmem>>, vector<128x128xf32>
    tpu.vector_store %arg8[%c0_14, %c0_15], %20 {strides = array<i32>} : memref<128x128xf32, #tpu.memory_space<vmem>>, vector<128x128xf32>,
    return
  }
  func.func @transform_0(%arg0: i32) -> (i32, i32) {
    %c0_i32 = arith.constant 0 : i32
    %c0_i32_0 = arith.constant 0 : i32
    return %arg0, %c0_i32 : i32, i32
  }
  func.func @transform_1(%arg0: i32) -> (i32, i32) {
    %c0_i32 = arith.constant 0 : i32
    %c0_i32_0 = arith.constant 0 : i32
    %c0_i32_1 = arith.constant 0 : i32
    return %c0_i32, %c0_i32_0 : i32, i32
  }
  func.func @transform_2(%arg0: i32) -> (i32, i32) {
    %c0_i32 = arith.constant 0 : i32
    %c0_i32_0 = arith.constant 0 : i32
    %c0_i32_1 = arith.constant 0 : i32
    return %c0_i32, %c0_i32_0 : i32, i32
  }
  func.func @transform_3(%arg0: i32) -> (i32, i32) {
    %c0_i32 = arith.constant 0 : i32
    %c0_i32_0 = arith.constant 0 : i32
    %c0_i32_1 = arith.constant 0 : i32
    return %c0_i32, %c0_i32_0 : i32, i32
  }
  func.func @transform_4(%arg0: i32) -> (i32, i32) {
    %c0_i32 = arith.constant 0 : i32
    %c0_i32_0 = arith.constant 0 : i32
    %c0_i32_1 = arith.constant 0 : i32
    return %c0_i32, %c0_i32_0 : i32, i32
  }
  func.func @transform_5(%arg0: i32) -> (i32, i32) {
    %c0_i32 = arith.constant 0 : i32
    %c0_i32_0 = arith.constant 0 : i32
    %c0_i32_1 = arith.constant 0 : i32
    return %c0_i32, %c0_i32_0 : i32, i32
  }
  func.func @transform_6(%arg0: i32) -> (i32, i32) {
    %c0_i32 = arith.constant 0 : i32
    %c0_i32_0 = arith.constant 0 : i32
    %c0_i32_1 = arith.constant 0 : i32
    return %c0_i32, %c0_i32_0 : i32, i32
  }
  func.func @transform_7(%arg0: i32) -> (i32, i32) {
    %c0_i32 = arith.constant 0 : i32
    %c0_i32_0 = arith.constant 0 : i32
    return %arg0, %c0_i32 : i32, i32
  }
}

module attributes {stable_mosaic.version = 11 : i64} {
  func.func @kernel(%arg0: i32, %arg1: memref<128x128xf32, #tpu.memory_space<vmem>>, %arg2: memref<128x256xbf16, #tpu.memory_space<vmem>>, %arg3: memref<1x256xf32, #tpu.memory_space<vmem>>, %arg4: memref<128x256xf32, #tpu.memory_space<vmem>>, %arg5: memref<1x256xf32, #tpu.memory_space<vmem>>, %arg6: memref<1x256xf32, #tpu.memory_space<vmem>>, %arg7: memref<1x256xf32, #tpu.memory_space<vmem>>, %arg8: memref<1x256xf32, #tpu.memory_space<vmem>>) attributes {dimension_semantics = [#tpu.dimension_semantics<arbitrary>], iteration_bounds = array<i64: 4>, scalar_prefetch = 0 : i64, scratch_operands = 2 : i64, tpu.core_type = #tpu.core_type<tc>, window_params = [{transform_indices = @transform_0, window_bounds = array<i64: 128, 128>}, {pipeline_mode = #tpu.pipeline_mode<synchronous>, transform_indices = @transform_1, window_bounds = array<i64: 128, 256>}, {pipeline_mode = #tpu.pipeline_mode<synchronous>, transform_indices = @transform_2, window_bounds = array<i64: 1, 256>}, {transform_indices = @transform_3, window_bounds = array<i64: 128, 256>}, {pipeline_mode = #tpu.pipeline_mode<synchronous>, transform_indices = @transform_4, window_bounds = array<i64: 1, 256>}, {pipeline_mode = #tpu.pipeline_mode<synchronous>, transform_indices = @transform_5, window_bounds = array<i64: 1, 256>}]} {
    %c0 = arith.constant 0 : index
    %c0_0 = arith.constant 0 : index
    %0 = vector.load %arg1[%c0, %c0_0] : memref<128x128xf32, #tpu.memory_space<vmem>>, vector<128x128xf32>
    %1 = arith.truncf %0 : vector<128x128xf32> to vector<128x128xbf16>
    %c0_1 = arith.constant 0 : index
    %c0_2 = arith.constant 0 : index
    %2 = vector.load %arg2[%c0_1, %c0_2] : memref<128x256xbf16, #tpu.memory_space<vmem>>, vector<128x256xbf16>
    %cst = arith.constant dense<0.000000e+00> : vector<128x256xf32>
    %3 = tpu.matmul %1, %2, %cst {dimension_numbers = #tpu.dot_dimension_numbers<[1], [0], [0], [1], [0, 0, 1, 1], [], []>} : vector<128x128xbf16>, vector<128x256xbf16>, vector<128x256xf32> -> vector<128x256xf32>
    %c0_3 = arith.constant 0 : index
    %c0_4 = arith.constant 0 : index
    %4 = vector.load %arg3[%c0_3, %c0_4] : memref<1x256xf32, #tpu.memory_space<vmem>>, vector<1x256xf32>
    %5 = vector.broadcast %4 : vector<1x256xf32> to vector<128x256xf32>
    %6 = arith.addf %3, %5 : vector<128x256xf32>
    %c0_5 = arith.constant 0 : index
    %c0_6 = arith.constant 0 : index
    %7 = vector.load %arg4[%c0_5, %c0_6] : memref<128x256xf32, #tpu.memory_space<vmem>>, vector<128x256xf32>
    tpu.vector_store %arg4[%c0_5, %c0_6], %6 {strides = array<i32>} : memref<128x256xf32, #tpu.memory_space<vmem>>, vector<128x256xf32>,
    %c0_i32 = arith.constant 0 : i32
    %8 = arith.cmpi eq, %arg0, %c0_i32 : i32
    %9 = arith.extui %8 : i1 to i32
    %c0_i32_7 = arith.constant 0 : i32
    %10 = arith.cmpi ne, %9, %c0_i32_7 : i32
    scf.if %10 {
      %cst_19 = arith.constant 0.000000e+00 : f32
      %25 = vector.broadcast %cst_19 : f32 to vector<1x256xf32>
      %c0_20 = arith.constant 0 : index
      %c0_21 = arith.constant 0 : index
      %26 = vector.load %arg7[%c0_20, %c0_21] : memref<1x256xf32, #tpu.memory_space<vmem>>, vector<1x256xf32>
      tpu.vector_store %arg7[%c0_20, %c0_21], %25 {strides = array<i32>} : memref<1x256xf32, #tpu.memory_space<vmem>>, vector<1x256xf32>,
      %cst_22 = arith.constant 0.000000e+00 : f32
      %27 = vector.broadcast %cst_22 : f32 to vector<1x256xf32>
      %c0_23 = arith.constant 0 : index
      %c0_24 = arith.constant 0 : index
      %28 = vector.load %arg8[%c0_23, %c0_24] : memref<1x256xf32, #tpu.memory_space<vmem>>, vector<1x256xf32>
      tpu.vector_store %arg8[%c0_23, %c0_24], %27 {strides = array<i32>} : memref<1x256xf32, #tpu.memory_space<vmem>>, vector<1x256xf32>,
    } else {
    }
    %c0_8 = arith.constant 0 : index
    %c0_9 = arith.constant 0 : index
    %11 = vector.load %arg7[%c0_8, %c0_9] : memref<1x256xf32, #tpu.memory_space<vmem>>, vector<1x256xf32>
    %cst_10 = arith.constant dense<0.000000e+00> : vector<256xf32>
    %12 = vector.multi_reduction <add>, %6, %cst_10 [0] : vector<128x256xf32> to vector<256xf32>
    %13 = vector.shape_cast %12 : vector<256xf32> to vector<1x256xf32>
    %14 = arith.addf %11, %13 : vector<1x256xf32>
    %c0_11 = arith.constant 0 : index
    %c0_12 = arith.constant 0 : index
    %15 = vector.load %arg7[%c0_11, %c0_12] : memref<1x256xf32, #tpu.memory_space<vmem>>, vector<1x256xf32>
    tpu.vector_store %arg7[%c0_11, %c0_12], %14 {strides = array<i32>} : memref<1x256xf32, #tpu.memory_space<vmem>>, vector<1x256xf32>,
    %c0_13 = arith.constant 0 : index
    %c0_14 = arith.constant 0 : index
    %16 = vector.load %arg8[%c0_13, %c0_14] : memref<1x256xf32, #tpu.memory_space<vmem>>, vector<1x256xf32>
    %17 = arith.mulf %6, %6 : vector<128x256xf32>
    %cst_15 = arith.constant dense<0.000000e+00> : vector<256xf32>
    %18 = vector.multi_reduction <add>, %17, %cst_15 [0] : vector<128x256xf32> to vector<256xf32>
    %19 = vector.shape_cast %18 : vector<256xf32> to vector<1x256xf32>
    %20 = arith.addf %16, %19 : vector<1x256xf32>
    %c0_16 = arith.constant 0 : index
    %c0_17 = arith.constant 0 : index
    %21 = vector.load %arg8[%c0_16, %c0_17] : memref<1x256xf32, #tpu.memory_space<vmem>>, vector<1x256xf32>
    tpu.vector_store %arg8[%c0_16, %c0_17], %20 {strides = array<i32>} : memref<1x256xf32, #tpu.memory_space<vmem>>, vector<1x256xf32>,
    %c3_i32 = arith.constant 3 : i32
    %22 = arith.cmpi eq, %arg0, %c3_i32 : i32
    %23 = arith.extui %22 : i1 to i32
    %c0_i32_18 = arith.constant 0 : i32
    %24 = arith.cmpi ne, %23, %c0_i32_18 : i32
    scf.if %24 {
      %c0_19 = arith.constant 0 : index
      %c0_20 = arith.constant 0 : index
      %25 = vector.load %arg7[%c0_19, %c0_20] : memref<1x256xf32, #tpu.memory_space<vmem>>, vector<1x256xf32>
      %cst_21 = arith.constant 0.001953125 : f32
      %26 = vector.broadcast %cst_21 : f32 to vector<1x256xf32>
      %27 = arith.mulf %25, %26 : vector<1x256xf32>
      %c0_22 = arith.constant 0 : index
      %c0_23 = arith.constant 0 : index
      %28 = vector.load %arg8[%c0_22, %c0_23] : memref<1x256xf32, #tpu.memory_space<vmem>>, vector<1x256xf32>
      %cst_24 = arith.constant 0.001953125 : f32
      %29 = vector.broadcast %cst_24 : f32 to vector<1x256xf32>
      %30 = arith.mulf %28, %29 : vector<1x256xf32>
      %31 = arith.mulf %27, %27 : vector<1x256xf32>
      %32 = arith.subf %30, %31 : vector<1x256xf32>
      %c0_25 = arith.constant 0 : index
      %c0_26 = arith.constant 0 : index
      %33 = vector.load %arg5[%c0_25, %c0_26] : memref<1x256xf32, #tpu.memory_space<vmem>>, vector<1x256xf32>
      tpu.vector_store %arg5[%c0_25, %c0_26], %27 {strides = array<i32>} : memref<1x256xf32, #tpu.memory_space<vmem>>, vector<1x256xf32>,
      %cst_27 = arith.constant 9.99999974E-6 : f32
      %34 = vector.broadcast %cst_27 : f32 to vector<1x256xf32>
      %35 = arith.addf %32, %34 : vector<1x256xf32>
      %36 = math.rsqrt %35 : vector<1x256xf32>
      %c0_28 = arith.constant 0 : index
      %c0_29 = arith.constant 0 : index
      %37 = vector.load %arg6[%c0_28, %c0_29] : memref<1x256xf32, #tpu.memory_space<vmem>>, vector<1x256xf32>
      tpu.vector_store %arg6[%c0_28, %c0_29], %36 {strides = array<i32>} : memref<1x256xf32, #tpu.memory_space<vmem>>, vector<1x256xf32>,
    } else {
    }
    return
  }
  func.func @transform_0(%arg0: i32) -> (i32, i32) {
    %c0_i32 = arith.constant 0 : i32
    %c0_i32_0 = arith.constant 0 : i32
    return %arg0, %c0_i32 : i32, i32
  }
  func.func @transform_1(%arg0: i32) -> (i32, i32) {
    %c0_i32 = arith.constant 0 : i32
    %c0_i32_0 = arith.constant 0 : i32
    %c0_i32_1 = arith.constant 0 : i32
    return %c0_i32, %c0_i32_0 : i32, i32
  }
  func.func @transform_2(%arg0: i32) -> (i32, i32) {
    %c0_i32 = arith.constant 0 : i32
    %c0_i32_0 = arith.constant 0 : i32
    %c0_i32_1 = arith.constant 0 : i32
    return %c0_i32, %c0_i32_0 : i32, i32
  }
  func.func @transform_3(%arg0: i32) -> (i32, i32) {
    %c0_i32 = arith.constant 0 : i32
    %c0_i32_0 = arith.constant 0 : i32
    return %arg0, %c0_i32 : i32, i32
  }
  func.func @transform_4(%arg0: i32) -> (i32, i32) {
    %c0_i32 = arith.constant 0 : i32
    %c0_i32_0 = arith.constant 0 : i32
    %c0_i32_1 = arith.constant 0 : i32
    return %c0_i32, %c0_i32_0 : i32, i32
  }
  func.func @transform_5(%arg0: i32) -> (i32, i32) {
    %c0_i32 = arith.constant 0 : i32
    %c0_i32_0 = arith.constant 0 : i32
    %c0_i32_1 = arith.constant 0 : i32
    return %c0_i32, %c0_i32_0 : i32, i32
  }
}

module attributes {stable_mosaic.version = 11 : i64} {
  func.func @kernel(%arg0: i32, %arg1: memref<128x256xf32, #tpu.memory_space<vmem>>, %arg2: memref<1x256xf32, #tpu.memory_space<vmem>>, %arg3: memref<1x256xf32, #tpu.memory_space<vmem>>, %arg4: memref<1x256xf32, #tpu.memory_space<vmem>>, %arg5: memref<1x256xf32, #tpu.memory_space<vmem>>, %arg6: memref<256x256xbf16, #tpu.memory_space<vmem>>, %arg7: memref<1x256xf32, #tpu.memory_space<vmem>>, %arg8: memref<128x256xf32, #tpu.memory_space<vmem>>, %arg9: memref<1x256xf32, #tpu.memory_space<vmem>>, %arg10: memref<1x256xf32, #tpu.memory_space<vmem>>, %arg11: memref<1x256xf32, #tpu.memory_space<vmem>>, %arg12: memref<1x256xf32, #tpu.memory_space<vmem>>) attributes {dimension_semantics = [#tpu.dimension_semantics<arbitrary>], iteration_bounds = array<i64: 4>, scalar_prefetch = 0 : i64, scratch_operands = 2 : i64, tpu.core_type = #tpu.core_type<tc>, window_params = [{transform_indices = @transform_0, window_bounds = array<i64: 128, 256>}, {pipeline_mode = #tpu.pipeline_mode<synchronous>, transform_indices = @transform_1, window_bounds = array<i64: 1, 256>}, {pipeline_mode = #tpu.pipeline_mode<synchronous>, transform_indices = @transform_2, window_bounds = array<i64: 1, 256>}, {pipeline_mode = #tpu.pipeline_mode<synchronous>, transform_indices = @transform_3, window_bounds = array<i64: 1, 256>}, {pipeline_mode = #tpu.pipeline_mode<synchronous>, transform_indices = @transform_4, window_bounds = array<i64: 1, 256>}, {pipeline_mode = #tpu.pipeline_mode<synchronous>, transform_indices = @transform_5, window_bounds = array<i64: 256, 256>}, {pipeline_mode = #tpu.pipeline_mode<synchronous>, transform_indices = @transform_6, window_bounds = array<i64: 1, 256>}, {transform_indices = @transform_7, window_bounds = array<i64: 128, 256>}, {pipeline_mode = #tpu.pipeline_mode<synchronous>, transform_indices = @transform_8, window_bounds = array<i64: 1, 256>}, {pipeline_mode = #tpu.pipeline_mode<synchronous>, transform_indices = @transform_9, window_bounds = array<i64: 1, 256>}]} {
    %c0 = arith.constant 0 : index
    %c0_0 = arith.constant 0 : index
    %0 = vector.load %arg1[%c0, %c0_0] : memref<128x256xf32, #tpu.memory_space<vmem>>, vector<128x256xf32>
    %c0_1 = arith.constant 0 : index
    %c0_2 = arith.constant 0 : index
    %1 = vector.load %arg2[%c0_1, %c0_2] : memref<1x256xf32, #tpu.memory_space<vmem>>, vector<1x256xf32>
    %2 = vector.broadcast %1 : vector<1x256xf32> to vector<128x256xf32>
    %3 = arith.subf %0, %2 : vector<128x256xf32>
    %c0_3 = arith.constant 0 : index
    %c0_4 = arith.constant 0 : index
    %4 = vector.load %arg3[%c0_3, %c0_4] : memref<1x256xf32, #tpu.memory_space<vmem>>, vector<1x256xf32>
    %5 = vector.broadcast %4 : vector<1x256xf32> to vector<128x256xf32>
    %6 = arith.mulf %3, %5 : vector<128x256xf32>
    %c0_5 = arith.constant 0 : index
    %c0_6 = arith.constant 0 : index
    %7 = vector.load %arg4[%c0_5, %c0_6] : memref<1x256xf32, #tpu.memory_space<vmem>>, vector<1x256xf32>
    %8 = vector.broadcast %7 : vector<1x256xf32> to vector<128x256xf32>
    %9 = arith.mulf %6, %8 : vector<128x256xf32>
    %c0_7 = arith.constant 0 : index
    %c0_8 = arith.constant 0 : index
    %10 = vector.load %arg5[%c0_7, %c0_8] : memref<1x256xf32, #tpu.memory_space<vmem>>, vector<1x256xf32>
    %11 = vector.broadcast %10 : vector<1x256xf32> to vector<128x256xf32>
    %12 = arith.addf %9, %11 : vector<128x256xf32>
    %cst = arith.constant 0.000000e+00 : f32
    %13 = vector.broadcast %cst : f32 to vector<128x256xf32>
    %14 = arith.maximumf %12, %13 : vector<128x256xf32>
    %15 = arith.truncf %14 : vector<128x256xf32> to vector<128x256xbf16>
    %c0_9 = arith.constant 0 : index
    %c0_10 = arith.constant 0 : index
    %16 = vector.load %arg6[%c0_9, %c0_10] : memref<256x256xbf16, #tpu.memory_space<vmem>>, vector<256x256xbf16>
    %cst_11 = arith.constant dense<0.000000e+00> : vector<128x256xf32>
    %17 = tpu.matmul %15, %16, %cst_11 {dimension_numbers = #tpu.dot_dimension_numbers<[1], [0], [0], [1], [0, 0, 1, 1], [], []>} : vector<128x256xbf16>, vector<256x256xbf16>, vector<128x256xf32> -> vector<128x256xf32>
    %c0_12 = arith.constant 0 : index
    %c0_13 = arith.constant 0 : index
    %18 = vector.load %arg7[%c0_12, %c0_13] : memref<1x256xf32, #tpu.memory_space<vmem>>, vector<1x256xf32>
    %19 = vector.broadcast %18 : vector<1x256xf32> to vector<128x256xf32>
    %20 = arith.addf %17, %19 : vector<128x256xf32>
    %c0_14 = arith.constant 0 : index
    %c0_15 = arith.constant 0 : index
    %21 = vector.load %arg8[%c0_14, %c0_15] : memref<128x256xf32, #tpu.memory_space<vmem>>, vector<128x256xf32>
    tpu.vector_store %arg8[%c0_14, %c0_15], %20 {strides = array<i32>} : memref<128x256xf32, #tpu.memory_space<vmem>>, vector<128x256xf32>,
    %c0_i32 = arith.constant 0 : i32
    %22 = arith.cmpi eq, %arg0, %c0_i32 : i32
    %23 = arith.extui %22 : i1 to i32
    %c0_i32_16 = arith.constant 0 : i32
    %24 = arith.cmpi ne, %23, %c0_i32_16 : i32
    scf.if %24 {
      %cst_28 = arith.constant 0.000000e+00 : f32
      %39 = vector.broadcast %cst_28 : f32 to vector<1x256xf32>
      %c0_29 = arith.constant 0 : index
      %c0_30 = arith.constant 0 : index
      %40 = vector.load %arg11[%c0_29, %c0_30] : memref<1x256xf32, #tpu.memory_space<vmem>>, vector<1x256xf32>
      tpu.vector_store %arg11[%c0_29, %c0_30], %39 {strides = array<i32>} : memref<1x256xf32, #tpu.memory_space<vmem>>, vector<1x256xf32>,
      %cst_31 = arith.constant 0.000000e+00 : f32
      %41 = vector.broadcast %cst_31 : f32 to vector<1x256xf32>
      %c0_32 = arith.constant 0 : index
      %c0_33 = arith.constant 0 : index
      %42 = vector.load %arg12[%c0_32, %c0_33] : memref<1x256xf32, #tpu.memory_space<vmem>>, vector<1x256xf32>
      tpu.vector_store %arg12[%c0_32, %c0_33], %41 {strides = array<i32>} : memref<1x256xf32, #tpu.memory_space<vmem>>, vector<1x256xf32>,
    } else {
    }
    %c0_17 = arith.constant 0 : index
    %c0_18 = arith.constant 0 : index
    %25 = vector.load %arg11[%c0_17, %c0_18] : memref<1x256xf32, #tpu.memory_space<vmem>>, vector<1x256xf32>
    %cst_19 = arith.constant dense<0.000000e+00> : vector<256xf32>
    %26 = vector.multi_reduction <add>, %20, %cst_19 [0] : vector<128x256xf32> to vector<256xf32>
    %27 = vector.shape_cast %26 : vector<256xf32> to vector<1x256xf32>
    %28 = arith.addf %25, %27 : vector<1x256xf32>
    %c0_20 = arith.constant 0 : index
    %c0_21 = arith.constant 0 : index
    %29 = vector.load %arg11[%c0_20, %c0_21] : memref<1x256xf32, #tpu.memory_space<vmem>>, vector<1x256xf32>
    tpu.vector_store %arg11[%c0_20, %c0_21], %28 {strides = array<i32>} : memref<1x256xf32, #tpu.memory_space<vmem>>, vector<1x256xf32>,
    %c0_22 = arith.constant 0 : index
    %c0_23 = arith.constant 0 : index
    %30 = vector.load %arg12[%c0_22, %c0_23] : memref<1x256xf32, #tpu.memory_space<vmem>>, vector<1x256xf32>
    %31 = arith.mulf %20, %20 : vector<128x256xf32>
    %cst_24 = arith.constant dense<0.000000e+00> : vector<256xf32>
    %32 = vector.multi_reduction <add>, %31, %cst_24 [0] : vector<128x256xf32> to vector<256xf32>
    %33 = vector.shape_cast %32 : vector<256xf32> to vector<1x256xf32>
    %34 = arith.addf %30, %33 : vector<1x256xf32>
    %c0_25 = arith.constant 0 : index
    %c0_26 = arith.constant 0 : index
    %35 = vector.load %arg12[%c0_25, %c0_26] : memref<1x256xf32, #tpu.memory_space<vmem>>, vector<1x256xf32>
    tpu.vector_store %arg12[%c0_25, %c0_26], %34 {strides = array<i32>} : memref<1x256xf32, #tpu.memory_space<vmem>>, vector<1x256xf32>,
    %c3_i32 = arith.constant 3 : i32
    %36 = arith.cmpi eq, %arg0, %c3_i32 : i32
    %37 = arith.extui %36 : i1 to i32
    %c0_i32_27 = arith.constant 0 : i32
    %38 = arith.cmpi ne, %37, %c0_i32_27 : i32
    scf.if %38 {
      %c0_28 = arith.constant 0 : index
      %c0_29 = arith.constant 0 : index
      %39 = vector.load %arg11[%c0_28, %c0_29] : memref<1x256xf32, #tpu.memory_space<vmem>>, vector<1x256xf32>
      %cst_30 = arith.constant 0.001953125 : f32
      %40 = vector.broadcast %cst_30 : f32 to vector<1x256xf32>
      %41 = arith.mulf %39, %40 : vector<1x256xf32>
      %c0_31 = arith.constant 0 : index
      %c0_32 = arith.constant 0 : index
      %42 = vector.load %arg12[%c0_31, %c0_32] : memref<1x256xf32, #tpu.memory_space<vmem>>, vector<1x256xf32>
      %cst_33 = arith.constant 0.001953125 : f32
      %43 = vector.broadcast %cst_33 : f32 to vector<1x256xf32>
      %44 = arith.mulf %42, %43 : vector<1x256xf32>
      %45 = arith.mulf %41, %41 : vector<1x256xf32>
      %46 = arith.subf %44, %45 : vector<1x256xf32>
      %c0_34 = arith.constant 0 : index
      %c0_35 = arith.constant 0 : index
      %47 = vector.load %arg9[%c0_34, %c0_35] : memref<1x256xf32, #tpu.memory_space<vmem>>, vector<1x256xf32>
      tpu.vector_store %arg9[%c0_34, %c0_35], %41 {strides = array<i32>} : memref<1x256xf32, #tpu.memory_space<vmem>>, vector<1x256xf32>,
      %cst_36 = arith.constant 9.99999974E-6 : f32
      %48 = vector.broadcast %cst_36 : f32 to vector<1x256xf32>
      %49 = arith.addf %46, %48 : vector<1x256xf32>
      %50 = math.rsqrt %49 : vector<1x256xf32>
      %c0_37 = arith.constant 0 : index
      %c0_38 = arith.constant 0 : index
      %51 = vector.load %arg10[%c0_37, %c0_38] : memref<1x256xf32, #tpu.memory_space<vmem>>, vector<1x256xf32>
      tpu.vector_store %arg10[%c0_37, %c0_38], %50 {strides = array<i32>} : memref<1x256xf32, #tpu.memory_space<vmem>>, vector<1x256xf32>,
    } else {
    }
    return
  }
  func.func @transform_0(%arg0: i32) -> (i32, i32) {
    %c0_i32 = arith.constant 0 : i32
    %c0_i32_0 = arith.constant 0 : i32
    return %arg0, %c0_i32 : i32, i32
  }
  func.func @transform_1(%arg0: i32) -> (i32, i32) {
    %c0_i32 = arith.constant 0 : i32
    %c0_i32_0 = arith.constant 0 : i32
    %c0_i32_1 = arith.constant 0 : i32
    return %c0_i32, %c0_i32_0 : i32, i32
  }
  func.func @transform_2(%arg0: i32) -> (i32, i32) {
    %c0_i32 = arith.constant 0 : i32
    %c0_i32_0 = arith.constant 0 : i32
    %c0_i32_1 = arith.constant 0 : i32
    return %c0_i32, %c0_i32_0 : i32, i32
  }
  func.func @transform_3(%arg0: i32) -> (i32, i32) {
    %c0_i32 = arith.constant 0 : i32
    %c0_i32_0 = arith.constant 0 : i32
    %c0_i32_1 = arith.constant 0 : i32
    return %c0_i32, %c0_i32_0 : i32, i32
  }
  func.func @transform_4(%arg0: i32) -> (i32, i32) {
    %c0_i32 = arith.constant 0 : i32
    %c0_i32_0 = arith.constant 0 : i32
    %c0_i32_1 = arith.constant 0 : i32
    return %c0_i32, %c0_i32_0 : i32, i32
  }
  func.func @transform_5(%arg0: i32) -> (i32, i32) {
    %c0_i32 = arith.constant 0 : i32
    %c0_i32_0 = arith.constant 0 : i32
    %c0_i32_1 = arith.constant 0 : i32
    return %c0_i32, %c0_i32_0 : i32, i32
  }
  func.func @transform_6(%arg0: i32) -> (i32, i32) {
    %c0_i32 = arith.constant 0 : i32
    %c0_i32_0 = arith.constant 0 : i32
    %c0_i32_1 = arith.constant 0 : i32
    return %c0_i32, %c0_i32_0 : i32, i32
  }
  func.func @transform_7(%arg0: i32) -> (i32, i32) {
    %c0_i32 = arith.constant 0 : i32
    %c0_i32_0 = arith.constant 0 : i32
    return %arg0, %c0_i32 : i32, i32
  }
  func.func @transform_8(%arg0: i32) -> (i32, i32) {
    %c0_i32 = arith.constant 0 : i32
    %c0_i32_0 = arith.constant 0 : i32
    %c0_i32_1 = arith.constant 0 : i32
    return %c0_i32, %c0_i32_0 : i32, i32
  }
  func.func @transform_9(%arg0: i32) -> (i32, i32) {
    %c0_i32 = arith.constant 0 : i32
    %c0_i32_0 = arith.constant 0 : i32
    %c0_i32_1 = arith.constant 0 : i32
    return %c0_i32, %c0_i32_0 : i32, i32
  }
}

</mosaic_0001>

<llo_original>
// kernel: mlp_forward.5
$region0: #{mlp_forward.5}
  #allocation0 [shape = 'u32[]', space=smem, size = 0x4, offset = 0x4, fixed_abs, tag = 'smem constant byte address 0x4 - core index']
  #allocation1 [shape = 'u32[72,128]{1,0:T(1,128)}', space=vmem, size = 0x9000, scoped, tag = 'internal scratch']
  %s0 = inlined_call_operand.vmem [shape: f32[512,256], index: 0, kind: input, shape index: {}]
  %s1 = inlined_call_operand.vmem [shape: f32[1,256], index: 1, kind: input, shape index: {}]
  %s2 = inlined_call_operand.vmem [shape: f32[1,256], index: 2, kind: input, shape index: {}]
  %s3 = inlined_call_operand.vmem [shape: f32[1,256], index: 3, kind: input, shape index: {}]
  %s4 = inlined_call_operand.vmem [shape: f32[1,256], index: 4, kind: input, shape index: {}]
  %s5 = inlined_call_operand.hbm [shape: bf16[256,128], index: 5, kind: input, shape index: {}]
  %s6 = inlined_call_operand.vmem [shape: f32[1,128], index: 6, kind: input, shape index: {}]
  %s7 = inlined_call_operand.hbm [shape: f32[512,128], index: 7, kind: output, shape index: {}]
  %s8 = sld [smem:[#allocation0]]
  $region65: #{mlp_forward.5} parent=0
    _
  %s10 = ssub.s32 1, %s8
  %s11 = scalar_select 0, %s10, %s8
  $region1: #{mlp_forward.5} parent=0
    #allocation2 [shape = 'u8[65536]{0}', space=vmem, size = 0x10000, scoped, tag = 'input window, operand 5, single buffered']
    #allocation3 [shape = 's32[2]{0}', space=sflag, size = 0x8, scoped, tag = 'scoped memory for mlp_forward.5']
    #allocation4 [shape = 's32[2]{0}', space=sflag, size = 0x8, scoped, tag = 'scoped memory for mlp_forward.5']
    #allocation5 [shape = 'u8[131072]{0}', space=vmem, size = 0x20000, scoped, tag = 'output window, operand 0']
    %12 = vsyncpa [#allocation3], 0
    %13 = vsyncpa [#allocation4], 0
    %s14 = scalar_lea.sflag [#allocation4], 1
    %15 = vsyncpa %s14, 0
    loop: start=0, step=1, limit=6
    $region2: #{mlp_forward.5} parent=1 // loop_pre_header
      _
    $region3: #{mlp_forward.5} parent=1 // loop_header
      %s17 = sphi 0, %s21
      %p18 = scmp.ge.s32.totalorder %s17, 6
      %s27 = sphi 0, %s29
      %s30 = sphi 0, %s27
      %s31 = sphi 0, %s30
      %s47 = sphi 0, %s31
      %s51 = sphi 0, %s51
      %s53 = sphi 0, %s51
      %s54 = sphi 0, %s53
      %s68 = sphi 0, %s54
      %s72 = sphi 0, %s72
      %s74 = sphi 0, %s72
      %s75 = sphi 0, %s74
      %s89 = sphi 0, %s75
      %s93 = sphi 0, %s93
      %s95 = sphi 0, %s93
      %s96 = sphi 0, %s95
      %s110 = sphi 0, %s96
      %s114 = sphi 0, %s114
      %s116 = sphi 0, %s114
      %s117 = sphi 0, %s116
      %s131 = sphi 0, %s117
      %s135 = sphi 0, %s135
      %s137 = sphi 0, %s135
      %s138 = sphi 0, %s137
      %s152 = sphi 0, %s138
      %s156 = sphi 0, %s156
      %s158 = sphi 0, %s156
      %s159 = sphi 0, %s158
      %s173 = sphi 0, %s159
      %s179 = sphi 0, %s181
      %s182 = sphi 0, %s179
      %s183 = sphi 0, %s182
      %s199 = sphi 0, %s183
    $region4: #{mlp_forward.5} parent=1 // loop_header_branch
      %20 = sbr.rel (%p18) target = $region8
    $region5: #{mlp_forward.5} parent=1 // loop_body
      %s22 = ssub.s32 %s17, 1
      %s23 = ssub.s32 %s17, 2
      %s24 = sadd.s32 %s17, 1
      %s25 = ssub.s32 %s17, %s24
      %p26 = scmp.eq.s32.totalorder %s25, 0
      %s28 = sadd.s32 %s27, 1
      %s29 = scalar_select %p26, %s27, %s28
      %p32 = pneg %p26
      %p33 = scmp.eq.s32.totalorder %s17, 3
      %p34 = por %p32, %p33
      %p35 = scmp.ne.s32.totalorder %s27, %s30
      %p36 = scmp.eq.s32.totalorder %s17, 0
      %p37 = por %p35, %p36
      %p38 = scmp.ne.s32.totalorder %s27, %s30
      %p39 = scmp.eq.s32.totalorder %s22, 3
      %p40 = por %p38, %p39
      %p41 = scmp.ne.s32.totalorder %s30, %s31
      %p42 = scmp.eq.s32.totalorder %s22, 0
      %p43 = por %p41, %p42
      %p44 = scmp.ne.s32.totalorder %s30, %s31
      %p45 = scmp.eq.s32.totalorder %s23, 3
      %p46 = por %p44, %p45
      %p48 = scmp.ne.s32.totalorder %s31, %s47
      %p49 = scmp.eq.s32.totalorder %s23, 0
      %p50 = por %p48, %p49
      %s52 = sadd.s32 %s51, 1
      %p55 = scmp.eq.s32.totalorder %s17, 3
      %p56 = scmp.ne.s32.totalorder %s51, %s53
      %p57 = scmp.eq.s32.totalorder %s17, 0
      %p58 = por %p56, %p57
      %p59 = scmp.ne.s32.totalorder %s51, %s53
      %p60 = scmp.eq.s32.totalorder %s22, 3
      %p61 = por %p59, %p60
      %p62 = scmp.ne.s32.totalorder %s53, %s54
      %p63 = scmp.eq.s32.totalorder %s22, 0
      %p64 = por %p62, %p63
      %p65 = scmp.ne.s32.totalorder %s53, %s54
      %p66 = scmp.eq.s32.totalorder %s23, 3
      %p67 = por %p65, %p66
      %p69 = scmp.ne.s32.totalorder %s54, %s68
      %p70 = scmp.eq.s32.totalorder %s23, 0
      %p71 = por %p69, %p70
      %s73 = sadd.s32 %s72, 1
      %p76 = scmp.eq.s32.totalorder %s17, 3
      %p77 = scmp.ne.s32.totalorder %s72, %s74
      %p78 = scmp.eq.s32.totalorder %s17, 0
      %p79 = por %p77, %p78
      %p80 = scmp.ne.s32.totalorder %s72, %s74
      %p81 = scmp.eq.s32.totalorder %s22, 3
      %p82 = por %p80, %p81
      %p83 = scmp.ne.s32.totalorder %s74, %s75
      %p84 = scmp.eq.s32.totalorder %s22, 0
      %p85 = por %p83, %p84
      %p86 = scmp.ne.s32.totalorder %s74, %s75
      %p87 = scmp.eq.s32.totalorder %s23, 3
      %p88 = por %p86, %p87
      %p90 = scmp.ne.s32.totalorder %s75, %s89
      %p91 = scmp.eq.s32.totalorder %s23, 0
      %p92 = por %p90, %p91
      %s94 = sadd.s32 %s93, 1
      %p97 = scmp.eq.s32.totalorder %s17, 3
      %p98 = scmp.ne.s32.totalorder %s93, %s95
      %p99 = scmp.eq.s32.totalorder %s17, 0
      %p100 = por %p98, %p99
      %p101 = scmp.ne.s32.totalorder %s93, %s95
      %p102 = scmp.eq.s32.totalorder %s22, 3
      %p103 = por %p101, %p102
      %p104 = scmp.ne.s32.totalorder %s95, %s96
      %p105 = scmp.eq.s32.totalorder %s22, 0
      %p106 = por %p104, %p105
      %p107 = scmp.ne.s32.totalorder %s95, %s96
      %p108 = scmp.eq.s32.totalorder %s23, 3
      %p109 = por %p107, %p108
      %p111 = scmp.ne.s32.totalorder %s96, %s110
      %p112 = scmp.eq.s32.totalorder %s23, 0
      %p113 = por %p111, %p112
      %s115 = sadd.s32 %s114, 1
      %p118 = scmp.eq.s32.totalorder %s17, 3
      %p119 = scmp.ne.s32.totalorder %s114, %s116
      %p120 = scmp.eq.s32.totalorder %s17, 0
      %p121 = por %p119, %p120
      %p122 = scmp.ne.s32.totalorder %s114, %s116
      %p123 = scmp.eq.s32.totalorder %s22, 3
      %p124 = por %p122, %p123
      %p125 = scmp.ne.s32.totalorder %s116, %s117
      %p126 = scmp.eq.s32.totalorder %s22, 0
      %p127 = por %p125, %p126
      %p128 = scmp.ne.s32.totalorder %s116, %s117
      %p129 = scmp.eq.s32.totalorder %s23, 3
      %p130 = por %p128, %p129
      %p132 = scmp.ne.s32.totalorder %s117, %s131
      %p133 = scmp.eq.s32.totalorder %s23, 0
      %p134 = por %p132, %p133
      %s136 = sadd.s32 %s135, 1
      %p139 = scmp.eq.s32.totalorder %s17, 3
      %p140 = scmp.ne.s32.totalorder %s135, %s137
      %p141 = scmp.eq.s32.totalorder %s17, 0
      %p142 = por %p140, %p141
      %p143 = scmp.ne.s32.totalorder %s135, %s137
      %p144 = scmp.eq.s32.totalorder %s22, 3
      %p145 = por %p143, %p144
      %p146 = scmp.ne.s32.totalorder %s137, %s138
      %p147 = scmp.eq.s32.totalorder %s22, 0
      %p148 = por %p146, %p147
      %p149 = scmp.ne.s32.totalorder %s137, %s138
      %p150 = scmp.eq.s32.totalorder %s23, 3
      %p151 = por %p149, %p150
      %p153 = scmp.ne.s32.totalorder %s138, %s152
      %p154 = scmp.eq.s32.totalorder %s23, 0
      %p155 = por %p153, %p154
      %s157 = sadd.s32 %s156, 1
      %p160 = scmp.eq.s32.totalorder %s17, 3
      %p161 = scmp.ne.s32.totalorder %s156, %s158
      %p162 = scmp.eq.s32.totalorder %s17, 0
      %p163 = por %p161, %p162
      %p164 = scmp.ne.s32.totalorder %s156, %s158
      %p165 = scmp.eq.s32.totalorder %s22, 3
      %p166 = por %p164, %p165
      %p167 = scmp.ne.s32.totalorder %s158, %s159
      %p168 = scmp.eq.s32.totalorder %s22, 0
      %p169 = por %p167, %p168
      %p170 = scmp.ne.s32.totalorder %s158, %s159
      %p171 = scmp.eq.s32.totalorder %s23, 3
      %p172 = por %p170, %p171
      %p174 = scmp.ne.s32.totalorder %s159, %s173
      %p175 = scmp.eq.s32.totalorder %s23, 0
      %p176 = por %p174, %p175
      %s177 = ssub.s32 %s17, %s24
      %p178 = scmp.eq.s32.totalorder %s177, 0
      %s180 = sadd.s32 %s179, 1
      %s181 = scalar_select %p178, %s179, %s180
      %p184 = pneg %p178
      %p185 = scmp.eq.s32.totalorder %s17, 3
      %p186 = por %p184, %p185
      %p187 = scmp.ne.s32.totalorder %s179, %s182
      %p188 = scmp.eq.s32.totalorder %s17, 0
      %p189 = por %p187, %p188
      %p190 = scmp.ne.s32.totalorder %s179, %s182
      %p191 = scmp.eq.s32.totalorder %s22, 3
      %p192 = por %p190, %p191
      %p193 = scmp.ne.s32.totalorder %s182, %s183
      %p194 = scmp.eq.s32.totalorder %s22, 0
      %p195 = por %p193, %p194
      %p196 = scmp.ne.s32.totalorder %s182, %s183
      %p197 = scmp.eq.s32.totalorder %s23, 3
      %p198 = por %p196, %p197
      %p200 = scmp.ne.s32.totalorder %s183, %s199
      %p201 = scmp.eq.s32.totalorder %s23, 0
      %p202 = por %p200, %p201
      %p203 = scmp.le.s32.totalorder 1, %s17
      %p204 = scmp.lt.s32.totalorder %s17, 5
      %p205 = pnand %p203, %p204
      %p206 = pneg %p205
      // Predicated region
      $region9: #{mlp_forward.5} parent=5 // pred_check
        _
      $region10: #{mlp_forward.5} parent=5 // pred_check_branch
        %208 = sbr.rel (%p205) target = $region12
      $region11: #{mlp_forward.5} parent=5 // pred_region
        %s209 = ssub.s32 %s17, 1
        // Predicated region
        $region13: #{mlp_forward.5} parent=11 // pred_check
          %p210 = pneg %p64
        $region14: #{mlp_forward.5} parent=11 // pred_check_branch
          %212 = sbr.rel (%p210) target = $region16
        $region15: #{mlp_forward.5} parent=11 // pred_region
          _
        $region16: #{mlp_forward.5} parent=11 // pred_fallthru
          _
        // Predicated region
        $region17: #{mlp_forward.5} parent=11 // pred_check
          %p213 = pneg %p85
        $region18: #{mlp_forward.5} parent=11 // pred_check_branch
          %215 = sbr.rel (%p213) target = $region20
        $region19: #{mlp_forward.5} parent=11 // pred_region
          _
        $region20: #{mlp_forward.5} parent=11 // pred_fallthru
          _
        // Predicated region
        $region21: #{mlp_forward.5} parent=11 // pred_check
          %p216 = pneg %p106
        $region22: #{mlp_forward.5} parent=11 // pred_check_branch
          %218 = sbr.rel (%p216) target = $region24
        $region23: #{mlp_forward.5} parent=11 // pred_region
          _
        $region24: #{mlp_forward.5} parent=11 // pred_fallthru
          _
        // Predicated region
        $region25: #{mlp_forward.5} parent=11 // pred_check
          %p219 = pneg %p127
        $region26: #{mlp_forward.5} parent=11 // pred_check_branch
          %221 = sbr.rel (%p219) target = $region28
        $region27: #{mlp_forward.5} parent=11 // pred_region
          _
        $region28: #{mlp_forward.5} parent=11 // pred_fallthru
          _
        // Predicated region
        $region29: #{mlp_forward.5} parent=11 // pred_check
          %p222 = pneg %p148
        $region30: #{mlp_forward.5} parent=11 // pred_check_branch
          %224 = sbr.rel (%p222) target = $region32
        $region31: #{mlp_forward.5} parent=11 // pred_region
          %226 = vsyncadd [#allocation3], 0
          %s227 = sshll.u32 %s5, 4
          %s228 = int_to_ptr.hbm [resolvable:$true] %s227
          %s229 = sshll.u32 [#allocation2], 4
          %s230 = int_to_ptr.vmem [resolvable:$true] %s229
          %235 = dma.hbm_to_vmem [thread:$0]  %s228, 2048, %s230, [#allocation3], 64, 64, 4
        $region32: #{mlp_forward.5} parent=11 // pred_fallthru
          _
        // Predicated region
        $region33: #{mlp_forward.5} parent=11 // pred_check
          %p236 = pneg %p169
        $region34: #{mlp_forward.5} parent=11 // pred_check_branch
          %238 = sbr.rel (%p236) target = $region36
        $region35: #{mlp_forward.5} parent=11 // pred_region
          _
        $region36: #{mlp_forward.5} parent=11 // pred_fallthru
          _
      $region12: #{mlp_forward.5} parent=5 // pred_fallthru
        _
      %p239 = scmp.lt.s32.totalorder %s17, 4
      // Predicated region
      $region37: #{mlp_forward.5} parent=5 // pred_check
        %p240 = pneg %p239
      $region38: #{mlp_forward.5} parent=5 // pred_check_branch
        %242 = sbr.rel (%p240) target = $region40
      $region39: #{mlp_forward.5} parent=5 // pred_region
        // Predicated region
        $region41: #{mlp_forward.5} parent=39 // pred_check
          %p243 = pneg %p37
        $region42: #{mlp_forward.5} parent=39 // pred_check_branch
          %245 = sbr.rel (%p243) target = $region44
        $region43: #{mlp_forward.5} parent=39 // pred_region
          %s246 = smul.u32 16, %s17
          %p247 = scmp.lt.s32.totalorder %s246, 63
          %s248 = scalar_select %p247, %s246, 63
          %s249 = smul.addr %s248, 2
          %s250 = smul.addr %s249, 8
          %s251 = scalar_lea.vmem %s0, %s250
          %s252 = smul.u32 16, %s17
        $region44: #{mlp_forward.5} parent=39 // pred_fallthru
          _
      $region40: #{mlp_forward.5} parent=5 // pred_fallthru
        _
      %p253 = scmp.le.s32.totalorder 1, %s17
      %p254 = scmp.lt.s32.totalorder %s17, 5
      %p255 = pnand %p253, %p254
      %p256 = pneg %p255
      // Predicated region
      $region45: #{mlp_forward.5} parent=5 // pred_check
        _
      $region46: #{mlp_forward.5} parent=5 // pred_check_branch
        %258 = sbr.rel (%p255) target = $region48
      $region47: #{mlp_forward.5} parent=5 // pred_region
        %s259 = ssub.s32 %s17, 1
        // Predicated region
        $region49: #{mlp_forward.5} parent=47 // pred_check
          %p260 = pneg %p148
        $region50: #{mlp_forward.5} parent=47 // pred_check_branch
          %262 = sbr.rel (%p260) target = $region52
        $region51: #{mlp_forward.5} parent=47 // pred_region
          %264 = dma.done [#allocation3], 2048
        $region52: #{mlp_forward.5} parent=47 // pred_fallthru
          _
        %s265 = smul.u32 16, %s22
        %p266 = scmp.lt.s32.totalorder %s265, 63
        %s267 = scalar_select %p266, %s265, 63
        %s268 = smul.addr %s267, 2
        %s269 = smul.addr %s268, 8
        %s270 = scalar_lea.vmem %s0, %s269
        %p271 = pneg %p43
        %p272 = pneg %p40
        %p273 = pneg %p64
        %p274 = pneg %p61
        %p275 = pneg %p85
        %p276 = pneg %p82
        %p277 = pneg %p106
        %p278 = pneg %p103
        %p279 = pneg %p127
        %p280 = pneg %p124
        %p281 = pneg %p148
        %p282 = pneg %p145
        %p283 = pneg %p169
        %p284 = pneg %p166
        %p285 = pneg %p195
        %p286 = pneg %p192
        %s287 = sand.u32 %s182, 1
        %s288 = scalar_lea.sflag [#allocation4], %s287
        %s289 = sand.u32 %s182, 1
        %s290 = smul.addr %s289, 128
        %s291 = scalar_lea.vmem [#allocation5], %s290
        %s292 = smul.u32 16, %s22
        %p293 = scmp.lt.s32.totalorder %s292, 63
        %s294 = scalar_select %p293, %s292, 63
        %s295 = smul.addr %s294, 2
        %s296 = smul.addr %s295, 8
        %s297 = scalar_lea.vmem %s0, %s296
        %s298 = smul.u32 16, %s22
        %s299 = smul.u32 16, %s22
        %v300 = vld [vmem:[%s297] sm:$0xff]
        %v301 = vld [vmem:[%s297 + $0x8] sm:$0xff]
        %v302 = vld [vmem:[%s297 + $0x10] sm:$0xff]
        %v303 = vld [vmem:[%s297 + $0x18] sm:$0xff]
        %v304 = vld [vmem:[%s297 + $0x20] sm:$0xff]
        %v305 = vld [vmem:[%s297 + $0x28] sm:$0xff]
        %v306 = vld [vmem:[%s297 + $0x30] sm:$0xff]
        %v307 = vld [vmem:[%s297 + $0x38] sm:$0xff]
        %v308 = vld [vmem:[%s297 + $0x40] sm:$0xff]
        %v309 = vld [vmem:[%s297 + $0x48] sm:$0xff]
        %v310 = vld [vmem:[%s297 + $0x50] sm:$0xff]
        %v311 = vld [vmem:[%s297 + $0x58] sm:$0xff]
        %v312 = vld [vmem:[%s297 + $0x60] sm:$0xff]
        %v313 = vld [vmem:[%s297 + $0x68] sm:$0xff]
        %v314 = vld [vmem:[%s297 + $0x70] sm:$0xff]
        %v315 = vld [vmem:[%s297 + $0x78] sm:$0xff]
        %v316 = vld [vmem:[%s297 + $0x80] sm:$0xff]
        %v317 = vld [vmem:[%s297 + $0x88] sm:$0xff]
        %v318 = vld [vmem:[%s297 + $0x90] sm:$0xff]
        %v319 = vld [vmem:[%s297 + $0x98] sm:$0xff]
        %v320 = vld [vmem:[%s297 + $0xa0] sm:$0xff]
        %v321 = vld [vmem:[%s297 + $0xa8] sm:$0xff]
        %v322 = vld [vmem:[%s297 + $0xb0] sm:$0xff]
        %v323 = vld [vmem:[%s297 + $0xb8] sm:$0xff]
        %v324 = vld [vmem:[%s297 + $0xc0] sm:$0xff]
        %v325 = vld [vmem:[%s297 + $0xc8] sm:$0xff]
        %v326 = vld [vmem:[%s297 + $0xd0] sm:$0xff]
        %v327 = vld [vmem:[%s297 + $0xd8] sm:$0xff]
        %v328 = vld [vmem:[%s297 + $0xe0] sm:$0xff]
        %v329 = vld [vmem:[%s297 + $0xe8] sm:$0xff]
        %v330 = vld [vmem:[%s297 + $0xf0] sm:$0xff]
        %v331 = vld [vmem:[%s297 + $0xf8] sm:$0xff]
        %v332 = vld [vmem:[%s1] sm:$0x3]
        %v334 = vperm.slane %v332, 0
        %v335 = vperm.slane %v332, 1
        %v338 = vsub.f32 %v300, %v334
        %v339 = vsub.f32 %v301, %v335
        %v340 = vsub.f32 %v302, %v334
        %v341 = vsub.f32 %v303, %v335
        %v342 = vsub.f32 %v304, %v334
        %v343 = vsub.f32 %v305, %v335
        %v344 = vsub.f32 %v306, %v334
        %v345 = vsub.f32 %v307, %v335
        %v346 = vsub.f32 %v308, %v334
        %v347 = vsub.f32 %v309, %v335
        %v348 = vsub.f32 %v310, %v334
        %v349 = vsub.f32 %v311, %v335
        %v350 = vsub.f32 %v312, %v334
        %v351 = vsub.f32 %v313, %v335
        %v352 = vsub.f32 %v314, %v334
        %v353 = vsub.f32 %v315, %v335
        %v354 = vsub.f32 %v316, %v334
        %v355 = vsub.f32 %v317, %v335
        %v356 = vsub.f32 %v318, %v334
        %v357 = vsub.f32 %v319, %v335
        %v358 = vsub.f32 %v320, %v334
        %v359 = vsub.f32 %v321, %v335
        %v360 = vsub.f32 %v322, %v334
        %v361 = vsub.f32 %v323, %v335
        %v362 = vsub.f32 %v324, %v334
        %v363 = vsub.f32 %v325, %v335
        %v364 = vsub.f32 %v326, %v334
        %v365 = vsub.f32 %v327, %v335
        %v366 = vsub.f32 %v328, %v334
        %v367 = vsub.f32 %v329, %v335
        %v368 = vsub.f32 %v330, %v334
        %v369 = vsub.f32 %v331, %v335
        %v370 = vld [vmem:[%s2] sm:$0x3]
        %v372 = vperm.slane %v370, 0
        %v373 = vperm.slane %v370, 1
        %v376 = vmul.f32 %v338, %v372
        %v377 = vmul.f32 %v339, %v373
        %v378 = vmul.f32 %v340, %v372
        %v379 = vmul.f32 %v341, %v373
        %v380 = vmul.f32 %v342, %v372
        %v381 = vmul.f32 %v343, %v373
        %v382 = vmul.f32 %v344, %v372
        %v383 = vmul.f32 %v345, %v373
        %v384 = vmul.f32 %v346, %v372
        %v385 = vmul.f32 %v347, %v373
        %v386 = vmul.f32 %v348, %v372
        %v387 = vmul.f32 %v349, %v373
        %v388 = vmul.f32 %v350, %v372
        %v389 = vmul.f32 %v351, %v373
        %v390 = vmul.f32 %v352, %v372
        %v391 = vmul.f32 %v353, %v373
        %v392 = vmul.f32 %v354, %v372
        %v393 = vmul.f32 %v355, %v373
        %v394 = vmul.f32 %v356, %v372
        %v395 = vmul.f32 %v357, %v373
        %v396 = vmul.f32 %v358, %v372
        %v397 = vmul.f32 %v359, %v373
        %v398 = vmul.f32 %v360, %v372
        %v399 = vmul.f32 %v361, %v373
        %v400 = vmul.f32 %v362, %v372
        %v401 = vmul.f32 %v363, %v373
        %v402 = vmul.f32 %v364, %v372
        %v403 = vmul.f32 %v365, %v373
        %v404 = vmul.f32 %v366, %v372
        %v405 = vmul.f32 %v367, %v373
        %v406 = vmul.f32 %v368, %v372
        %v407 = vmul.f32 %v369, %v373
        %v408 = vld [vmem:[%s3] sm:$0x3]
        %v410 = vperm.slane %v408, 0
        %v411 = vperm.slane %v408, 1
        %v414 = vmul.f32 %v376, %v410
        %v415 = vmul.f32 %v377, %v411
        %v416 = vmul.f32 %v378, %v410
        %v417 = vmul.f32 %v379, %v411
        %v418 = vmul.f32 %v380, %v410
        %v419 = vmul.f32 %v381, %v411
        %v420 = vmul.f32 %v382, %v410
        %v421 = vmul.f32 %v383, %v411
        %v422 = vmul.f32 %v384, %v410
        %v423 = vmul.f32 %v385, %v411
        %v424 = vmul.f32 %v386, %v410
        %v425 = vmul.f32 %v387, %v411
        %v426 = vmul.f32 %v388, %v410
        %v427 = vmul.f32 %v389, %v411
        %v428 = vmul.f32 %v390, %v410
        %v429 = vmul.f32 %v391, %v411
        %v430 = vmul.f32 %v392, %v410
        %v431 = vmul.f32 %v393, %v411
        %v432 = vmul.f32 %v394, %v410
        %v433 = vmul.f32 %v395, %v411
        %v434 = vmul.f32 %v396, %v410
        %v435 = vmul.f32 %v397, %v411
        %v436 = vmul.f32 %v398, %v410
        %v437 = vmul.f32 %v399, %v411
        %v438 = vmul.f32 %v400, %v410
        %v439 = vmul.f32 %v401, %v411
        %v440 = vmul.f32 %v402, %v410
        %v441 = vmul.f32 %v403, %v411
        %v442 = vmul.f32 %v404, %v410
        %v443 = vmul.f32 %v405, %v411
        %v444 = vmul.f32 %v406, %v410
        %v445 = vmul.f32 %v407, %v411
        %v446 = vld [vmem:[%s4] sm:$0x3]
        %v448 = vperm.slane %v446, 0
        %v449 = vperm.slane %v446, 1
        %v452 = vadd.f32 %v414, %v448
        %v453 = vadd.f32 %v415, %v449
        %v454 = vadd.f32 %v416, %v448
        %v455 = vadd.f32 %v417, %v449
        %v456 = vadd.f32 %v418, %v448
        %v457 = vadd.f32 %v419, %v449
        %v458 = vadd.f32 %v420, %v448
        %v459 = vadd.f32 %v421, %v449
        %v460 = vadd.f32 %v422, %v448
        %v461 = vadd.f32 %v423, %v449
        %v462 = vadd.f32 %v424, %v448
        %v463 = vadd.f32 %v425, %v449
        %v464 = vadd.f32 %v426, %v448
        %v465 = vadd.f32 %v427, %v449
        %v466 = vadd.f32 %v428, %v448
        %v467 = vadd.f32 %v429, %v449
        %v468 = vadd.f32 %v430, %v448
        %v469 = vadd.f32 %v431, %v449
        %v470 = vadd.f32 %v432, %v448
        %v471 = vadd.f32 %v433, %v449
        %v472 = vadd.f32 %v434, %v448
        %v473 = vadd.f32 %v435, %v449
        %v474 = vadd.f32 %v436, %v448
        %v475 = vadd.f32 %v437, %v449
        %v476 = vadd.f32 %v438, %v448
        %v477 = vadd.f32 %v439, %v449
        %v478 = vadd.f32 %v440, %v448
        %v479 = vadd.f32 %v441, %v449
        %v480 = vadd.f32 %v442, %v448
        %v481 = vadd.f32 %v443, %v449
        %v482 = vadd.f32 %v444, %v448
        %v483 = vadd.f32 %v445, %v449
        %v484 = vmax.f32 %v452, 0.0
        %v485 = vmax.f32 %v453, 0.0
        %v486 = vmax.f32 %v454, 0.0
        %v487 = vmax.f32 %v455, 0.0
        %v488 = vmax.f32 %v456, 0.0
        %v489 = vmax.f32 %v457, 0.0
        %v490 = vmax.f32 %v458, 0.0
        %v491 = vmax.f32 %v459, 0.0
        %v492 = vmax.f32 %v460, 0.0
        %v493 = vmax.f32 %v461, 0.0
        %v494 = vmax.f32 %v462, 0.0
        %v495 = vmax.f32 %v463, 0.0
        %v496 = vmax.f32 %v464, 0.0
        %v497 = vmax.f32 %v465, 0.0
        %v498 = vmax.f32 %v466, 0.0
        %v499 = vmax.f32 %v467, 0.0
        %v500 = vmax.f32 %v468, 0.0
        %v501 = vmax.f32 %v469, 0.0
        %v502 = vmax.f32 %v470, 0.0
        %v503 = vmax.f32 %v471, 0.0
        %v504 = vmax.f32 %v472, 0.0
        %v505 = vmax.f32 %v473, 0.0
        %v506 = vmax.f32 %v474, 0.0
        %v507 = vmax.f32 %v475, 0.0
        %v508 = vmax.f32 %v476, 0.0
        %v509 = vmax.f32 %v477, 0.0
        %v510 = vmax.f32 %v478, 0.0
        %v511 = vmax.f32 %v479, 0.0
        %v512 = vmax.f32 %v480, 0.0
        %v513 = vmax.f32 %v481, 0.0
        %v514 = vmax.f32 %v482, 0.0
        %v515 = vmax.f32 %v483, 0.0
        %v516 = vpack.c.bf16 %v486, %v484
        %v517 = vpack.c.bf16 %v487, %v485
        %v518 = vpack.c.bf16 %v490, %v488
        %v519 = vpack.c.bf16 %v491, %v489
        %v520 = vpack.c.bf16 %v494, %v492
        %v521 = vpack.c.bf16 %v495, %v493
        %v522 = vpack.c.bf16 %v498, %v496
        %v523 = vpack.c.bf16 %v499, %v497
        %v524 = vpack.c.bf16 %v502, %v500
        %v525 = vpack.c.bf16 %v503, %v501
        %v526 = vpack.c.bf16 %v506, %v504
        %v527 = vpack.c.bf16 %v507, %v505
        %v528 = vpack.c.bf16 %v510, %v508
        %v529 = vpack.c.bf16 %v511, %v509
        %v530 = vpack.c.bf16 %v514, %v512
        %v531 = vpack.c.bf16 %v515, %v513
        %v532 = vld [vmem:[#allocation2] sm:$0xf]
        %v533 = vld [vmem:[#allocation2 + $0x4] sm:$0xf]
        %v534 = vld [vmem:[#allocation2 + $0x8] sm:$0xf]
        %v535 = vld [vmem:[#allocation2 + $0xc] sm:$0xf]
        %v536 = vld [vmem:[#allocation2 + $0x10] sm:$0xf]
        %v537 = vld [vmem:[#allocation2 + $0x14] sm:$0xf]
        %v538 = vld [vmem:[#allocation2 + $0x18] sm:$0xf]
        %v539 = vld [vmem:[#allocation2 + $0x1c] sm:$0xf]
        %v540 = vld [vmem:[#allocation2 + $0x20] sm:$0xf]
        %v541 = vld [vmem:[#allocation2 + $0x24] sm:$0xf]
        %v542 = vld [vmem:[#allocation2 + $0x28] sm:$0xf]
        %v543 = vld [vmem:[#allocation2 + $0x2c] sm:$0xf]
        %v544 = vld [vmem:[#allocation2 + $0x30] sm:$0xf]
        %v545 = vld [vmem:[#allocation2 + $0x34] sm:$0xf]
        %v546 = vld [vmem:[#allocation2 + $0x38] sm:$0xf]
        %v547 = vld [vmem:[#allocation2 + $0x3c] sm:$0xf]
        %v548 = vld [vmem:[#allocation2 + $0x40] sm:$0xf]
        %v549 = vld [vmem:[#allocation2 + $0x44] sm:$0xf]
        %v550 = vld [vmem:[#allocation2 + $0x48] sm:$0xf]
        %v551 = vld [vmem:[#allocation2 + $0x4c] sm:$0xf]
        %v552 = vld [vmem:[#allocation2 + $0x50] sm:$0xf]
        %v553 = vld [vmem:[#allocation2 + $0x54] sm:$0xf]
        %v554 = vld [vmem:[#allocation2 + $0x58] sm:$0xf]
        %v555 = vld [vmem:[#allocation2 + $0x5c] sm:$0xf]
        %v556 = vld [vmem:[#allocation2 + $0x60] sm:$0xf]
        %v557 = vld [vmem:[#allocation2 + $0x64] sm:$0xf]
        %v558 = vld [vmem:[#allocation2 + $0x68] sm:$0xf]
        %v559 = vld [vmem:[#allocation2 + $0x6c] sm:$0xf]
        %v560 = vld [vmem:[#allocation2 + $0x70] sm:$0xf]
        %v561 = vld [vmem:[#allocation2 + $0x74] sm:$0xf]
        %v562 = vld [vmem:[#allocation2 + $0x78] sm:$0xf]
        %v563 = vld [vmem:[#allocation2 + $0x7c] sm:$0xf]
        %v564 = vld [vmem:[%s6] sm:$0x1]
        %v566 = vperm.slane %v564, 0
        %v600 = vunpack.c.l.b16 %v532
        %v601 = vunpack.c.l.b16 %v533
        %v602 = vunpack.c.l.b16 %v534
        %v603 = vunpack.c.l.b16 %v535
        %v604 = vunpack.c.l.b16 %v536
        %v605 = vunpack.c.l.b16 %v537
        %v606 = vunpack.c.l.b16 %v538
        %v607 = vunpack.c.l.b16 %v539
        %v608 = vunpack.c.l.b16 %v540
        %v609 = vunpack.c.l.b16 %v541
        %v610 = vunpack.c.l.b16 %v542
        %v611 = vunpack.c.l.b16 %v543
        %v612 = vunpack.c.l.b16 %v544
        %v613 = vunpack.c.l.b16 %v545
        %v614 = vunpack.c.l.b16 %v546
        %v615 = vunpack.c.l.b16 %v547
        %v616 = vunpack.c.l.b16 %v548
        %v617 = vunpack.c.l.b16 %v549
        %v618 = vunpack.c.l.b16 %v550
        %v619 = vunpack.c.l.b16 %v551
        %v620 = vunpack.c.l.b16 %v552
        %v621 = vunpack.c.l.b16 %v553
        %v622 = vunpack.c.l.b16 %v554
        %v623 = vunpack.c.l.b16 %v555
        %v624 = vunpack.c.l.b16 %v556
        %v625 = vunpack.c.l.b16 %v557
        %v626 = vunpack.c.l.b16 %v558
        %v627 = vunpack.c.l.b16 %v559
        %v628 = vunpack.c.l.b16 %v560
        %v629 = vunpack.c.l.b16 %v561
        %v630 = vunpack.c.l.b16 %v562
        %v631 = vunpack.c.l.b16 %v563
        %v632 = vpack.c.b16 %v601, %v600
        %v633 = vpack.c.b16 %v603, %v602
        %v634 = vpack.c.b16 %v605, %v604
        %v635 = vpack.c.b16 %v607, %v606
        %v636 = vpack.c.b16 %v609, %v608
        %v637 = vpack.c.b16 %v611, %v610
        %v638 = vpack.c.b16 %v613, %v612
        %v639 = vpack.c.b16 %v615, %v614
        %v640 = vpack.c.b16 %v617, %v616
        %v641 = vpack.c.b16 %v619, %v618
        %v642 = vpack.c.b16 %v621, %v620
        %v643 = vpack.c.b16 %v623, %v622
        %v644 = vpack.c.b16 %v625, %v624
        %v645 = vpack.c.b16 %v627, %v626
        %v646 = vpack.c.b16 %v629, %v628
        %v647 = vpack.c.b16 %v631, %v630
        %664 = vmatpush.bf16.msra.mxu0 %v639
        %665 = vmatpush.bf16.msra.mxu0 %v638
        %666 = vmatpush.bf16.msra.mxu0 %v637
        %667 = vmatpush.bf16.msra.mxu0 %v636
        %668 = vmatpush.bf16.msra.mxu0 %v635
        %669 = vmatpush.bf16.msra.mxu0 %v634
        %670 = vmatpush.bf16.msra.mxu0 %v633
        %671 = vmatpush.bf16.msra.mxu0 %v632
        %672 = vmatmul.bf16.gmra.mxu0 %v516
        %v673 = vpop.f32.mrf.mxu0
        %v674 = vadd.f32 %v566, %v673
        %v675 = vpop.f32.mrf.mxu0
        %v676 = vadd.f32 %v566, %v675
        %677 = vmatmul.bf16.gmra.mxu0 %v518
        %v678 = vpop.f32.mrf.mxu0
        %v679 = vadd.f32 %v566, %v678
        %v680 = vpop.f32.mrf.mxu0
        %v681 = vadd.f32 %v566, %v680
        %682 = vmatmul.bf16.gmra.mxu0 %v520
        %v683 = vpop.f32.mrf.mxu0
        %v684 = vadd.f32 %v566, %v683
        %v685 = vpop.f32.mrf.mxu0
        %v686 = vadd.f32 %v566, %v685
        %687 = vmatmul.bf16.gmra.mxu0 %v522
        %v688 = vpop.f32.mrf.mxu0
        %v689 = vadd.f32 %v566, %v688
        %v690 = vpop.f32.mrf.mxu0
        %v691 = vadd.f32 %v566, %v690
        %692 = vmatmul.bf16.gmra.mxu0 %v524
        %v693 = vpop.f32.mrf.mxu0
        %v694 = vadd.f32 %v566, %v693
        %v695 = vpop.f32.mrf.mxu0
        %v696 = vadd.f32 %v566, %v695
        %697 = vmatmul.bf16.gmra.mxu0 %v526
        %v698 = vpop.f32.mrf.mxu0
        %v699 = vadd.f32 %v566, %v698
        %v700 = vpop.f32.mrf.mxu0
        %v701 = vadd.f32 %v566, %v700
        %702 = vmatmul.bf16.gmra.mxu0 %v528
        %v703 = vpop.f32.mrf.mxu0
        %v704 = vadd.f32 %v566, %v703
        %v705 = vpop.f32.mrf.mxu0
        %v706 = vadd.f32 %v566, %v705
        %707 = vmatmul.bf16.gmra.mxu0 %v530
        %v708 = vpop.f32.mrf.mxu0
        %v709 = vadd.f32 %v566, %v708
        %v710 = vpop.f32.mrf.mxu0
        %v711 = vadd.f32 %v566, %v710
        %712 = vdwg.mxu0
        %713 = vmatpush.bf16.msra.mxu0 %v647
        %714 = vmatpush.bf16.msra.mxu0 %v646
        %715 = vmatpush.bf16.msra.mxu0 %v645
        %716 = vmatpush.bf16.msra.mxu0 %v644
        %717 = vmatpush.bf16.msra.mxu0 %v643
        %718 = vmatpush.bf16.msra.mxu0 %v642
        %719 = vmatpush.bf16.msra.mxu0 %v641
        %720 = vmatpush.bf16.msra.mxu0 %v640
        %721 = vmatmul.bf16.gmra.mxu0 %v517
        %v722 = vpop.f32.mrf.mxu0
        %v723 = vadd.f32 %v674, %v722
        %v724 = vpop.f32.mrf.mxu0
        %v725 = vadd.f32 %v676, %v724
        %726 = vmatmul.bf16.gmra.mxu0 %v519
        %v727 = vpop.f32.mrf.mxu0
        %v728 = vadd.f32 %v679, %v727
        %v729 = vpop.f32.mrf.mxu0
        %v730 = vadd.f32 %v681, %v729
        %731 = vmatmul.bf16.gmra.mxu0 %v521
        %v732 = vpop.f32.mrf.mxu0
        %v733 = vadd.f32 %v684, %v732
        %v734 = vpop.f32.mrf.mxu0
        %v735 = vadd.f32 %v686, %v734
        %736 = vmatmul.bf16.gmra.mxu0 %v523
        %v737 = vpop.f32.mrf.mxu0
        %v738 = vadd.f32 %v689, %v737
        %v739 = vpop.f32.mrf.mxu0
        %v740 = vadd.f32 %v691, %v739
        %741 = vmatmul.bf16.gmra.mxu0 %v525
        %v742 = vpop.f32.mrf.mxu0
        %v743 = vadd.f32 %v694, %v742
        %v744 = vpop.f32.mrf.mxu0
        %v745 = vadd.f32 %v696, %v744
        %746 = vmatmul.bf16.gmra.mxu0 %v527
        %v747 = vpop.f32.mrf.mxu0
        %v748 = vadd.f32 %v699, %v747
        %v749 = vpop.f32.mrf.mxu0
        %v750 = vadd.f32 %v701, %v749
        %751 = vmatmul.bf16.gmra.mxu0 %v529
        %v752 = vpop.f32.mrf.mxu0
        %v753 = vadd.f32 %v704, %v752
        %v754 = vpop.f32.mrf.mxu0
        %v755 = vadd.f32 %v706, %v754
        %756 = vmatmul.bf16.gmra.mxu0 %v531
        %v757 = vpop.f32.mrf.mxu0
        %v758 = vadd.f32 %v709, %v757
        %v759 = vpop.f32.mrf.mxu0
        %v760 = vadd.f32 %v711, %v759
        %761 = vdwg.mxu0
        %762 = vst [vmem:[%s291] sm:$0xff] %v723
        %763 = vst [vmem:[%s291 + $0x8] sm:$0xff] %v725
        %764 = vst [vmem:[%s291 + $0x10] sm:$0xff] %v728
        %765 = vst [vmem:[%s291 + $0x18] sm:$0xff] %v730
        %766 = vst [vmem:[%s291 + $0x20] sm:$0xff] %v733
        %767 = vst [vmem:[%s291 + $0x28] sm:$0xff] %v735
        %768 = vst [vmem:[%s291 + $0x30] sm:$0xff] %v738
        %769 = vst [vmem:[%s291 + $0x38] sm:$0xff] %v740
        %770 = vst [vmem:[%s291 + $0x40] sm:$0xff] %v743
        %771 = vst [vmem:[%s291 + $0x48] sm:$0xff] %v745
        %772 = vst [vmem:[%s291 + $0x50] sm:$0xff] %v748
        %773 = vst [vmem:[%s291 + $0x58] sm:$0xff] %v750
        %774 = vst [vmem:[%s291 + $0x60] sm:$0xff] %v753
        %775 = vst [vmem:[%s291 + $0x68] sm:$0xff] %v755
        %776 = vst [vmem:[%s291 + $0x70] sm:$0xff] %v758
        %777 = vst [vmem:[%s291 + $0x78] sm:$0xff] %v760
        %s778 = sand.u32 %s182, 1
        %s779 = scalar_lea.sflag [#allocation4], %s778
        %s780 = sand.u32 %s182, 1
        %s781 = smul.addr %s780, 128
        %s782 = scalar_lea.vmem [#allocation5], %s781
        // Predicated region
        $region53: #{mlp_forward.5} parent=47 // pred_check
          %p783 = pneg %p192
        $region54: #{mlp_forward.5} parent=47 // pred_check_branch
          %785 = sbr.rel (%p783) target = $region56
        $region55: #{mlp_forward.5} parent=47 // pred_region
          %s786 = smul.u32 16, %s22
          %788 = vsyncadd %s779, 0
          %s789 = smul.addr %s786, 8
          %s790 = scalar_lea.hbm %s7, %s789
          %s791 = sshll.u32 %s782, 4
          %s792 = int_to_ptr.vmem [resolvable:$true] %s791
          %s793 = sshll.u32 %s790, 4
          %s794 = int_to_ptr.hbm [resolvable:$true] %s793
          %799 = dma.vmem_to_hbm [thread:$0]  %s792, 2048, %s794, %s779, 128, 128, 8
        $region56: #{mlp_forward.5} parent=47 // pred_fallthru
          _
      $region48: #{mlp_forward.5} parent=5 // pred_fallthru
        _
      %p800 = scmp.le.s32.totalorder 2, %s17
      // Predicated region
      $region57: #{mlp_forward.5} parent=5 // pred_check
        %p801 = pneg %p800
      $region58: #{mlp_forward.5} parent=5 // pred_check_branch
        %803 = sbr.rel (%p801) target = $region60
      $region59: #{mlp_forward.5} parent=5 // pred_region
        %s804 = ssub.s32 %s17, 2
        // Predicated region
        $region61: #{mlp_forward.5} parent=59 // pred_check
          %p805 = pneg %p198
        $region62: #{mlp_forward.5} parent=59 // pred_check_branch
          %807 = sbr.rel (%p805) target = $region64
        $region63: #{mlp_forward.5} parent=59 // pred_region
          %s808 = sand.u32 %s183, 1
          %s809 = scalar_lea.sflag [#allocation4], %s808
          %s810 = sand.u32 %s183, 1
          %s811 = smul.addr %s810, 128
          %s812 = scalar_lea.vmem [#allocation5], %s811
          %814 = dma.done %s809, 2048
        $region64: #{mlp_forward.5} parent=59 // pred_fallthru
          _
      $region60: #{mlp_forward.5} parent=5 // pred_fallthru
        _
    $region6: #{mlp_forward.5} parent=1 // loop_footer
      %s21 = sadd.s32 1, %s17
    $region7: #{mlp_forward.5} parent=1 // loop_footer_branch
      %16 = sbr.rel target = $region3
    $region8: #{mlp_forward.5} parent=1 // loop_exit
      _
    %815 = vsyncpa [#allocation3], 1
    %s816 = scalar_lea.sflag [#allocation3], 1
    %817 = vsyncpa %s816, 1
    %818 = vsyncpa [#allocation4], 1
    %s819 = scalar_lea.sflag [#allocation4], 1
    %820 = vsyncpa %s819, 1

// kernel: mlp_forward.3
$region0: #{mlp_forward.3}
  #allocation0 [shape = 'u32[]', space=smem, size = 0x4, offset = 0x4, fixed_abs, tag = 'smem constant byte address 0x4 - core index']
  #allocation1 [shape = 'u32[72,128]{1,0:T(1,128)}', space=vmem, size = 0x9000, scoped, tag = 'internal scratch']
  #allocation2 [shape = 'f32[1,256]{1,0:T(1,128)}', space=vmem, size = 0x400, scoped, tag = 'scratch operand']
  #allocation3 [shape = 'f32[1,256]{1,0:T(1,128)}', space=vmem, size = 0x400, scoped, tag = 'scratch operand']
  %s0 = inlined_call_operand.hbm [shape: f32[512,128], index: 0, kind: input, shape index: {}]
  %s1 = inlined_call_operand.hbm [shape: bf16[128,256], index: 1, kind: input, shape index: {}]
  %s2 = inlined_call_operand.hbm [shape: f32[1,256], index: 2, kind: input, shape index: {}]
  %s3 = inlined_call_operand.vmem [shape: f32[512,256], index: 3, kind: output, shape index: {0}]
  %s4 = inlined_call_operand.vmem [shape: f32[1,256], index: 4, kind: output, shape index: {1}]
  %s5 = inlined_call_operand.vmem [shape: f32[1,256], index: 5, kind: output, shape index: {2}]
  %6 = xla_tuple %s3, %s4, %s5
  %s7 = sld [smem:[#allocation0]]
  $region81: #{mlp_forward.3} parent=0
    _
  %s9 = ssub.s32 1, %s7
  %s10 = scalar_select 0, %s9, %s7
  $region1: #{mlp_forward.3} parent=0
    #allocation4 [shape = 'u8[131072]{0}', space=vmem, size = 0x20000, scoped, tag = 'input window, operand 0']
    #allocation5 [shape = 's32[2]{0}', space=sflag, size = 0x8, scoped, tag = 'scoped memory for mlp_forward.3']
    #allocation6 [shape = 'u8[65536]{0}', space=vmem, size = 0x10000, scoped, tag = 'input window, operand 1, single buffered']
    #allocation7 [shape = 's32[1]{0}', space=sflag, size = 0x4, scoped, tag = 'scoped memory for mlp_forward.3']
    #allocation8 [shape = 'u8[1024]{0}', space=vmem, size = 0x400, scoped, tag = 'input window, operand 2, single buffered']
    %11 = vsyncpa [#allocation5], 0
    %s12 = scalar_lea.sflag [#allocation5], 1
    %13 = vsyncpa %s12, 0
    %14 = vsyncpa [#allocation7], 0
    loop: start=0, step=1, limit=6
    $region2: #{mlp_forward.3} parent=1 // loop_pre_header
      _
    $region3: #{mlp_forward.3} parent=1 // loop_header
      %s16 = sphi 0, %s20
      %p17 = scmp.ge.s32.totalorder %s16, 6
      %s26 = sphi 0, %s28
      %s29 = sphi 0, %s26
      %s30 = sphi 0, %s29
      %s46 = sphi 0, %s30
      %s50 = sphi 0, %s50
      %s52 = sphi 0, %s50
      %s53 = sphi 0, %s52
      %s67 = sphi 0, %s53
      %s71 = sphi 0, %s71
      %s73 = sphi 0, %s71
      %s74 = sphi 0, %s73
      %s88 = sphi 0, %s74
      %s94 = sphi 0, %s96
      %s97 = sphi 0, %s94
      %s98 = sphi 0, %s97
      %s114 = sphi 0, %s98
      %s118 = sphi 0, %s118
      %s120 = sphi 0, %s118
      %s121 = sphi 0, %s120
      %s135 = sphi 0, %s121
      %s139 = sphi 0, %s139
      %s141 = sphi 0, %s139
      %s142 = sphi 0, %s141
      %s156 = sphi 0, %s142
    $region4: #{mlp_forward.3} parent=1 // loop_header_branch
      %19 = sbr.rel (%p17) target = $region8
    $region5: #{mlp_forward.3} parent=1 // loop_body
      %s21 = ssub.s32 %s16, 1
      %s22 = ssub.s32 %s16, 2
      %s23 = sadd.s32 %s16, 1
      %s24 = ssub.s32 %s16, %s23
      %p25 = scmp.eq.s32.totalorder %s24, 0
      %s27 = sadd.s32 %s26, 1
      %s28 = scalar_select %p25, %s26, %s27
      %p31 = pneg %p25
      %p32 = scmp.eq.s32.totalorder %s16, 3
      %p33 = por %p31, %p32
      %p34 = scmp.ne.s32.totalorder %s26, %s29
      %p35 = scmp.eq.s32.totalorder %s16, 0
      %p36 = por %p34, %p35
      %p37 = scmp.ne.s32.totalorder %s26, %s29
      %p38 = scmp.eq.s32.totalorder %s21, 3
      %p39 = por %p37, %p38
      %p40 = scmp.ne.s32.totalorder %s29, %s30
      %p41 = scmp.eq.s32.totalorder %s21, 0
      %p42 = por %p40, %p41
      %p43 = scmp.ne.s32.totalorder %s29, %s30
      %p44 = scmp.eq.s32.totalorder %s22, 3
      %p45 = por %p43, %p44
      %p47 = scmp.ne.s32.totalorder %s30, %s46
      %p48 = scmp.eq.s32.totalorder %s22, 0
      %p49 = por %p47, %p48
      %s51 = sadd.s32 %s50, 1
      %p54 = scmp.eq.s32.totalorder %s16, 3
      %p55 = scmp.ne.s32.totalorder %s50, %s52
      %p56 = scmp.eq.s32.totalorder %s16, 0
      %p57 = por %p55, %p56
      %p58 = scmp.ne.s32.totalorder %s50, %s52
      %p59 = scmp.eq.s32.totalorder %s21, 3
      %p60 = por %p58, %p59
      %p61 = scmp.ne.s32.totalorder %s52, %s53
      %p62 = scmp.eq.s32.totalorder %s21, 0
      %p63 = por %p61, %p62
      %p64 = scmp.ne.s32.totalorder %s52, %s53
      %p65 = scmp.eq.s32.totalorder %s22, 3
      %p66 = por %p64, %p65
      %p68 = scmp.ne.s32.totalorder %s53, %s67
      %p69 = scmp.eq.s32.totalorder %s22, 0
      %p70 = por %p68, %p69
      %s72 = sadd.s32 %s71, 1
      %p75 = scmp.eq.s32.totalorder %s16, 3
      %p76 = scmp.ne.s32.totalorder %s71, %s73
      %p77 = scmp.eq.s32.totalorder %s16, 0
      %p78 = por %p76, %p77
      %p79 = scmp.ne.s32.totalorder %s71, %s73
      %p80 = scmp.eq.s32.totalorder %s21, 3
      %p81 = por %p79, %p80
      %p82 = scmp.ne.s32.totalorder %s73, %s74
      %p83 = scmp.eq.s32.totalorder %s21, 0
      %p84 = por %p82, %p83
      %p85 = scmp.ne.s32.totalorder %s73, %s74
      %p86 = scmp.eq.s32.totalorder %s22, 3
      %p87 = por %p85, %p86
      %p89 = scmp.ne.s32.totalorder %s74, %s88
      %p90 = scmp.eq.s32.totalorder %s22, 0
      %p91 = por %p89, %p90
      %s92 = ssub.s32 %s16, %s23
      %p93 = scmp.eq.s32.totalorder %s92, 0
      %s95 = sadd.s32 %s94, 1
      %s96 = scalar_select %p93, %s94, %s95
      %p99 = pneg %p93
      %p100 = scmp.eq.s32.totalorder %s16, 3
      %p101 = por %p99, %p100
      %p102 = scmp.ne.s32.totalorder %s94, %s97
      %p103 = scmp.eq.s32.totalorder %s16, 0
      %p104 = por %p102, %p103
      %p105 = scmp.ne.s32.totalorder %s94, %s97
      %p106 = scmp.eq.s32.totalorder %s21, 3
      %p107 = por %p105, %p106
      %p108 = scmp.ne.s32.totalorder %s97, %s98
      %p109 = scmp.eq.s32.totalorder %s21, 0
      %p110 = por %p108, %p109
      %p111 = scmp.ne.s32.totalorder %s97, %s98
      %p112 = scmp.eq.s32.totalorder %s22, 3
      %p113 = por %p111, %p112
      %p115 = scmp.ne.s32.totalorder %s98, %s114
      %p116 = scmp.eq.s32.totalorder %s22, 0
      %p117 = por %p115, %p116
      %s119 = sadd.s32 %s118, 1
      %p122 = scmp.eq.s32.totalorder %s16, 3
      %p123 = scmp.ne.s32.totalorder %s118, %s120
      %p124 = scmp.eq.s32.totalorder %s16, 0
      %p125 = por %p123, %p124
      %p126 = scmp.ne.s32.totalorder %s118, %s120
      %p127 = scmp.eq.s32.totalorder %s21, 3
      %p128 = por %p126, %p127
      %p129 = scmp.ne.s32.totalorder %s120, %s121
      %p130 = scmp.eq.s32.totalorder %s21, 0
      %p131 = por %p129, %p130
      %p132 = scmp.ne.s32.totalorder %s120, %s121
      %p133 = scmp.eq.s32.totalorder %s22, 3
      %p134 = por %p132, %p133
      %p136 = scmp.ne.s32.totalorder %s121, %s135
      %p137 = scmp.eq.s32.totalorder %s22, 0
      %p138 = por %p136, %p137
      %s140 = sadd.s32 %s139, 1
      %p143 = scmp.eq.s32.totalorder %s16, 3
      %p144 = scmp.ne.s32.totalorder %s139, %s141
      %p145 = scmp.eq.s32.totalorder %s16, 0
      %p146 = por %p144, %p145
      %p147 = scmp.ne.s32.totalorder %s139, %s141
      %p148 = scmp.eq.s32.totalorder %s21, 3
      %p149 = por %p147, %p148
      %p150 = scmp.ne.s32.totalorder %s141, %s142
      %p151 = scmp.eq.s32.totalorder %s21, 0
      %p152 = por %p150, %p151
      %p153 = scmp.ne.s32.totalorder %s141, %s142
      %p154 = scmp.eq.s32.totalorder %s22, 3
      %p155 = por %p153, %p154
      %p157 = scmp.ne.s32.totalorder %s142, %s156
      %p158 = scmp.eq.s32.totalorder %s22, 0
      %p159 = por %p157, %p158
      %p160 = scmp.le.s32.totalorder 1, %s16
      %p161 = scmp.lt.s32.totalorder %s16, 5
      %p162 = pnand %p160, %p161
      %p163 = pneg %p162
      // Predicated region
      $region9: #{mlp_forward.3} parent=5 // pred_check
        _
      $region10: #{mlp_forward.3} parent=5 // pred_check_branch
        %165 = sbr.rel (%p162) target = $region12
      $region11: #{mlp_forward.3} parent=5 // pred_region
        %s166 = ssub.s32 %s16, 1
        // Predicated region
        $region13: #{mlp_forward.3} parent=11 // pred_check
          %p167 = pneg %p63
        $region14: #{mlp_forward.3} parent=11 // pred_check_branch
          %169 = sbr.rel (%p167) target = $region16
        $region15: #{mlp_forward.3} parent=11 // pred_region
          %171 = vsyncadd [#allocation7], 0
          %s172 = sshll.u32 %s1, 4
          %s173 = int_to_ptr.hbm [resolvable:$true] %s172
          %s174 = sshll.u32 [#allocation6], 4
          %s175 = int_to_ptr.vmem [resolvable:$true] %s174
          %180 = dma.hbm_to_vmem [thread:$0]  %s173, 2048, %s175, [#allocation7], 128, 128, 8
        $region16: #{mlp_forward.3} parent=11 // pred_fallthru
          _
        // Predicated region
        $region17: #{mlp_forward.3} parent=11 // pred_check
          %p181 = pneg %p84
        $region18: #{mlp_forward.3} parent=11 // pred_check_branch
          %183 = sbr.rel (%p181) target = $region20
        $region19: #{mlp_forward.3} parent=11 // pred_region
          %185 = vsyncadd [#allocation7], 0
          %s187 = sshll.u32 %s2, 4
          %s188 = int_to_ptr.hbm [resolvable:$true] %s187
          %s189 = sshll.u32 [#allocation8], 4
          %s190 = int_to_ptr.vmem [resolvable:$true] %s189
          %192 = dma.hbm_to_vmem [thread:$0]  %s188, 32, %s190, [#allocation7]
        $region20: #{mlp_forward.3} parent=11 // pred_fallthru
          _
      $region12: #{mlp_forward.3} parent=5 // pred_fallthru
        _
      %p193 = scmp.lt.s32.totalorder %s16, 4
      // Predicated region
      $region21: #{mlp_forward.3} parent=5 // pred_check
        %p194 = pneg %p193
      $region22: #{mlp_forward.3} parent=5 // pred_check_branch
        %196 = sbr.rel (%p194) target = $region24
      $region23: #{mlp_forward.3} parent=5 // pred_region
        // Predicated region
        $region25: #{mlp_forward.3} parent=23 // pred_check
          %p197 = pneg %p36
        $region26: #{mlp_forward.3} parent=23 // pred_check_branch
          %199 = sbr.rel (%p197) target = $region28
        $region27: #{mlp_forward.3} parent=23 // pred_region
          %s200 = sand.u32 %s26, 1
          %s201 = scalar_lea.sflag [#allocation5], %s200
          %s202 = sand.u32 %s26, 1
          %s203 = smul.addr %s202, 128
          %s204 = scalar_lea.vmem [#allocation4], %s203
          %s205 = smul.u32 16, %s16
          %207 = vsyncadd %s201, 0
          %s208 = smul.addr %s205, 8
          %s209 = scalar_lea.hbm %s0, %s208
          %s210 = sshll.u32 %s209, 4
          %s211 = int_to_ptr.hbm [resolvable:$true] %s210
          %s212 = sshll.u32 %s204, 4
          %s213 = int_to_ptr.vmem [resolvable:$true] %s212
          %218 = dma.hbm_to_vmem [thread:$0]  %s211, 2048, %s213, %s201, 128, 128, 8
        $region28: #{mlp_forward.3} parent=23 // pred_fallthru
          _
      $region24: #{mlp_forward.3} parent=5 // pred_fallthru
        _
      %p219 = scmp.le.s32.totalorder 1, %s16
      %p220 = scmp.lt.s32.totalorder %s16, 5
      %p221 = pnand %p219, %p220
      %p222 = pneg %p221
      // Predicated region
      $region29: #{mlp_forward.3} parent=5 // pred_check
        _
      $region30: #{mlp_forward.3} parent=5 // pred_check_branch
        %224 = sbr.rel (%p221) target = $region32
      $region31: #{mlp_forward.3} parent=5 // pred_region
        %s225 = ssub.s32 %s16, 1
        %s226 = sand.u32 %s29, 1
        %s227 = scalar_lea.sflag [#allocation5], %s226
        %s228 = sand.u32 %s29, 1
        %s229 = smul.addr %s228, 128
        %s230 = scalar_lea.vmem [#allocation4], %s229
        // Predicated region
        $region33: #{mlp_forward.3} parent=31 // pred_check
          %p231 = pneg %p42
        $region34: #{mlp_forward.3} parent=31 // pred_check_branch
          %233 = sbr.rel (%p231) target = $region36
        $region35: #{mlp_forward.3} parent=31 // pred_region
          %235 = dma.done %s227, 2048
        $region36: #{mlp_forward.3} parent=31 // pred_fallthru
          _
        // Predicated region
        $region37: #{mlp_forward.3} parent=31 // pred_check
          %p236 = pneg %p63
        $region38: #{mlp_forward.3} parent=31 // pred_check_branch
          %238 = sbr.rel (%p236) target = $region40
        $region39: #{mlp_forward.3} parent=31 // pred_region
          %240 = dma.done [#allocation7], 2048
        $region40: #{mlp_forward.3} parent=31 // pred_fallthru
          _
        // Predicated region
        $region41: #{mlp_forward.3} parent=31 // pred_check
          %p241 = pneg %p84
        $region42: #{mlp_forward.3} parent=31 // pred_check_branch
          %243 = sbr.rel (%p241) target = $region44
        $region43: #{mlp_forward.3} parent=31 // pred_region
          %245 = dma.done [#allocation7], 32
        $region44: #{mlp_forward.3} parent=31 // pred_fallthru
          _
        %s246 = sand.u32 %s29, 1
        %s247 = scalar_lea.sflag [#allocation5], %s246
        %s248 = sand.u32 %s29, 1
        %s249 = smul.addr %s248, 128
        %s250 = scalar_lea.vmem [#allocation4], %s249
        %p251 = pneg %p42
        %p252 = pneg %p39
        %p253 = pneg %p63
        %p254 = pneg %p60
        %p255 = pneg %p84
        %p256 = pneg %p81
        %p257 = pneg %p110
        %p258 = pneg %p107
        %s259 = smul.u32 16, %s21
        %p260 = scmp.lt.s32.totalorder %s259, 63
        %s261 = scalar_select %p260, %s259, 63
        %s262 = smul.addr %s261, 2
        %s263 = smul.addr %s262, 8
        %s264 = scalar_lea.vmem %s3, %s263
        %p265 = pneg %p131
        %p266 = pneg %p128
        %p267 = pneg %p152
        %p268 = pneg %p149
        %s269 = smul.u32 16, %s21
        %s270 = smul.u32 16, %s21
        %p271 = scmp.lt.s32.totalorder %s270, 63
        %s272 = scalar_select %p271, %s270, 63
        %s273 = smul.addr %s272, 2
        %s274 = smul.addr %s273, 8
        %s275 = scalar_lea.vmem %s3, %s274
        %s276 = smul.u32 16, %s21
        %v277 = vld [vmem:[%s230] sm:$0xff]
        %v278 = vld [vmem:[%s230 + $0x8] sm:$0xff]
        %v279 = vld [vmem:[%s230 + $0x10] sm:$0xff]
        %v280 = vld [vmem:[%s230 + $0x18] sm:$0xff]
        %v281 = vld [vmem:[%s230 + $0x20] sm:$0xff]
        %v282 = vld [vmem:[%s230 + $0x28] sm:$0xff]
        %v283 = vld [vmem:[%s230 + $0x30] sm:$0xff]
        %v284 = vld [vmem:[%s230 + $0x38] sm:$0xff]
        %v285 = vld [vmem:[%s230 + $0x40] sm:$0xff]
        %v286 = vld [vmem:[%s230 + $0x48] sm:$0xff]
        %v287 = vld [vmem:[%s230 + $0x50] sm:$0xff]
        %v288 = vld [vmem:[%s230 + $0x58] sm:$0xff]
        %v289 = vld [vmem:[%s230 + $0x60] sm:$0xff]
        %v290 = vld [vmem:[%s230 + $0x68] sm:$0xff]
        %v291 = vld [vmem:[%s230 + $0x70] sm:$0xff]
        %v292 = vld [vmem:[%s230 + $0x78] sm:$0xff]
        %v293 = vpack.c.bf16 %v278, %v277
        %v294 = vpack.c.bf16 %v280, %v279
        %v295 = vpack.c.bf16 %v282, %v281
        %v296 = vpack.c.bf16 %v284, %v283
        %v297 = vpack.c.bf16 %v286, %v285
        %v298 = vpack.c.bf16 %v288, %v287
        %v299 = vpack.c.bf16 %v290, %v289
        %v300 = vpack.c.bf16 %v292, %v291
        %v301 = vld [vmem:[#allocation6] sm:$0xff]
        %v302 = vld [vmem:[#allocation6 + $0x8] sm:$0xff]
        %v303 = vld [vmem:[#allocation6 + $0x10] sm:$0xff]
        %v304 = vld [vmem:[#allocation6 + $0x18] sm:$0xff]
        %v305 = vld [vmem:[#allocation6 + $0x20] sm:$0xff]
        %v306 = vld [vmem:[#allocation6 + $0x28] sm:$0xff]
        %v307 = vld [vmem:[#allocation6 + $0x30] sm:$0xff]
        %v308 = vld [vmem:[#allocation6 + $0x38] sm:$0xff]
        %v309 = vld [vmem:[#allocation6 + $0x40] sm:$0xff]
        %v310 = vld [vmem:[#allocation6 + $0x48] sm:$0xff]
        %v311 = vld [vmem:[#allocation6 + $0x50] sm:$0xff]
        %v312 = vld [vmem:[#allocation6 + $0x58] sm:$0xff]
        %v313 = vld [vmem:[#allocation6 + $0x60] sm:$0xff]
        %v314 = vld [vmem:[#allocation6 + $0x68] sm:$0xff]
        %v315 = vld [vmem:[#allocation6 + $0x70] sm:$0xff]
        %v316 = vld [vmem:[#allocation6 + $0x78] sm:$0xff]
        %v317 = vld [vmem:[#allocation8] sm:$0x3]
        %v319 = vperm.slane %v317, 0
        %v320 = vperm.slane %v317, 1
        %v339 = vunpack.c.l.b16 %v301
        %v340 = vunpack.c.h.b16 %v301
        %v341 = vunpack.c.l.b16 %v302
        %v342 = vunpack.c.h.b16 %v302
        %v343 = vunpack.c.l.b16 %v303
        %v344 = vunpack.c.h.b16 %v303
        %v345 = vunpack.c.l.b16 %v304
        %v346 = vunpack.c.h.b16 %v304
        %v347 = vunpack.c.l.b16 %v305
        %v348 = vunpack.c.h.b16 %v305
        %v349 = vunpack.c.l.b16 %v306
        %v350 = vunpack.c.h.b16 %v306
        %v351 = vunpack.c.l.b16 %v307
        %v352 = vunpack.c.h.b16 %v307
        %v353 = vunpack.c.l.b16 %v308
        %v354 = vunpack.c.h.b16 %v308
        %v355 = vunpack.c.l.b16 %v309
        %v356 = vunpack.c.h.b16 %v309
        %v357 = vunpack.c.l.b16 %v310
        %v358 = vunpack.c.h.b16 %v310
        %v359 = vunpack.c.l.b16 %v311
        %v360 = vunpack.c.h.b16 %v311
        %v361 = vunpack.c.l.b16 %v312
        %v362 = vunpack.c.h.b16 %v312
        %v363 = vunpack.c.l.b16 %v313
        %v364 = vunpack.c.h.b16 %v313
        %v365 = vunpack.c.l.b16 %v314
        %v366 = vunpack.c.h.b16 %v314
        %v367 = vunpack.c.l.b16 %v315
        %v368 = vunpack.c.h.b16 %v315
        %v369 = vunpack.c.l.b16 %v316
        %v370 = vunpack.c.h.b16 %v316
        %v371 = vpack.c.b16 %v341, %v339
        %v372 = vpack.c.b16 %v342, %v340
        %v373 = vpack.c.b16 %v345, %v343
        %v374 = vpack.c.b16 %v346, %v344
        %v375 = vpack.c.b16 %v349, %v347
        %v376 = vpack.c.b16 %v350, %v348
        %v377 = vpack.c.b16 %v353, %v351
        %v378 = vpack.c.b16 %v354, %v352
        %v379 = vpack.c.b16 %v357, %v355
        %v380 = vpack.c.b16 %v358, %v356
        %v381 = vpack.c.b16 %v361, %v359
        %v382 = vpack.c.b16 %v362, %v360
        %v383 = vpack.c.b16 %v365, %v363
        %v384 = vpack.c.b16 %v366, %v364
        %v385 = vpack.c.b16 %v369, %v367
        %v386 = vpack.c.b16 %v370, %v368
        %403 = vmatpush.bf16.msra.mxu0 %v385
        %404 = vmatpush.bf16.msra.mxu0 %v383
        %405 = vmatpush.bf16.msra.mxu0 %v381
        %406 = vmatpush.bf16.msra.mxu0 %v379
        %407 = vmatpush.bf16.msra.mxu0 %v377
        %408 = vmatpush.bf16.msra.mxu0 %v375
        %409 = vmatpush.bf16.msra.mxu0 %v373
        %410 = vmatpush.bf16.msra.mxu0 %v371
        %411 = vmatmul.bf16.gmra.mxu0 %v293
        %v412 = vpop.f32.mrf.mxu0
        %v413 = vadd.f32 %v319, %v412
        %v414 = vpop.f32.mrf.mxu0
        %v415 = vadd.f32 %v319, %v414
        %416 = vmatmul.bf16.gmra.mxu0 %v294
        %v417 = vpop.f32.mrf.mxu0
        %v418 = vadd.f32 %v319, %v417
        %v419 = vpop.f32.mrf.mxu0
        %v420 = vadd.f32 %v319, %v419
        %421 = vmatmul.bf16.gmra.mxu0 %v295
        %v422 = vpop.f32.mrf.mxu0
        %v423 = vadd.f32 %v319, %v422
        %v424 = vpop.f32.mrf.mxu0
        %v425 = vadd.f32 %v319, %v424
        %426 = vmatmul.bf16.gmra.mxu0 %v296
        %v427 = vpop.f32.mrf.mxu0
        %v428 = vadd.f32 %v319, %v427
        %v429 = vpop.f32.mrf.mxu0
        %v430 = vadd.f32 %v319, %v429
        %431 = vmatmul.bf16.gmra.mxu0 %v297
        %v432 = vpop.f32.mrf.mxu0
        %v433 = vadd.f32 %v319, %v432
        %v434 = vpop.f32.mrf.mxu0
        %v435 = vadd.f32 %v319, %v434
        %436 = vmatmul.bf16.gmra.mxu0 %v298
        %v437 = vpop.f32.mrf.mxu0
        %v438 = vadd.f32 %v319, %v437
        %v439 = vpop.f32.mrf.mxu0
        %v440 = vadd.f32 %v319, %v439
        %441 = vmatmul.bf16.gmra.mxu0 %v299
        %v442 = vpop.f32.mrf.mxu0
        %v443 = vadd.f32 %v319, %v442
        %v444 = vpop.f32.mrf.mxu0
        %v445 = vadd.f32 %v319, %v444
        %446 = vmatmul.bf16.gmra.mxu0 %v300
        %v447 = vpop.f32.mrf.mxu0
        %v448 = vadd.f32 %v319, %v447
        %v449 = vpop.f32.mrf.mxu0
        %v450 = vadd.f32 %v319, %v449
        %451 = vdwg.mxu0
        %452 = vmatpush.bf16.msra.mxu0 %v386
        %453 = vmatpush.bf16.msra.mxu0 %v384
        %454 = vmatpush.bf16.msra.mxu0 %v382
        %455 = vmatpush.bf16.msra.mxu0 %v380
        %456 = vmatpush.bf16.msra.mxu0 %v378
        %457 = vmatpush.bf16.msra.mxu0 %v376
        %458 = vmatpush.bf16.msra.mxu0 %v374
        %459 = vmatpush.bf16.msra.mxu0 %v372
        %460 = vmatmul.bf16.gmra.mxu0 %v293
        %v461 = vpop.f32.mrf.mxu0
        %v462 = vadd.f32 %v320, %v461
        %v463 = vpop.f32.mrf.mxu0
        %v464 = vadd.f32 %v320, %v463
        %465 = vmatmul.bf16.gmra.mxu0 %v294
        %v466 = vpop.f32.mrf.mxu0
        %v467 = vadd.f32 %v320, %v466
        %v468 = vpop.f32.mrf.mxu0
        %v469 = vadd.f32 %v320, %v468
        %470 = vmatmul.bf16.gmra.mxu0 %v295
        %v471 = vpop.f32.mrf.mxu0
        %v472 = vadd.f32 %v320, %v471
        %v473 = vpop.f32.mrf.mxu0
        %v474 = vadd.f32 %v320, %v473
        %475 = vmatmul.bf16.gmra.mxu0 %v296
        %v476 = vpop.f32.mrf.mxu0
        %v477 = vadd.f32 %v320, %v476
        %v478 = vpop.f32.mrf.mxu0
        %v479 = vadd.f32 %v320, %v478
        %480 = vmatmul.bf16.gmra.mxu0 %v297
        %v481 = vpop.f32.mrf.mxu0
        %v482 = vadd.f32 %v320, %v481
        %v483 = vpop.f32.mrf.mxu0
        %v484 = vadd.f32 %v320, %v483
        %485 = vmatmul.bf16.gmra.mxu0 %v298
        %v486 = vpop.f32.mrf.mxu0
        %v487 = vadd.f32 %v320, %v486
        %v488 = vpop.f32.mrf.mxu0
        %v489 = vadd.f32 %v320, %v488
        %490 = vmatmul.bf16.gmra.mxu0 %v299
        %v491 = vpop.f32.mrf.mxu0
        %v492 = vadd.f32 %v320, %v491
        %v493 = vpop.f32.mrf.mxu0
        %v494 = vadd.f32 %v320, %v493
        %495 = vmatmul.bf16.gmra.mxu0 %v300
        %v496 = vpop.f32.mrf.mxu0
        %v497 = vadd.f32 %v320, %v496
        %v498 = vpop.f32.mrf.mxu0
        %v499 = vadd.f32 %v320, %v498
        %500 = vdwg.mxu0
        %501 = vst [vmem:[%s275] sm:$0xff] %v413
        %502 = vst [vmem:[%s275 + $0x8] sm:$0xff] %v462
        %503 = vst [vmem:[%s275 + $0x10] sm:$0xff] %v415
        %504 = vst [vmem:[%s275 + $0x18] sm:$0xff] %v464
        %505 = vst [vmem:[%s275 + $0x20] sm:$0xff] %v418
        %506 = vst [vmem:[%s275 + $0x28] sm:$0xff] %v467
        %507 = vst [vmem:[%s275 + $0x30] sm:$0xff] %v420
        %508 = vst [vmem:[%s275 + $0x38] sm:$0xff] %v469
        %509 = vst [vmem:[%s275 + $0x40] sm:$0xff] %v423
        %510 = vst [vmem:[%s275 + $0x48] sm:$0xff] %v472
        %511 = vst [vmem:[%s275 + $0x50] sm:$0xff] %v425
        %512 = vst [vmem:[%s275 + $0x58] sm:$0xff] %v474
        %513 = vst [vmem:[%s275 + $0x60] sm:$0xff] %v428
        %514 = vst [vmem:[%s275 + $0x68] sm:$0xff] %v477
        %515 = vst [vmem:[%s275 + $0x70] sm:$0xff] %v430
        %516 = vst [vmem:[%s275 + $0x78] sm:$0xff] %v479
        %517 = vst [vmem:[%s275 + $0x80] sm:$0xff] %v433
        %518 = vst [vmem:[%s275 + $0x88] sm:$0xff] %v482
        %519 = vst [vmem:[%s275 + $0x90] sm:$0xff] %v435
        %520 = vst [vmem:[%s275 + $0x98] sm:$0xff] %v484
        %521 = vst [vmem:[%s275 + $0xa0] sm:$0xff] %v438
        %522 = vst [vmem:[%s275 + $0xa8] sm:$0xff] %v487
        %523 = vst [vmem:[%s275 + $0xb0] sm:$0xff] %v440
        %524 = vst [vmem:[%s275 + $0xb8] sm:$0xff] %v489
        %525 = vst [vmem:[%s275 + $0xc0] sm:$0xff] %v443
        %526 = vst [vmem:[%s275 + $0xc8] sm:$0xff] %v492
        %527 = vst [vmem:[%s275 + $0xd0] sm:$0xff] %v445
        %528 = vst [vmem:[%s275 + $0xd8] sm:$0xff] %v494
        %529 = vst [vmem:[%s275 + $0xe0] sm:$0xff] %v448
        %530 = vst [vmem:[%s275 + $0xe8] sm:$0xff] %v497
        %531 = vst [vmem:[%s275 + $0xf0] sm:$0xff] %v450
        %532 = vst [vmem:[%s275 + $0xf8] sm:$0xff] %v499
        %p533 = scmp.eq.s32.totalorder %s21, 0
        // Predicated region
        $region45: #{mlp_forward.3} parent=31 // pred_check
          %p534 = pneg %p533
        $region46: #{mlp_forward.3} parent=31 // pred_check_branch
          %536 = sbr.rel (%p534) target = $region48
        $region47: #{mlp_forward.3} parent=31 // pred_region
          %v537 = vlaneseq
          %vm538 = vcmp.ge.s32.totalorder %v537, 0
          %vm539 = vcmp.lt.s32.totalorder %v537, 256
          %vm540 = vmand %vm538, %vm539
          %541 = vst.msk [vmem:[#allocation2] sm:$0x3] %vm540, 0.0
          %542 = vst.msk [vmem:[#allocation3] sm:$0x3] %vm540, 0.0
        $region48: #{mlp_forward.3} parent=31 // pred_fallthru
          _
        %v543 = vld [vmem:[#allocation2] sm:$0x3]
        %v544 = vadd.f32 %v413, %v415
        %v545 = vadd.f32 %v544, %v418
        %v546 = vadd.f32 %v545, %v420
        %v547 = vadd.f32 %v546, %v423
        %v548 = vadd.f32 %v547, %v425
        %v549 = vadd.f32 %v548, %v428
        %v550 = vadd.f32 %v549, %v430
        %v551 = vadd.f32 %v550, %v433
        %v552 = vadd.f32 %v551, %v435
        %v553 = vadd.f32 %v552, %v438
        %v554 = vadd.f32 %v553, %v440
        %v555 = vadd.f32 %v554, %v443
        %v556 = vadd.f32 %v555, %v445
        %v557 = vadd.f32 %v556, %v448
        %v558 = vadd.f32 %v557, %v450
        %v559 = vrot.slane %v558, 4
        %v560 = vadd.f32 %v558, %v559
        %v561 = vrot.slane %v560, 2
        %v562 = vadd.f32 %v560, %v561
        %v563 = vrot.slane %v562, 1
        %v564 = vadd.f32 %v562, %v563
        %v565 = vadd.f32 %v462, %v464
        %v566 = vadd.f32 %v565, %v467
        %v567 = vadd.f32 %v566, %v469
        %v568 = vadd.f32 %v567, %v472
        %v569 = vadd.f32 %v568, %v474
        %v570 = vadd.f32 %v569, %v477
        %v571 = vadd.f32 %v570, %v479
        %v572 = vadd.f32 %v571, %v482
        %v573 = vadd.f32 %v572, %v484
        %v574 = vadd.f32 %v573, %v487
        %v575 = vadd.f32 %v574, %v489
        %v576 = vadd.f32 %v575, %v492
        %v577 = vadd.f32 %v576, %v494
        %v578 = vadd.f32 %v577, %v497
        %v579 = vadd.f32 %v578, %v499
        %v580 = vrot.slane %v579, 4
        %v581 = vadd.f32 %v579, %v580
        %v582 = vrot.slane %v581, 2
        %v583 = vadd.f32 %v581, %v582
        %v584 = vrot.slane %v583, 1
        %v585 = vadd.f32 %v583, %v584
        %v588 = vrot.slane %v585, 7
        %vm589 = vcmask 1040384
        %v590 = vsel %vm589, %v564, %v588
        %v592 = vadd.f32 %v543, %v590
        %v593 = vlaneseq
        %vm594 = vcmp.ge.s32.totalorder %v593, 0
        %vm595 = vcmp.lt.s32.totalorder %v593, 256
        %vm596 = vmand %vm594, %vm595
        %597 = vst.msk [vmem:[#allocation2] sm:$0x3] %vm596, %v592
        %v598 = vld [vmem:[#allocation3] sm:$0x3]
        %v599 = vmul.f32 %v413, %v413
        %v600 = vmul.f32 %v462, %v462
        %v601 = vmul.f32 %v415, %v415
        %v602 = vmul.f32 %v464, %v464
        %v603 = vmul.f32 %v418, %v418
        %v604 = vmul.f32 %v467, %v467
        %v605 = vmul.f32 %v420, %v420
        %v606 = vmul.f32 %v469, %v469
        %v607 = vmul.f32 %v423, %v423
        %v608 = vmul.f32 %v472, %v472
        %v609 = vmul.f32 %v425, %v425
        %v610 = vmul.f32 %v474, %v474
        %v611 = vmul.f32 %v428, %v428
        %v612 = vmul.f32 %v477, %v477
        %v613 = vmul.f32 %v430, %v430
        %v614 = vmul.f32 %v479, %v479
        %v615 = vmul.f32 %v433, %v433
        %v616 = vmul.f32 %v482, %v482
        %v617 = vmul.f32 %v435, %v435
        %v618 = vmul.f32 %v484, %v484
        %v619 = vmul.f32 %v438, %v438
        %v620 = vmul.f32 %v487, %v487
        %v621 = vmul.f32 %v440, %v440
        %v622 = vmul.f32 %v489, %v489
        %v623 = vmul.f32 %v443, %v443
        %v624 = vmul.f32 %v492, %v492
        %v625 = vmul.f32 %v445, %v445
        %v626 = vmul.f32 %v494, %v494
        %v627 = vmul.f32 %v448, %v448
        %v628 = vmul.f32 %v497, %v497
        %v629 = vmul.f32 %v450, %v450
        %v630 = vmul.f32 %v499, %v499
        %v631 = vadd.f32 %v599, %v601
        %v632 = vadd.f32 %v631, %v603
        %v633 = vadd.f32 %v632, %v605
        %v634 = vadd.f32 %v633, %v607
        %v635 = vadd.f32 %v634, %v609
        %v636 = vadd.f32 %v635, %v611
        %v637 = vadd.f32 %v636, %v613
        %v638 = vadd.f32 %v637, %v615
        %v639 = vadd.f32 %v638, %v617
        %v640 = vadd.f32 %v639, %v619
        %v641 = vadd.f32 %v640, %v621
        %v642 = vadd.f32 %v641, %v623
        %v643 = vadd.f32 %v642, %v625
        %v644 = vadd.f32 %v643, %v627
        %v645 = vadd.f32 %v644, %v629
        %v646 = vrot.slane %v645, 4
        %v647 = vadd.f32 %v645, %v646
        %v648 = vrot.slane %v647, 2
        %v649 = vadd.f32 %v647, %v648
        %v650 = vrot.slane %v649, 1
        %v651 = vadd.f32 %v649, %v650
        %v652 = vadd.f32 %v600, %v602
        %v653 = vadd.f32 %v652, %v604
        %v654 = vadd.f32 %v653, %v606
        %v655 = vadd.f32 %v654, %v608
        %v656 = vadd.f32 %v655, %v610
        %v657 = vadd.f32 %v656, %v612
        %v658 = vadd.f32 %v657, %v614
        %v659 = vadd.f32 %v658, %v616
        %v660 = vadd.f32 %v659, %v618
        %v661 = vadd.f32 %v660, %v620
        %v662 = vadd.f32 %v661, %v622
        %v663 = vadd.f32 %v662, %v624
        %v664 = vadd.f32 %v663, %v626
        %v665 = vadd.f32 %v664, %v628
        %v666 = vadd.f32 %v665, %v630
        %v667 = vrot.slane %v666, 4
        %v668 = vadd.f32 %v666, %v667
        %v669 = vrot.slane %v668, 2
        %v670 = vadd.f32 %v668, %v669
        %v671 = vrot.slane %v670, 1
        %v672 = vadd.f32 %v670, %v671
        %v675 = vrot.slane %v672, 7
        %v676 = vsel %vm589, %v651, %v675
        %v678 = vadd.f32 %v598, %v676
        %679 = vst.msk [vmem:[#allocation3] sm:$0x3] %vm596, %v678
        %p680 = scmp.eq.s32.totalorder %s21, 3
        // Predicated region
        $region49: #{mlp_forward.3} parent=31 // pred_check
          %p681 = pneg %p680
        $region50: #{mlp_forward.3} parent=31 // pred_check_branch
          %683 = sbr.rel (%p681) target = $region52
        $region51: #{mlp_forward.3} parent=31 // pred_region
          %v684 = vld [vmem:[#allocation2] sm:$0x3]
          %v685 = vmul.f32 %v684, 0.001953125
          %v686 = vld [vmem:[#allocation3] sm:$0x3]
          %v687 = vmul.f32 %v686, 0.001953125
          %v688 = vmul.f32 %v685, %v685
          %v689 = vsub.f32 %v687, %v688
          %690 = vst.msk [vmem:[%s4] sm:$0x3] %vm596, %v685
          %v691 = vadd.f32 %v689, 1e-05
          %v692 = vrsqrt.pop %v691
          %v693 = vmul.f32 %v692, %v691
          %v694 = vmul.f32 %v693, %v692
          %v695 = vmul.f32 0.5, %v694
          %v696 = vsub.f32 1.5, %v695
          %v697 = vmul.f32 %v692, %v696
          %vm698 = vweird.f32 %v691
          %vm699 = vweird.f32 %v692
          %vm700 = vmor %vm698, %vm699
          %v701 = vsel %vm700, %v692, %v697
          %702 = vst.msk [vmem:[%s5] sm:$0x3] %vm596, %v701
        $region52: #{mlp_forward.3} parent=31 // pred_fallthru
          _
        %s703 = smul.u32 16, %s21
        %p704 = scmp.lt.s32.totalorder %s703, 63
        %s705 = scalar_select %p704, %s703, 63
        %s706 = smul.addr %s705, 2
        %s707 = smul.addr %s706, 8
        %s708 = scalar_lea.vmem %s3, %s707
        // Predicated region
        $region53: #{mlp_forward.3} parent=31 // pred_check
          %p709 = pneg %p107
        $region54: #{mlp_forward.3} parent=31 // pred_check_branch
          %711 = sbr.rel (%p709) target = $region56
        $region55: #{mlp_forward.3} parent=31 // pred_region
          %s712 = smul.u32 16, %s21
        $region56: #{mlp_forward.3} parent=31 // pred_fallthru
          _
        // Predicated region
        $region57: #{mlp_forward.3} parent=31 // pred_check
          %p713 = pneg %p128
        $region58: #{mlp_forward.3} parent=31 // pred_check_branch
          %715 = sbr.rel (%p713) target = $region60
        $region59: #{mlp_forward.3} parent=31 // pred_region
          _
        $region60: #{mlp_forward.3} parent=31 // pred_fallthru
          _
        // Predicated region
        $region61: #{mlp_forward.3} parent=31 // pred_check
          %p716 = pneg %p149
        $region62: #{mlp_forward.3} parent=31 // pred_check_branch
          %718 = sbr.rel (%p716) target = $region64
        $region63: #{mlp_forward.3} parent=31 // pred_region
          _
        $region64: #{mlp_forward.3} parent=31 // pred_fallthru
          _
        // Predicated region
        $region65: #{mlp_forward.3} parent=31 // pred_check
          %p719 = pneg %p128
        $region66: #{mlp_forward.3} parent=31 // pred_check_branch
          %721 = sbr.rel (%p719) target = $region68
        $region67: #{mlp_forward.3} parent=31 // pred_region
          _
        $region68: #{mlp_forward.3} parent=31 // pred_fallthru
          _
        // Predicated region
        $region69: #{mlp_forward.3} parent=31 // pred_check
          %p722 = pneg %p149
        $region70: #{mlp_forward.3} parent=31 // pred_check_branch
          %724 = sbr.rel (%p722) target = $region72
        $region71: #{mlp_forward.3} parent=31 // pred_region
          _
        $region72: #{mlp_forward.3} parent=31 // pred_fallthru
          _
      $region32: #{mlp_forward.3} parent=5 // pred_fallthru
        _
      %p725 = scmp.le.s32.totalorder 2, %s16
      // Predicated region
      $region73: #{mlp_forward.3} parent=5 // pred_check
        %p726 = pneg %p725
      $region74: #{mlp_forward.3} parent=5 // pred_check_branch
        %728 = sbr.rel (%p726) target = $region76
      $region75: #{mlp_forward.3} parent=5 // pred_region
        %s729 = ssub.s32 %s16, 2
        // Predicated region
        $region77: #{mlp_forward.3} parent=75 // pred_check
          %p730 = pneg %p113
        $region78: #{mlp_forward.3} parent=75 // pred_check_branch
          %732 = sbr.rel (%p730) target = $region80
        $region79: #{mlp_forward.3} parent=75 // pred_region
          %s733 = smul.u32 16, %s22
          %p734 = scmp.lt.s32.totalorder %s733, 63
          %s735 = scalar_select %p734, %s733, 63
          %s736 = smul.addr %s735, 2
          %s737 = smul.addr %s736, 8
          %s738 = scalar_lea.vmem %s3, %s737
        $region80: #{mlp_forward.3} parent=75 // pred_fallthru
          _
      $region76: #{mlp_forward.3} parent=5 // pred_fallthru
        _
    $region6: #{mlp_forward.3} parent=1 // loop_footer
      %s20 = sadd.s32 1, %s16
    $region7: #{mlp_forward.3} parent=1 // loop_footer_branch
      %15 = sbr.rel target = $region3
    $region8: #{mlp_forward.3} parent=1 // loop_exit
      _
    %739 = vsyncpa [#allocation5], 1
    %s740 = scalar_lea.sflag [#allocation5], 1
    %741 = vsyncpa %s740, 1
    %742 = vsyncpa [#allocation7], 1

// kernel: mlp_forward.4
$region0: #{mlp_forward.4}
  #allocation0 [shape = 'u32[]', space=smem, size = 0x4, offset = 0x4, fixed_abs, tag = 'smem constant byte address 0x4 - core index']
  #allocation1 [shape = 'u32[72,128]{1,0:T(1,128)}', space=vmem, size = 0x9000, scoped, tag = 'internal scratch']
  #allocation2 [shape = 'f32[1,256]{1,0:T(1,128)}', space=vmem, size = 0x400, scoped, tag = 'scratch operand']
  #allocation3 [shape = 'f32[1,256]{1,0:T(1,128)}', space=vmem, size = 0x400, scoped, tag = 'scratch operand']
  %s0 = inlined_call_operand.vmem [shape: f32[512,256], index: 0, kind: input, shape index: {}]
  %s1 = inlined_call_operand.vmem [shape: f32[1,256], index: 1, kind: input, shape index: {}]
  %s2 = inlined_call_operand.vmem [shape: f32[1,256], index: 2, kind: input, shape index: {}]
  %s3 = inlined_call_operand.vmem [shape: f32[1,256], index: 3, kind: input, shape index: {}]
  %s4 = inlined_call_operand.vmem [shape: f32[1,256], index: 4, kind: input, shape index: {}]
  %s5 = inlined_call_operand.hbm [shape: bf16[256,256], index: 5, kind: input, shape index: {}]
  %s6 = inlined_call_operand.vmem [shape: f32[1,256], index: 6, kind: input, shape index: {}]
  %s7 = inlined_call_operand.vmem [shape: f32[512,256], index: 7, kind: output, shape index: {0}]
  %s8 = inlined_call_operand.vmem [shape: f32[1,256], index: 8, kind: output, shape index: {1}]
  %s9 = inlined_call_operand.vmem [shape: f32[1,256], index: 9, kind: output, shape index: {2}]
  %10 = xla_tuple %s7, %s8, %s9
  %s11 = sld [smem:[#allocation0]]
  $region89: #{mlp_forward.4} parent=0
    _
  %s13 = ssub.s32 1, %s11
  %s14 = scalar_select 0, %s13, %s11
  $region1: #{mlp_forward.4} parent=0
    #allocation4 [shape = 'u8[131072]{0}', space=vmem, size = 0x20000, scoped, tag = 'input window, operand 5, single buffered']
    #allocation5 [shape = 's32[2]{0}', space=sflag, size = 0x8, scoped, tag = 'scoped memory for mlp_forward.4']
    %15 = vsyncpa [#allocation5], 0
    loop: start=0, step=1, limit=6
    $region2: #{mlp_forward.4} parent=1 // loop_pre_header
      _
    $region3: #{mlp_forward.4} parent=1 // loop_header
      %s17 = sphi 0, %s21
      %p18 = scmp.ge.s32.totalorder %s17, 6
      %s27 = sphi 0, %s29
      %s30 = sphi 0, %s27
      %s31 = sphi 0, %s30
      %s47 = sphi 0, %s31
      %s51 = sphi 0, %s51
      %s53 = sphi 0, %s51
      %s54 = sphi 0, %s53
      %s68 = sphi 0, %s54
      %s72 = sphi 0, %s72
      %s74 = sphi 0, %s72
      %s75 = sphi 0, %s74
      %s89 = sphi 0, %s75
      %s93 = sphi 0, %s93
      %s95 = sphi 0, %s93
      %s96 = sphi 0, %s95
      %s110 = sphi 0, %s96
      %s114 = sphi 0, %s114
      %s116 = sphi 0, %s114
      %s117 = sphi 0, %s116
      %s131 = sphi 0, %s117
      %s135 = sphi 0, %s135
      %s137 = sphi 0, %s135
      %s138 = sphi 0, %s137
      %s152 = sphi 0, %s138
      %s156 = sphi 0, %s156
      %s158 = sphi 0, %s156
      %s159 = sphi 0, %s158
      %s173 = sphi 0, %s159
      %s179 = sphi 0, %s181
      %s182 = sphi 0, %s179
      %s183 = sphi 0, %s182
      %s199 = sphi 0, %s183
      %s203 = sphi 0, %s203
      %s205 = sphi 0, %s203
      %s206 = sphi 0, %s205
      %s220 = sphi 0, %s206
      %s224 = sphi 0, %s224
      %s226 = sphi 0, %s224
      %s227 = sphi 0, %s226
      %s241 = sphi 0, %s227
    $region4: #{mlp_forward.4} parent=1 // loop_header_branch
      %20 = sbr.rel (%p18) target = $region8
    $region5: #{mlp_forward.4} parent=1 // loop_body
      %s22 = ssub.s32 %s17, 1
      %s23 = ssub.s32 %s17, 2
      %s24 = sadd.s32 %s17, 1
      %s25 = ssub.s32 %s17, %s24
      %p26 = scmp.eq.s32.totalorder %s25, 0
      %s28 = sadd.s32 %s27, 1
      %s29 = scalar_select %p26, %s27, %s28
      %p32 = pneg %p26
      %p33 = scmp.eq.s32.totalorder %s17, 3
      %p34 = por %p32, %p33
      %p35 = scmp.ne.s32.totalorder %s27, %s30
      %p36 = scmp.eq.s32.totalorder %s17, 0
      %p37 = por %p35, %p36
      %p38 = scmp.ne.s32.totalorder %s27, %s30
      %p39 = scmp.eq.s32.totalorder %s22, 3
      %p40 = por %p38, %p39
      %p41 = scmp.ne.s32.totalorder %s30, %s31
      %p42 = scmp.eq.s32.totalorder %s22, 0
      %p43 = por %p41, %p42
      %p44 = scmp.ne.s32.totalorder %s30, %s31
      %p45 = scmp.eq.s32.totalorder %s23, 3
      %p46 = por %p44, %p45
      %p48 = scmp.ne.s32.totalorder %s31, %s47
      %p49 = scmp.eq.s32.totalorder %s23, 0
      %p50 = por %p48, %p49
      %s52 = sadd.s32 %s51, 1
      %p55 = scmp.eq.s32.totalorder %s17, 3
      %p56 = scmp.ne.s32.totalorder %s51, %s53
      %p57 = scmp.eq.s32.totalorder %s17, 0
      %p58 = por %p56, %p57
      %p59 = scmp.ne.s32.totalorder %s51, %s53
      %p60 = scmp.eq.s32.totalorder %s22, 3
      %p61 = por %p59, %p60
      %p62 = scmp.ne.s32.totalorder %s53, %s54
      %p63 = scmp.eq.s32.totalorder %s22, 0
      %p64 = por %p62, %p63
      %p65 = scmp.ne.s32.totalorder %s53, %s54
      %p66 = scmp.eq.s32.totalorder %s23, 3
      %p67 = por %p65, %p66
      %p69 = scmp.ne.s32.totalorder %s54, %s68
      %p70 = scmp.eq.s32.totalorder %s23, 0
      %p71 = por %p69, %p70
      %s73 = sadd.s32 %s72, 1
      %p76 = scmp.eq.s32.totalorder %s17, 3
      %p77 = scmp.ne.s32.totalorder %s72, %s74
      %p78 = scmp.eq.s32.totalorder %s17, 0
      %p79 = por %p77, %p78
      %p80 = scmp.ne.s32.totalorder %s72, %s74
      %p81 = scmp.eq.s32.totalorder %s22, 3
      %p82 = por %p80, %p81
      %p83 = scmp.ne.s32.totalorder %s74, %s75
      %p84 = scmp.eq.s32.totalorder %s22, 0
      %p85 = por %p83, %p84
      %p86 = scmp.ne.s32.totalorder %s74, %s75
      %p87 = scmp.eq.s32.totalorder %s23, 3
      %p88 = por %p86, %p87
      %p90 = scmp.ne.s32.totalorder %s75, %s89
      %p91 = scmp.eq.s32.totalorder %s23, 0
      %p92 = por %p90, %p91
      %s94 = sadd.s32 %s93, 1
      %p97 = scmp.eq.s32.totalorder %s17, 3
      %p98 = scmp.ne.s32.totalorder %s93, %s95
      %p99 = scmp.eq.s32.totalorder %s17, 0
      %p100 = por %p98, %p99
      %p101 = scmp.ne.s32.totalorder %s93, %s95
      %p102 = scmp.eq.s32.totalorder %s22, 3
      %p103 = por %p101, %p102
      %p104 = scmp.ne.s32.totalorder %s95, %s96
      %p105 = scmp.eq.s32.totalorder %s22, 0
      %p106 = por %p104, %p105
      %p107 = scmp.ne.s32.totalorder %s95, %s96
      %p108 = scmp.eq.s32.totalorder %s23, 3
      %p109 = por %p107, %p108
      %p111 = scmp.ne.s32.totalorder %s96, %s110
      %p112 = scmp.eq.s32.totalorder %s23, 0
      %p113 = por %p111, %p112
      %s115 = sadd.s32 %s114, 1
      %p118 = scmp.eq.s32.totalorder %s17, 3
      %p119 = scmp.ne.s32.totalorder %s114, %s116
      %p120 = scmp.eq.s32.totalorder %s17, 0
      %p121 = por %p119, %p120
      %p122 = scmp.ne.s32.totalorder %s114, %s116
      %p123 = scmp.eq.s32.totalorder %s22, 3
      %p124 = por %p122, %p123
      %p125 = scmp.ne.s32.totalorder %s116, %s117
      %p126 = scmp.eq.s32.totalorder %s22, 0
      %p127 = por %p125, %p126
      %p128 = scmp.ne.s32.totalorder %s116, %s117
      %p129 = scmp.eq.s32.totalorder %s23, 3
      %p130 = por %p128, %p129
      %p132 = scmp.ne.s32.totalorder %s117, %s131
      %p133 = scmp.eq.s32.totalorder %s23, 0
      %p134 = por %p132, %p133
      %s136 = sadd.s32 %s135, 1
      %p139 = scmp.eq.s32.totalorder %s17, 3
      %p140 = scmp.ne.s32.totalorder %s135, %s137
      %p141 = scmp.eq.s32.totalorder %s17, 0
      %p142 = por %p140, %p141
      %p143 = scmp.ne.s32.totalorder %s135, %s137
      %p144 = scmp.eq.s32.totalorder %s22, 3
      %p145 = por %p143, %p144
      %p146 = scmp.ne.s32.totalorder %s137, %s138
      %p147 = scmp.eq.s32.totalorder %s22, 0
      %p148 = por %p146, %p147
      %p149 = scmp.ne.s32.totalorder %s137, %s138
      %p150 = scmp.eq.s32.totalorder %s23, 3
      %p151 = por %p149, %p150
      %p153 = scmp.ne.s32.totalorder %s138, %s152
      %p154 = scmp.eq.s32.totalorder %s23, 0
      %p155 = por %p153, %p154
      %s157 = sadd.s32 %s156, 1
      %p160 = scmp.eq.s32.totalorder %s17, 3
      %p161 = scmp.ne.s32.totalorder %s156, %s158
      %p162 = scmp.eq.s32.totalorder %s17, 0
      %p163 = por %p161, %p162
      %p164 = scmp.ne.s32.totalorder %s156, %s158
      %p165 = scmp.eq.s32.totalorder %s22, 3
      %p166 = por %p164, %p165
      %p167 = scmp.ne.s32.totalorder %s158, %s159
      %p168 = scmp.eq.s32.totalorder %s22, 0
      %p169 = por %p167, %p168
      %p170 = scmp.ne.s32.totalorder %s158, %s159
      %p171 = scmp.eq.s32.totalorder %s23, 3
      %p172 = por %p170, %p171
      %p174 = scmp.ne.s32.totalorder %s159, %s173
      %p175 = scmp.eq.s32.totalorder %s23, 0
      %p176 = por %p174, %p175
      %s177 = ssub.s32 %s17, %s24
      %p178 = scmp.eq.s32.totalorder %s177, 0
      %s180 = sadd.s32 %s179, 1
      %s181 = scalar_select %p178, %s179, %s180
      %p184 = pneg %p178
      %p185 = scmp.eq.s32.totalorder %s17, 3
      %p186 = por %p184, %p185
      %p187 = scmp.ne.s32.totalorder %s179, %s182
      %p188 = scmp.eq.s32.totalorder %s17, 0
      %p189 = por %p187, %p188
      %p190 = scmp.ne.s32.totalorder %s179, %s182
      %p191 = scmp.eq.s32.totalorder %s22, 3
      %p192 = por %p190, %p191
      %p193 = scmp.ne.s32.totalorder %s182, %s183
      %p194 = scmp.eq.s32.totalorder %s22, 0
      %p195 = por %p193, %p194
      %p196 = scmp.ne.s32.totalorder %s182, %s183
      %p197 = scmp.eq.s32.totalorder %s23, 3
      %p198 = por %p196, %p197
      %p200 = scmp.ne.s32.totalorder %s183, %s199
      %p201 = scmp.eq.s32.totalorder %s23, 0
      %p202 = por %p200, %p201
      %s204 = sadd.s32 %s203, 1
      %p207 = scmp.eq.s32.totalorder %s17, 3
      %p208 = scmp.ne.s32.totalorder %s203, %s205
      %p209 = scmp.eq.s32.totalorder %s17, 0
      %p210 = por %p208, %p209
      %p211 = scmp.ne.s32.totalorder %s203, %s205
      %p212 = scmp.eq.s32.totalorder %s22, 3
      %p213 = por %p211, %p212
      %p214 = scmp.ne.s32.totalorder %s205, %s206
      %p215 = scmp.eq.s32.totalorder %s22, 0
      %p216 = por %p214, %p215
      %p217 = scmp.ne.s32.totalorder %s205, %s206
      %p218 = scmp.eq.s32.totalorder %s23, 3
      %p219 = por %p217, %p218
      %p221 = scmp.ne.s32.totalorder %s206, %s220
      %p222 = scmp.eq.s32.totalorder %s23, 0
      %p223 = por %p221, %p222
      %s225 = sadd.s32 %s224, 1
      %p228 = scmp.eq.s32.totalorder %s17, 3
      %p229 = scmp.ne.s32.totalorder %s224, %s226
      %p230 = scmp.eq.s32.totalorder %s17, 0
      %p231 = por %p229, %p230
      %p232 = scmp.ne.s32.totalorder %s224, %s226
      %p233 = scmp.eq.s32.totalorder %s22, 3
      %p234 = por %p232, %p233
      %p235 = scmp.ne.s32.totalorder %s226, %s227
      %p236 = scmp.eq.s32.totalorder %s22, 0
      %p237 = por %p235, %p236
      %p238 = scmp.ne.s32.totalorder %s226, %s227
      %p239 = scmp.eq.s32.totalorder %s23, 3
      %p240 = por %p238, %p239
      %p242 = scmp.ne.s32.totalorder %s227, %s241
      %p243 = scmp.eq.s32.totalorder %s23, 0
      %p244 = por %p242, %p243
      %p245 = scmp.le.s32.totalorder 1, %s17
      %p246 = scmp.lt.s32.totalorder %s17, 5
      %p247 = pnand %p245, %p246
      %p248 = pneg %p247
      // Predicated region
      $region9: #{mlp_forward.4} parent=5 // pred_check
        _
      $region10: #{mlp_forward.4} parent=5 // pred_check_branch
        %250 = sbr.rel (%p247) target = $region12
      $region11: #{mlp_forward.4} parent=5 // pred_region
        %s251 = ssub.s32 %s17, 1
        // Predicated region
        $region13: #{mlp_forward.4} parent=11 // pred_check
          %p252 = pneg %p64
        $region14: #{mlp_forward.4} parent=11 // pred_check_branch
          %254 = sbr.rel (%p252) target = $region16
        $region15: #{mlp_forward.4} parent=11 // pred_region
          _
        $region16: #{mlp_forward.4} parent=11 // pred_fallthru
          _
        // Predicated region
        $region17: #{mlp_forward.4} parent=11 // pred_check
          %p255 = pneg %p85
        $region18: #{mlp_forward.4} parent=11 // pred_check_branch
          %257 = sbr.rel (%p255) target = $region20
        $region19: #{mlp_forward.4} parent=11 // pred_region
          _
        $region20: #{mlp_forward.4} parent=11 // pred_fallthru
          _
        // Predicated region
        $region21: #{mlp_forward.4} parent=11 // pred_check
          %p258 = pneg %p106
        $region22: #{mlp_forward.4} parent=11 // pred_check_branch
          %260 = sbr.rel (%p258) target = $region24
        $region23: #{mlp_forward.4} parent=11 // pred_region
          _
        $region24: #{mlp_forward.4} parent=11 // pred_fallthru
          _
        // Predicated region
        $region25: #{mlp_forward.4} parent=11 // pred_check
          %p261 = pneg %p127
        $region26: #{mlp_forward.4} parent=11 // pred_check_branch
          %263 = sbr.rel (%p261) target = $region28
        $region27: #{mlp_forward.4} parent=11 // pred_region
          _
        $region28: #{mlp_forward.4} parent=11 // pred_fallthru
          _
        // Predicated region
        $region29: #{mlp_forward.4} parent=11 // pred_check
          %p264 = pneg %p148
        $region30: #{mlp_forward.4} parent=11 // pred_check_branch
          %266 = sbr.rel (%p264) target = $region32
        $region31: #{mlp_forward.4} parent=11 // pred_region
          %268 = vsyncadd [#allocation5], 0
          %s269 = sshll.u32 %s5, 4
          %s270 = int_to_ptr.hbm [resolvable:$true] %s269
          %s271 = sshll.u32 [#allocation4], 4
          %s272 = int_to_ptr.vmem [resolvable:$true] %s271
          %277 = dma.hbm_to_vmem [thread:$0]  %s270, 4096, %s272, [#allocation5], 128, 128, 8
        $region32: #{mlp_forward.4} parent=11 // pred_fallthru
          _
        // Predicated region
        $region33: #{mlp_forward.4} parent=11 // pred_check
          %p278 = pneg %p169
        $region34: #{mlp_forward.4} parent=11 // pred_check_branch
          %280 = sbr.rel (%p278) target = $region36
        $region35: #{mlp_forward.4} parent=11 // pred_region
          _
        $region36: #{mlp_forward.4} parent=11 // pred_fallthru
          _
      $region12: #{mlp_forward.4} parent=5 // pred_fallthru
        _
      %p281 = scmp.lt.s32.totalorder %s17, 4
      // Predicated region
      $region37: #{mlp_forward.4} parent=5 // pred_check
        %p282 = pneg %p281
      $region38: #{mlp_forward.4} parent=5 // pred_check_branch
        %284 = sbr.rel (%p282) target = $region40
      $region39: #{mlp_forward.4} parent=5 // pred_region
        // Predicated region
        $region41: #{mlp_forward.4} parent=39 // pred_check
          %p285 = pneg %p37
        $region42: #{mlp_forward.4} parent=39 // pred_check_branch
          %287 = sbr.rel (%p285) target = $region44
        $region43: #{mlp_forward.4} parent=39 // pred_region
          %s288 = smul.u32 16, %s17
          %p289 = scmp.lt.s32.totalorder %s288, 63
          %s290 = scalar_select %p289, %s288, 63
          %s291 = smul.addr %s290, 2
          %s292 = smul.addr %s291, 8
          %s293 = scalar_lea.vmem %s0, %s292
          %s294 = smul.u32 16, %s17
        $region44: #{mlp_forward.4} parent=39 // pred_fallthru
          _
      $region40: #{mlp_forward.4} parent=5 // pred_fallthru
        _
      %p295 = scmp.le.s32.totalorder 1, %s17
      %p296 = scmp.lt.s32.totalorder %s17, 5
      %p297 = pnand %p295, %p296
      %p298 = pneg %p297
      // Predicated region
      $region45: #{mlp_forward.4} parent=5 // pred_check
        _
      $region46: #{mlp_forward.4} parent=5 // pred_check_branch
        %300 = sbr.rel (%p297) target = $region48
      $region47: #{mlp_forward.4} parent=5 // pred_region
        %s301 = ssub.s32 %s17, 1
        // Predicated region
        $region49: #{mlp_forward.4} parent=47 // pred_check
          %p302 = pneg %p148
        $region50: #{mlp_forward.4} parent=47 // pred_check_branch
          %304 = sbr.rel (%p302) target = $region52
        $region51: #{mlp_forward.4} parent=47 // pred_region
          %306 = dma.done [#allocation5], 4096
        $region52: #{mlp_forward.4} parent=47 // pred_fallthru
          _
        %s307 = smul.u32 16, %s22
        %p308 = scmp.lt.s32.totalorder %s307, 63
        %s309 = scalar_select %p308, %s307, 63
        %s310 = smul.addr %s309, 2
        %s311 = smul.addr %s310, 8
        %s312 = scalar_lea.vmem %s0, %s311
        %p313 = pneg %p43
        %p314 = pneg %p40
        %p315 = pneg %p64
        %p316 = pneg %p61
        %p317 = pneg %p85
        %p318 = pneg %p82
        %p319 = pneg %p106
        %p320 = pneg %p103
        %p321 = pneg %p127
        %p322 = pneg %p124
        %p323 = pneg %p148
        %p324 = pneg %p145
        %p325 = pneg %p169
        %p326 = pneg %p166
        %p327 = pneg %p195
        %p328 = pneg %p192
        %s329 = smul.u32 16, %s22
        %p330 = scmp.lt.s32.totalorder %s329, 63
        %s331 = scalar_select %p330, %s329, 63
        %s332 = smul.addr %s331, 2
        %s333 = smul.addr %s332, 8
        %s334 = scalar_lea.vmem %s7, %s333
        %p335 = pneg %p216
        %p336 = pneg %p213
        %p337 = pneg %p237
        %p338 = pneg %p234
        %s339 = smul.u32 16, %s22
        %p340 = scmp.lt.s32.totalorder %s339, 63
        %s341 = scalar_select %p340, %s339, 63
        %s342 = smul.addr %s341, 2
        %s343 = smul.addr %s342, 8
        %s344 = scalar_lea.vmem %s0, %s343
        %s345 = smul.u32 16, %s22
        %s346 = smul.u32 16, %s22
        %p347 = scmp.lt.s32.totalorder %s346, 63
        %s348 = scalar_select %p347, %s346, 63
        %s349 = smul.addr %s348, 2
        %s350 = smul.addr %s349, 8
        %s351 = scalar_lea.vmem %s7, %s350
        %s352 = smul.u32 16, %s22
        %v353 = vld [vmem:[%s344] sm:$0xff]
        %v354 = vld [vmem:[%s344 + $0x8] sm:$0xff]
        %v355 = vld [vmem:[%s344 + $0x10] sm:$0xff]
        %v356 = vld [vmem:[%s344 + $0x18] sm:$0xff]
        %v357 = vld [vmem:[%s344 + $0x20] sm:$0xff]
        %v358 = vld [vmem:[%s344 + $0x28] sm:$0xff]
        %v359 = vld [vmem:[%s344 + $0x30] sm:$0xff]
        %v360 = vld [vmem:[%s344 + $0x38] sm:$0xff]
        %v361 = vld [vmem:[%s344 + $0x40] sm:$0xff]
        %v362 = vld [vmem:[%s344 + $0x48] sm:$0xff]
        %v363 = vld [vmem:[%s344 + $0x50] sm:$0xff]
        %v364 = vld [vmem:[%s344 + $0x58] sm:$0xff]
        %v365 = vld [vmem:[%s344 + $0x60] sm:$0xff]
        %v366 = vld [vmem:[%s344 + $0x68] sm:$0xff]
        %v367 = vld [vmem:[%s344 + $0x70] sm:$0xff]
        %v368 = vld [vmem:[%s344 + $0x78] sm:$0xff]
        %v369 = vld [vmem:[%s344 + $0x80] sm:$0xff]
        %v370 = vld [vmem:[%s344 + $0x88] sm:$0xff]
        %v371 = vld [vmem:[%s344 + $0x90] sm:$0xff]
        %v372 = vld [vmem:[%s344 + $0x98] sm:$0xff]
        %v373 = vld [vmem:[%s344 + $0xa0] sm:$0xff]
        %v374 = vld [vmem:[%s344 + $0xa8] sm:$0xff]
        %v375 = vld [vmem:[%s344 + $0xb0] sm:$0xff]
        %v376 = vld [vmem:[%s344 + $0xb8] sm:$0xff]
        %v377 = vld [vmem:[%s344 + $0xc0] sm:$0xff]
        %v378 = vld [vmem:[%s344 + $0xc8] sm:$0xff]
        %v379 = vld [vmem:[%s344 + $0xd0] sm:$0xff]
        %v380 = vld [vmem:[%s344 + $0xd8] sm:$0xff]
        %v381 = vld [vmem:[%s344 + $0xe0] sm:$0xff]
        %v382 = vld [vmem:[%s344 + $0xe8] sm:$0xff]
        %v383 = vld [vmem:[%s344 + $0xf0] sm:$0xff]
        %v384 = vld [vmem:[%s344 + $0xf8] sm:$0xff]
        %v385 = vld [vmem:[%s1] sm:$0x3]
        %v387 = vperm.slane %v385, 0
        %v388 = vperm.slane %v385, 1
        %v391 = vsub.f32 %v353, %v387
        %v392 = vsub.f32 %v354, %v388
        %v393 = vsub.f32 %v355, %v387
        %v394 = vsub.f32 %v356, %v388
        %v395 = vsub.f32 %v357, %v387
        %v396 = vsub.f32 %v358, %v388
        %v397 = vsub.f32 %v359, %v387
        %v398 = vsub.f32 %v360, %v388
        %v399 = vsub.f32 %v361, %v387
        %v400 = vsub.f32 %v362, %v388
        %v401 = vsub.f32 %v363, %v387
        %v402 = vsub.f32 %v364, %v388
        %v403 = vsub.f32 %v365, %v387
        %v404 = vsub.f32 %v366, %v388
        %v405 = vsub.f32 %v367, %v387
        %v406 = vsub.f32 %v368, %v388
        %v407 = vsub.f32 %v369, %v387
        %v408 = vsub.f32 %v370, %v388
        %v409 = vsub.f32 %v371, %v387
        %v410 = vsub.f32 %v372, %v388
        %v411 = vsub.f32 %v373, %v387
        %v412 = vsub.f32 %v374, %v388
        %v413 = vsub.f32 %v375, %v387
        %v414 = vsub.f32 %v376, %v388
        %v415 = vsub.f32 %v377, %v387
        %v416 = vsub.f32 %v378, %v388
        %v417 = vsub.f32 %v379, %v387
        %v418 = vsub.f32 %v380, %v388
        %v419 = vsub.f32 %v381, %v387
        %v420 = vsub.f32 %v382, %v388
        %v421 = vsub.f32 %v383, %v387
        %v422 = vsub.f32 %v384, %v388
        %v423 = vld [vmem:[%s2] sm:$0x3]
        %v425 = vperm.slane %v423, 0
        %v426 = vperm.slane %v423, 1
        %v429 = vmul.f32 %v391, %v425
        %v430 = vmul.f32 %v392, %v426
        %v431 = vmul.f32 %v393, %v425
        %v432 = vmul.f32 %v394, %v426
        %v433 = vmul.f32 %v395, %v425
        %v434 = vmul.f32 %v396, %v426
        %v435 = vmul.f32 %v397, %v425
        %v436 = vmul.f32 %v398, %v426
        %v437 = vmul.f32 %v399, %v425
        %v438 = vmul.f32 %v400, %v426
        %v439 = vmul.f32 %v401, %v425
        %v440 = vmul.f32 %v402, %v426
        %v441 = vmul.f32 %v403, %v425
        %v442 = vmul.f32 %v404, %v426
        %v443 = vmul.f32 %v405, %v425
        %v444 = vmul.f32 %v406, %v426
        %v445 = vmul.f32 %v407, %v425
        %v446 = vmul.f32 %v408, %v426
        %v447 = vmul.f32 %v409, %v425
        %v448 = vmul.f32 %v410, %v426
        %v449 = vmul.f32 %v411, %v425
        %v450 = vmul.f32 %v412, %v426
        %v451 = vmul.f32 %v413, %v425
        %v452 = vmul.f32 %v414, %v426
        %v453 = vmul.f32 %v415, %v425
        %v454 = vmul.f32 %v416, %v426
        %v455 = vmul.f32 %v417, %v425
        %v456 = vmul.f32 %v418, %v426
        %v457 = vmul.f32 %v419, %v425
        %v458 = vmul.f32 %v420, %v426
        %v459 = vmul.f32 %v421, %v425
        %v460 = vmul.f32 %v422, %v426
        %v461 = vld [vmem:[%s3] sm:$0x3]
        %v463 = vperm.slane %v461, 0
        %v464 = vperm.slane %v461, 1
        %v467 = vmul.f32 %v429, %v463
        %v468 = vmul.f32 %v430, %v464
        %v469 = vmul.f32 %v431, %v463
        %v470 = vmul.f32 %v432, %v464
        %v471 = vmul.f32 %v433, %v463
        %v472 = vmul.f32 %v434, %v464
        %v473 = vmul.f32 %v435, %v463
        %v474 = vmul.f32 %v436, %v464
        %v475 = vmul.f32 %v437, %v463
        %v476 = vmul.f32 %v438, %v464
        %v477 = vmul.f32 %v439, %v463
        %v478 = vmul.f32 %v440, %v464
        %v479 = vmul.f32 %v441, %v463
        %v480 = vmul.f32 %v442, %v464
        %v481 = vmul.f32 %v443, %v463
        %v482 = vmul.f32 %v444, %v464
        %v483 = vmul.f32 %v445, %v463
        %v484 = vmul.f32 %v446, %v464
        %v485 = vmul.f32 %v447, %v463
        %v486 = vmul.f32 %v448, %v464
        %v487 = vmul.f32 %v449, %v463
        %v488 = vmul.f32 %v450, %v464
        %v489 = vmul.f32 %v451, %v463
        %v490 = vmul.f32 %v452, %v464
        %v491 = vmul.f32 %v453, %v463
        %v492 = vmul.f32 %v454, %v464
        %v493 = vmul.f32 %v455, %v463
        %v494 = vmul.f32 %v456, %v464
        %v495 = vmul.f32 %v457, %v463
        %v496 = vmul.f32 %v458, %v464
        %v497 = vmul.f32 %v459, %v463
        %v498 = vmul.f32 %v460, %v464
        %v499 = vld [vmem:[%s4] sm:$0x3]
        %v501 = vperm.slane %v499, 0
        %v502 = vperm.slane %v499, 1
        %v505 = vadd.f32 %v467, %v501
        %v506 = vadd.f32 %v468, %v502
        %v507 = vadd.f32 %v469, %v501
        %v508 = vadd.f32 %v470, %v502
        %v509 = vadd.f32 %v471, %v501
        %v510 = vadd.f32 %v472, %v502
        %v511 = vadd.f32 %v473, %v501
        %v512 = vadd.f32 %v474, %v502
        %v513 = vadd.f32 %v475, %v501
        %v514 = vadd.f32 %v476, %v502
        %v515 = vadd.f32 %v477, %v501
        %v516 = vadd.f32 %v478, %v502
        %v517 = vadd.f32 %v479, %v501
        %v518 = vadd.f32 %v480, %v502
        %v519 = vadd.f32 %v481, %v501
        %v520 = vadd.f32 %v482, %v502
        %v521 = vadd.f32 %v483, %v501
        %v522 = vadd.f32 %v484, %v502
        %v523 = vadd.f32 %v485, %v501
        %v524 = vadd.f32 %v486, %v502
        %v525 = vadd.f32 %v487, %v501
        %v526 = vadd.f32 %v488, %v502
        %v527 = vadd.f32 %v489, %v501
        %v528 = vadd.f32 %v490, %v502
        %v529 = vadd.f32 %v491, %v501
        %v530 = vadd.f32 %v492, %v502
        %v531 = vadd.f32 %v493, %v501
        %v532 = vadd.f32 %v494, %v502
        %v533 = vadd.f32 %v495, %v501
        %v534 = vadd.f32 %v496, %v502
        %v535 = vadd.f32 %v497, %v501
        %v536 = vadd.f32 %v498, %v502
        %v537 = vmax.f32 %v505, 0.0
        %v538 = vmax.f32 %v506, 0.0
        %v539 = vmax.f32 %v507, 0.0
        %v540 = vmax.f32 %v508, 0.0
        %v541 = vmax.f32 %v509, 0.0
        %v542 = vmax.f32 %v510, 0.0
        %v543 = vmax.f32 %v511, 0.0
        %v544 = vmax.f32 %v512, 0.0
        %v545 = vmax.f32 %v513, 0.0
        %v546 = vmax.f32 %v514, 0.0
        %v547 = vmax.f32 %v515, 0.0
        %v548 = vmax.f32 %v516, 0.0
        %v549 = vmax.f32 %v517, 0.0
        %v550 = vmax.f32 %v518, 0.0
        %v551 = vmax.f32 %v519, 0.0
        %v552 = vmax.f32 %v520, 0.0
        %v553 = vmax.f32 %v521, 0.0
        %v554 = vmax.f32 %v522, 0.0
        %v555 = vmax.f32 %v523, 0.0
        %v556 = vmax.f32 %v524, 0.0
        %v557 = vmax.f32 %v525, 0.0
        %v558 = vmax.f32 %v526, 0.0
        %v559 = vmax.f32 %v527, 0.0
        %v560 = vmax.f32 %v528, 0.0
        %v561 = vmax.f32 %v529, 0.0
        %v562 = vmax.f32 %v530, 0.0
        %v563 = vmax.f32 %v531, 0.0
        %v564 = vmax.f32 %v532, 0.0
        %v565 = vmax.f32 %v533, 0.0
        %v566 = vmax.f32 %v534, 0.0
        %v567 = vmax.f32 %v535, 0.0
        %v568 = vmax.f32 %v536, 0.0
        %v569 = vpack.c.bf16 %v539, %v537
        %v570 = vpack.c.bf16 %v540, %v538
        %v571 = vpack.c.bf16 %v543, %v541
        %v572 = vpack.c.bf16 %v544, %v542
        %v573 = vpack.c.bf16 %v547, %v545
        %v574 = vpack.c.bf16 %v548, %v546
        %v575 = vpack.c.bf16 %v551, %v549
        %v576 = vpack.c.bf16 %v552, %v550
        %v577 = vpack.c.bf16 %v555, %v553
        %v578 = vpack.c.bf16 %v556, %v554
        %v579 = vpack.c.bf16 %v559, %v557
        %v580 = vpack.c.bf16 %v560, %v558
        %v581 = vpack.c.bf16 %v563, %v561
        %v582 = vpack.c.bf16 %v564, %v562
        %v583 = vpack.c.bf16 %v567, %v565
        %v584 = vpack.c.bf16 %v568, %v566
        %v585 = vld [vmem:[#allocation4] sm:$0xff]
        %v586 = vld [vmem:[#allocation4 + $0x8] sm:$0xff]
        %v587 = vld [vmem:[#allocation4 + $0x10] sm:$0xff]
        %v588 = vld [vmem:[#allocation4 + $0x18] sm:$0xff]
        %v589 = vld [vmem:[#allocation4 + $0x20] sm:$0xff]
        %v590 = vld [vmem:[#allocation4 + $0x28] sm:$0xff]
        %v591 = vld [vmem:[#allocation4 + $0x30] sm:$0xff]
        %v592 = vld [vmem:[#allocation4 + $0x38] sm:$0xff]
        %v593 = vld [vmem:[#allocation4 + $0x40] sm:$0xff]
        %v594 = vld [vmem:[#allocation4 + $0x48] sm:$0xff]
        %v595 = vld [vmem:[#allocation4 + $0x50] sm:$0xff]
        %v596 = vld [vmem:[#allocation4 + $0x58] sm:$0xff]
        %v597 = vld [vmem:[#allocation4 + $0x60] sm:$0xff]
        %v598 = vld [vmem:[#allocation4 + $0x68] sm:$0xff]
        %v599 = vld [vmem:[#allocation4 + $0x70] sm:$0xff]
        %v600 = vld [vmem:[#allocation4 + $0x78] sm:$0xff]
        %v601 = vld [vmem:[#allocation4 + $0x80] sm:$0xff]
        %v602 = vld [vmem:[#allocation4 + $0x88] sm:$0xff]
        %v603 = vld [vmem:[#allocation4 + $0x90] sm:$0xff]
        %v604 = vld [vmem:[#allocation4 + $0x98] sm:$0xff]
        %v605 = vld [vmem:[#allocation4 + $0xa0] sm:$0xff]
        %v606 = vld [vmem:[#allocation4 + $0xa8] sm:$0xff]
        %v607 = vld [vmem:[#allocation4 + $0xb0] sm:$0xff]
        %v608 = vld [vmem:[#allocation4 + $0xb8] sm:$0xff]
        %v609 = vld [vmem:[#allocation4 + $0xc0] sm:$0xff]
        %v610 = vld [vmem:[#allocation4 + $0xc8] sm:$0xff]
        %v611 = vld [vmem:[#allocation4 + $0xd0] sm:$0xff]
        %v612 = vld [vmem:[#allocation4 + $0xd8] sm:$0xff]
        %v613 = vld [vmem:[#allocation4 + $0xe0] sm:$0xff]
        %v614 = vld [vmem:[#allocation4 + $0xe8] sm:$0xff]
        %v615 = vld [vmem:[#allocation4 + $0xf0] sm:$0xff]
        %v616 = vld [vmem:[#allocation4 + $0xf8] sm:$0xff]
        %v617 = vld [vmem:[%s6] sm:$0x3]
        %v619 = vperm.slane %v617, 0
        %v620 = vperm.slane %v617, 1
        %v655 = vunpack.c.l.b16 %v585
        %v656 = vunpack.c.h.b16 %v585
        %v657 = vunpack.c.l.b16 %v586
        %v658 = vunpack.c.h.b16 %v586
        %v659 = vunpack.c.l.b16 %v587
        %v660 = vunpack.c.h.b16 %v587
        %v661 = vunpack.c.l.b16 %v588
        %v662 = vunpack.c.h.b16 %v588
        %v663 = vunpack.c.l.b16 %v589
        %v664 = vunpack.c.h.b16 %v589
        %v665 = vunpack.c.l.b16 %v590
        %v666 = vunpack.c.h.b16 %v590
        %v667 = vunpack.c.l.b16 %v591
        %v668 = vunpack.c.h.b16 %v591
        %v669 = vunpack.c.l.b16 %v592
        %v670 = vunpack.c.h.b16 %v592
        %v671 = vunpack.c.l.b16 %v593
        %v672 = vunpack.c.h.b16 %v593
        %v673 = vunpack.c.l.b16 %v594
        %v674 = vunpack.c.h.b16 %v594
        %v675 = vunpack.c.l.b16 %v595
        %v676 = vunpack.c.h.b16 %v595
        %v677 = vunpack.c.l.b16 %v596
        %v678 = vunpack.c.h.b16 %v596
        %v679 = vunpack.c.l.b16 %v597
        %v680 = vunpack.c.h.b16 %v597
        %v681 = vunpack.c.l.b16 %v598
        %v682 = vunpack.c.h.b16 %v598
        %v683 = vunpack.c.l.b16 %v599
        %v684 = vunpack.c.h.b16 %v599
        %v685 = vunpack.c.l.b16 %v600
        %v686 = vunpack.c.h.b16 %v600
        %v687 = vunpack.c.l.b16 %v601
        %v688 = vunpack.c.h.b16 %v601
        %v689 = vunpack.c.l.b16 %v602
        %v690 = vunpack.c.h.b16 %v602
        %v691 = vunpack.c.l.b16 %v603
        %v692 = vunpack.c.h.b16 %v603
        %v693 = vunpack.c.l.b16 %v604
        %v694 = vunpack.c.h.b16 %v604
        %v695 = vunpack.c.l.b16 %v605
        %v696 = vunpack.c.h.b16 %v605
        %v697 = vunpack.c.l.b16 %v606
        %v698 = vunpack.c.h.b16 %v606
        %v699 = vunpack.c.l.b16 %v607
        %v700 = vunpack.c.h.b16 %v607
        %v701 = vunpack.c.l.b16 %v608
        %v702 = vunpack.c.h.b16 %v608
        %v703 = vunpack.c.l.b16 %v609
        %v704 = vunpack.c.h.b16 %v609
        %v705 = vunpack.c.l.b16 %v610
        %v706 = vunpack.c.h.b16 %v610
        %v707 = vunpack.c.l.b16 %v611
        %v708 = vunpack.c.h.b16 %v611
        %v709 = vunpack.c.l.b16 %v612
        %v710 = vunpack.c.h.b16 %v612
        %v711 = vunpack.c.l.b16 %v613
        %v712 = vunpack.c.h.b16 %v613
        %v713 = vunpack.c.l.b16 %v614
        %v714 = vunpack.c.h.b16 %v614
        %v715 = vunpack.c.l.b16 %v615
        %v716 = vunpack.c.h.b16 %v615
        %v717 = vunpack.c.l.b16 %v616
        %v718 = vunpack.c.h.b16 %v616
        %v719 = vpack.c.b16 %v657, %v655
        %v720 = vpack.c.b16 %v658, %v656
        %v721 = vpack.c.b16 %v661, %v659
        %v722 = vpack.c.b16 %v662, %v660
        %v723 = vpack.c.b16 %v665, %v663
        %v724 = vpack.c.b16 %v666, %v664
        %v725 = vpack.c.b16 %v669, %v667
        %v726 = vpack.c.b16 %v670, %v668
        %v727 = vpack.c.b16 %v673, %v671
        %v728 = vpack.c.b16 %v674, %v672
        %v729 = vpack.c.b16 %v677, %v675
        %v730 = vpack.c.b16 %v678, %v676
        %v731 = vpack.c.b16 %v681, %v679
        %v732 = vpack.c.b16 %v682, %v680
        %v733 = vpack.c.b16 %v685, %v683
        %v734 = vpack.c.b16 %v686, %v684
        %v735 = vpack.c.b16 %v689, %v687
        %v736 = vpack.c.b16 %v690, %v688
        %v737 = vpack.c.b16 %v693, %v691
        %v738 = vpack.c.b16 %v694, %v692
        %v739 = vpack.c.b16 %v697, %v695
        %v740 = vpack.c.b16 %v698, %v696
        %v741 = vpack.c.b16 %v701, %v699
        %v742 = vpack.c.b16 %v702, %v700
        %v743 = vpack.c.b16 %v705, %v703
        %v744 = vpack.c.b16 %v706, %v704
        %v745 = vpack.c.b16 %v709, %v707
        %v746 = vpack.c.b16 %v710, %v708
        %v747 = vpack.c.b16 %v713, %v711
        %v748 = vpack.c.b16 %v714, %v712
        %v749 = vpack.c.b16 %v717, %v715
        %v750 = vpack.c.b16 %v718, %v716
        %783 = vmatpush.bf16.msra.mxu0 %v733
        %784 = vmatpush.bf16.msra.mxu0 %v731
        %785 = vmatpush.bf16.msra.mxu0 %v729
        %786 = vmatpush.bf16.msra.mxu0 %v727
        %787 = vmatpush.bf16.msra.mxu0 %v725
        %788 = vmatpush.bf16.msra.mxu0 %v723
        %789 = vmatpush.bf16.msra.mxu0 %v721
        %790 = vmatpush.bf16.msra.mxu0 %v719
        %791 = vmatmul.bf16.gmra.mxu0 %v569
        %v792 = vpop.f32.mrf.mxu0
        %v793 = vadd.f32 %v619, %v792
        %v794 = vpop.f32.mrf.mxu0
        %v795 = vadd.f32 %v619, %v794
        %796 = vmatmul.bf16.gmra.mxu0 %v571
        %v797 = vpop.f32.mrf.mxu0
        %v798 = vadd.f32 %v619, %v797
        %v799 = vpop.f32.mrf.mxu0
        %v800 = vadd.f32 %v619, %v799
        %801 = vmatmul.bf16.gmra.mxu0 %v573
        %v802 = vpop.f32.mrf.mxu0
        %v803 = vadd.f32 %v619, %v802
        %v804 = vpop.f32.mrf.mxu0
        %v805 = vadd.f32 %v619, %v804
        %806 = vmatmul.bf16.gmra.mxu0 %v575
        %v807 = vpop.f32.mrf.mxu0
        %v808 = vadd.f32 %v619, %v807
        %v809 = vpop.f32.mrf.mxu0
        %v810 = vadd.f32 %v619, %v809
        %811 = vmatmul.bf16.gmra.mxu0 %v577
        %v812 = vpop.f32.mrf.mxu0
        %v813 = vadd.f32 %v619, %v812
        %v814 = vpop.f32.mrf.mxu0
        %v815 = vadd.f32 %v619, %v814
        %816 = vmatmul.bf16.gmra.mxu0 %v579
        %v817 = vpop.f32.mrf.mxu0
        %v818 = vadd.f32 %v619, %v817
        %v819 = vpop.f32.mrf.mxu0
        %v820 = vadd.f32 %v619, %v819
        %821 = vmatmul.bf16.gmra.mxu0 %v581
        %v822 = vpop.f32.mrf.mxu0
        %v823 = vadd.f32 %v619, %v822
        %v824 = vpop.f32.mrf.mxu0
        %v825 = vadd.f32 %v619, %v824
        %826 = vmatmul.bf16.gmra.mxu0 %v583
        %v827 = vpop.f32.mrf.mxu0
        %v828 = vadd.f32 %v619, %v827
        %v829 = vpop.f32.mrf.mxu0
        %v830 = vadd.f32 %v619, %v829
        %831 = vdwg.mxu0
        %832 = vmatpush.bf16.msra.mxu0 %v749
        %833 = vmatpush.bf16.msra.mxu0 %v747
        %834 = vmatpush.bf16.msra.mxu0 %v745
        %835 = vmatpush.bf16.msra.mxu0 %v743
        %836 = vmatpush.bf16.msra.mxu0 %v741
        %837 = vmatpush.bf16.msra.mxu0 %v739
        %838 = vmatpush.bf16.msra.mxu0 %v737
        %839 = vmatpush.bf16.msra.mxu0 %v735
        %840 = vmatmul.bf16.gmra.mxu0 %v570
        %v841 = vpop.f32.mrf.mxu0
        %v842 = vadd.f32 %v793, %v841
        %v843 = vpop.f32.mrf.mxu0
        %v844 = vadd.f32 %v795, %v843
        %845 = vmatmul.bf16.gmra.mxu0 %v572
        %v846 = vpop.f32.mrf.mxu0
        %v847 = vadd.f32 %v798, %v846
        %v848 = vpop.f32.mrf.mxu0
        %v849 = vadd.f32 %v800, %v848
        %850 = vmatmul.bf16.gmra.mxu0 %v574
        %v851 = vpop.f32.mrf.mxu0
        %v852 = vadd.f32 %v803, %v851
        %v853 = vpop.f32.mrf.mxu0
        %v854 = vadd.f32 %v805, %v853
        %855 = vmatmul.bf16.gmra.mxu0 %v576
        %v856 = vpop.f32.mrf.mxu0
        %v857 = vadd.f32 %v808, %v856
        %v858 = vpop.f32.mrf.mxu0
        %v859 = vadd.f32 %v810, %v858
        %860 = vmatmul.bf16.gmra.mxu0 %v578
        %v861 = vpop.f32.mrf.mxu0
        %v862 = vadd.f32 %v813, %v861
        %v863 = vpop.f32.mrf.mxu0
        %v864 = vadd.f32 %v815, %v863
        %865 = vmatmul.bf16.gmra.mxu0 %v580
        %v866 = vpop.f32.mrf.mxu0
        %v867 = vadd.f32 %v818, %v866
        %v868 = vpop.f32.mrf.mxu0
        %v869 = vadd.f32 %v820, %v868
        %870 = vmatmul.bf16.gmra.mxu0 %v582
        %v871 = vpop.f32.mrf.mxu0
        %v872 = vadd.f32 %v823, %v871
        %v873 = vpop.f32.mrf.mxu0
        %v874 = vadd.f32 %v825, %v873
        %875 = vmatmul.bf16.gmra.mxu0 %v584
        %v876 = vpop.f32.mrf.mxu0
        %v877 = vadd.f32 %v828, %v876
        %v878 = vpop.f32.mrf.mxu0
        %v879 = vadd.f32 %v830, %v878
        %880 = vdwg.mxu0
        %881 = vmatpush.bf16.msra.mxu0 %v734
        %882 = vmatpush.bf16.msra.mxu0 %v732
        %883 = vmatpush.bf16.msra.mxu0 %v730
        %884 = vmatpush.bf16.msra.mxu0 %v728
        %885 = vmatpush.bf16.msra.mxu0 %v726
        %886 = vmatpush.bf16.msra.mxu0 %v724
        %887 = vmatpush.bf16.msra.mxu0 %v722
        %888 = vmatpush.bf16.msra.mxu0 %v720
        %889 = vmatmul.bf16.gmra.mxu0 %v569
        %v890 = vpop.f32.mrf.mxu0
        %v891 = vadd.f32 %v620, %v890
        %v892 = vpop.f32.mrf.mxu0
        %v893 = vadd.f32 %v620, %v892
        %894 = vmatmul.bf16.gmra.mxu0 %v571
        %v895 = vpop.f32.mrf.mxu0
        %v896 = vadd.f32 %v620, %v895
        %v897 = vpop.f32.mrf.mxu0
        %v898 = vadd.f32 %v620, %v897
        %899 = vmatmul.bf16.gmra.mxu0 %v573
        %v900 = vpop.f32.mrf.mxu0
        %v901 = vadd.f32 %v620, %v900
        %v902 = vpop.f32.mrf.mxu0
        %v903 = vadd.f32 %v620, %v902
        %904 = vmatmul.bf16.gmra.mxu0 %v575
        %v905 = vpop.f32.mrf.mxu0
        %v906 = vadd.f32 %v620, %v905
        %v907 = vpop.f32.mrf.mxu0
        %v908 = vadd.f32 %v620, %v907
        %909 = vmatmul.bf16.gmra.mxu0 %v577
        %v910 = vpop.f32.mrf.mxu0
        %v911 = vadd.f32 %v620, %v910
        %v912 = vpop.f32.mrf.mxu0
        %v913 = vadd.f32 %v620, %v912
        %914 = vmatmul.bf16.gmra.mxu0 %v579
        %v915 = vpop.f32.mrf.mxu0
        %v916 = vadd.f32 %v620, %v915
        %v917 = vpop.f32.mrf.mxu0
        %v918 = vadd.f32 %v620, %v917
        %919 = vmatmul.bf16.gmra.mxu0 %v581
        %v920 = vpop.f32.mrf.mxu0
        %v921 = vadd.f32 %v620, %v920
        %v922 = vpop.f32.mrf.mxu0
        %v923 = vadd.f32 %v620, %v922
        %924 = vmatmul.bf16.gmra.mxu0 %v583
        %v925 = vpop.f32.mrf.mxu0
        %v926 = vadd.f32 %v620, %v925
        %v927 = vpop.f32.mrf.mxu0
        %v928 = vadd.f32 %v620, %v927
        %929 = vdwg.mxu0
        %930 = vmatpush.bf16.msra.mxu0 %v750
        %931 = vmatpush.bf16.msra.mxu0 %v748
        %932 = vmatpush.bf16.msra.mxu0 %v746
        %933 = vmatpush.bf16.msra.mxu0 %v744
        %934 = vmatpush.bf16.msra.mxu0 %v742
        %935 = vmatpush.bf16.msra.mxu0 %v740
        %936 = vmatpush.bf16.msra.mxu0 %v738
        %937 = vmatpush.bf16.msra.mxu0 %v736
        %938 = vmatmul.bf16.gmra.mxu0 %v570
        %v939 = vpop.f32.mrf.mxu0
        %v940 = vadd.f32 %v891, %v939
        %v941 = vpop.f32.mrf.mxu0
        %v942 = vadd.f32 %v893, %v941
        %943 = vmatmul.bf16.gmra.mxu0 %v572
        %v944 = vpop.f32.mrf.mxu0
        %v945 = vadd.f32 %v896, %v944
        %v946 = vpop.f32.mrf.mxu0
        %v947 = vadd.f32 %v898, %v946
        %948 = vmatmul.bf16.gmra.mxu0 %v574
        %v949 = vpop.f32.mrf.mxu0
        %v950 = vadd.f32 %v901, %v949
        %v951 = vpop.f32.mrf.mxu0
        %v952 = vadd.f32 %v903, %v951
        %953 = vmatmul.bf16.gmra.mxu0 %v576
        %v954 = vpop.f32.mrf.mxu0
        %v955 = vadd.f32 %v906, %v954
        %v956 = vpop.f32.mrf.mxu0
        %v957 = vadd.f32 %v908, %v956
        %958 = vmatmul.bf16.gmra.mxu0 %v578
        %v959 = vpop.f32.mrf.mxu0
        %v960 = vadd.f32 %v911, %v959
        %v961 = vpop.f32.mrf.mxu0
        %v962 = vadd.f32 %v913, %v961
        %963 = vmatmul.bf16.gmra.mxu0 %v580
        %v964 = vpop.f32.mrf.mxu0
        %v965 = vadd.f32 %v916, %v964
        %v966 = vpop.f32.mrf.mxu0
        %v967 = vadd.f32 %v918, %v966
        %968 = vmatmul.bf16.gmra.mxu0 %v582
        %v969 = vpop.f32.mrf.mxu0
        %v970 = vadd.f32 %v921, %v969
        %v971 = vpop.f32.mrf.mxu0
        %v972 = vadd.f32 %v923, %v971
        %973 = vmatmul.bf16.gmra.mxu0 %v584
        %v974 = vpop.f32.mrf.mxu0
        %v975 = vadd.f32 %v926, %v974
        %v976 = vpop.f32.mrf.mxu0
        %v977 = vadd.f32 %v928, %v976
        %978 = vdwg.mxu0
        %979 = vst [vmem:[%s351] sm:$0xff] %v842
        %980 = vst [vmem:[%s351 + $0x8] sm:$0xff] %v940
        %981 = vst [vmem:[%s351 + $0x10] sm:$0xff] %v844
        %982 = vst [vmem:[%s351 + $0x18] sm:$0xff] %v942
        %983 = vst [vmem:[%s351 + $0x20] sm:$0xff] %v847
        %984 = vst [vmem:[%s351 + $0x28] sm:$0xff] %v945
        %985 = vst [vmem:[%s351 + $0x30] sm:$0xff] %v849
        %986 = vst [vmem:[%s351 + $0x38] sm:$0xff] %v947
        %987 = vst [vmem:[%s351 + $0x40] sm:$0xff] %v852
        %988 = vst [vmem:[%s351 + $0x48] sm:$0xff] %v950
        %989 = vst [vmem:[%s351 + $0x50] sm:$0xff] %v854
        %990 = vst [vmem:[%s351 + $0x58] sm:$0xff] %v952
        %991 = vst [vmem:[%s351 + $0x60] sm:$0xff] %v857
        %992 = vst [vmem:[%s351 + $0x68] sm:$0xff] %v955
        %993 = vst [vmem:[%s351 + $0x70] sm:$0xff] %v859
        %994 = vst [vmem:[%s351 + $0x78] sm:$0xff] %v957
        %995 = vst [vmem:[%s351 + $0x80] sm:$0xff] %v862
        %996 = vst [vmem:[%s351 + $0x88] sm:$0xff] %v960
        %997 = vst [vmem:[%s351 + $0x90] sm:$0xff] %v864
        %998 = vst [vmem:[%s351 + $0x98] sm:$0xff] %v962
        %999 = vst [vmem:[%s351 + $0xa0] sm:$0xff] %v867
        %1000 = vst [vmem:[%s351 + $0xa8] sm:$0xff] %v965
        %1001 = vst [vmem:[%s351 + $0xb0] sm:$0xff] %v869
        %1002 = vst [vmem:[%s351 + $0xb8] sm:$0xff] %v967
        %1003 = vst [vmem:[%s351 + $0xc0] sm:$0xff] %v872
        %1004 = vst [vmem:[%s351 + $0xc8] sm:$0xff] %v970
        %1005 = vst [vmem:[%s351 + $0xd0] sm:$0xff] %v874
        %1006 = vst [vmem:[%s351 + $0xd8] sm:$0xff] %v972
        %1007 = vst [vmem:[%s351 + $0xe0] sm:$0xff] %v877
        %1008 = vst [vmem:[%s351 + $0xe8] sm:$0xff] %v975
        %1009 = vst [vmem:[%s351 + $0xf0] sm:$0xff] %v879
        %1010 = vst [vmem:[%s351 + $0xf8] sm:$0xff] %v977
        %p1011 = scmp.eq.s32.totalorder %s22, 0
        // Predicated region
        $region53: #{mlp_forward.4} parent=47 // pred_check
          %p1012 = pneg %p1011
        $region54: #{mlp_forward.4} parent=47 // pred_check_branch
          %1014 = sbr.rel (%p1012) target = $region56
        $region55: #{mlp_forward.4} parent=47 // pred_region
          %v1015 = vlaneseq
          %vm1016 = vcmp.ge.s32.totalorder %v1015, 0
          %vm1017 = vcmp.lt.s32.totalorder %v1015, 256
          %vm1018 = vmand %vm1016, %vm1017
          %1019 = vst.msk [vmem:[#allocation2] sm:$0x3] %vm1018, 0.0
          %1020 = vst.msk [vmem:[#allocation3] sm:$0x3] %vm1018, 0.0
        $region56: #{mlp_forward.4} parent=47 // pred_fallthru
          _
        %v1021 = vld [vmem:[#allocation2] sm:$0x3]
        %v1022 = vadd.f32 %v842, %v844
        %v1023 = vadd.f32 %v1022, %v847
        %v1024 = vadd.f32 %v1023, %v849
        %v1025 = vadd.f32 %v1024, %v852
        %v1026 = vadd.f32 %v1025, %v854
        %v1027 = vadd.f32 %v1026, %v857
        %v1028 = vadd.f32 %v1027, %v859
        %v1029 = vadd.f32 %v1028, %v862
        %v1030 = vadd.f32 %v1029, %v864
        %v1031 = vadd.f32 %v1030, %v867
        %v1032 = vadd.f32 %v1031, %v869
        %v1033 = vadd.f32 %v1032, %v872
        %v1034 = vadd.f32 %v1033, %v874
        %v1035 = vadd.f32 %v1034, %v877
        %v1036 = vadd.f32 %v1035, %v879
        %v1037 = vrot.slane %v1036, 4
        %v1038 = vadd.f32 %v1036, %v1037
        %v1039 = vrot.slane %v1038, 2
        %v1040 = vadd.f32 %v1038, %v1039
        %v1041 = vrot.slane %v1040, 1
        %v1042 = vadd.f32 %v1040, %v1041
        %v1043 = vadd.f32 %v940, %v942
        %v1044 = vadd.f32 %v1043, %v945
        %v1045 = vadd.f32 %v1044, %v947
        %v1046 = vadd.f32 %v1045, %v950
        %v1047 = vadd.f32 %v1046, %v952
        %v1048 = vadd.f32 %v1047, %v955
        %v1049 = vadd.f32 %v1048, %v957
        %v1050 = vadd.f32 %v1049, %v960
        %v1051 = vadd.f32 %v1050, %v962
        %v1052 = vadd.f32 %v1051, %v965
        %v1053 = vadd.f32 %v1052, %v967
        %v1054 = vadd.f32 %v1053, %v970
        %v1055 = vadd.f32 %v1054, %v972
        %v1056 = vadd.f32 %v1055, %v975
        %v1057 = vadd.f32 %v1056, %v977
        %v1058 = vrot.slane %v1057, 4
        %v1059 = vadd.f32 %v1057, %v1058
        %v1060 = vrot.slane %v1059, 2
        %v1061 = vadd.f32 %v1059, %v1060
        %v1062 = vrot.slane %v1061, 1
        %v1063 = vadd.f32 %v1061, %v1062
        %v1066 = vrot.slane %v1063, 7
        %vm1067 = vcmask 1040384
        %v1068 = vsel %vm1067, %v1042, %v1066
        %v1070 = vadd.f32 %v1021, %v1068
        %v1071 = vlaneseq
        %vm1072 = vcmp.ge.s32.totalorder %v1071, 0
        %vm1073 = vcmp.lt.s32.totalorder %v1071, 256
        %vm1074 = vmand %vm1072, %vm1073
        %1075 = vst.msk [vmem:[#allocation2] sm:$0x3] %vm1074, %v1070
        %v1076 = vld [vmem:[#allocation3] sm:$0x3]
        %v1077 = vmul.f32 %v842, %v842
        %v1078 = vmul.f32 %v940, %v940
        %v1079 = vmul.f32 %v844, %v844
        %v1080 = vmul.f32 %v942, %v942
        %v1081 = vmul.f32 %v847, %v847
        %v1082 = vmul.f32 %v945, %v945
        %v1083 = vmul.f32 %v849, %v849
        %v1084 = vmul.f32 %v947, %v947
        %v1085 = vmul.f32 %v852, %v852
        %v1086 = vmul.f32 %v950, %v950
        %v1087 = vmul.f32 %v854, %v854
        %v1088 = vmul.f32 %v952, %v952
        %v1089 = vmul.f32 %v857, %v857
        %v1090 = vmul.f32 %v955, %v955
        %v1091 = vmul.f32 %v859, %v859
        %v1092 = vmul.f32 %v957, %v957
        %v1093 = vmul.f32 %v862, %v862
        %v1094 = vmul.f32 %v960, %v960
        %v1095 = vmul.f32 %v864, %v864
        %v1096 = vmul.f32 %v962, %v962
        %v1097 = vmul.f32 %v867, %v867
        %v1098 = vmul.f32 %v965, %v965
        %v1099 = vmul.f32 %v869, %v869
        %v1100 = vmul.f32 %v967, %v967
        %v1101 = vmul.f32 %v872, %v872
        %v1102 = vmul.f32 %v970, %v970
        %v1103 = vmul.f32 %v874, %v874
        %v1104 = vmul.f32 %v972, %v972
        %v1105 = vmul.f32 %v877, %v877
        %v1106 = vmul.f32 %v975, %v975
        %v1107 = vmul.f32 %v879, %v879
        %v1108 = vmul.f32 %v977, %v977
        %v1109 = vadd.f32 %v1077, %v1079
        %v1110 = vadd.f32 %v1109, %v1081
        %v1111 = vadd.f32 %v1110, %v1083
        %v1112 = vadd.f32 %v1111, %v1085
        %v1113 = vadd.f32 %v1112, %v1087
        %v1114 = vadd.f32 %v1113, %v1089
        %v1115 = vadd.f32 %v1114, %v1091
        %v1116 = vadd.f32 %v1115, %v1093
        %v1117 = vadd.f32 %v1116, %v1095
        %v1118 = vadd.f32 %v1117, %v1097
        %v1119 = vadd.f32 %v1118, %v1099
        %v1120 = vadd.f32 %v1119, %v1101
        %v1121 = vadd.f32 %v1120, %v1103
        %v1122 = vadd.f32 %v1121, %v1105
        %v1123 = vadd.f32 %v1122, %v1107
        %v1124 = vrot.slane %v1123, 4
        %v1125 = vadd.f32 %v1123, %v1124
        %v1126 = vrot.slane %v1125, 2
        %v1127 = vadd.f32 %v1125, %v1126
        %v1128 = vrot.slane %v1127, 1
        %v1129 = vadd.f32 %v1127, %v1128
        %v1130 = vadd.f32 %v1078, %v1080
        %v1131 = vadd.f32 %v1130, %v1082
        %v1132 = vadd.f32 %v1131, %v1084
        %v1133 = vadd.f32 %v1132, %v1086
        %v1134 = vadd.f32 %v1133, %v1088
        %v1135 = vadd.f32 %v1134, %v1090
        %v1136 = vadd.f32 %v1135, %v1092
        %v1137 = vadd.f32 %v1136, %v1094
        %v1138 = vadd.f32 %v1137, %v1096
        %v1139 = vadd.f32 %v1138, %v1098
        %v1140 = vadd.f32 %v1139, %v1100
        %v1141 = vadd.f32 %v1140, %v1102
        %v1142 = vadd.f32 %v1141, %v1104
        %v1143 = vadd.f32 %v1142, %v1106
        %v1144 = vadd.f32 %v1143, %v1108
        %v1145 = vrot.slane %v1144, 4
        %v1146 = vadd.f32 %v1144, %v1145
        %v1147 = vrot.slane %v1146, 2
        %v1148 = vadd.f32 %v1146, %v1147
        %v1149 = vrot.slane %v1148, 1
        %v1150 = vadd.f32 %v1148, %v1149
        %v1153 = vrot.slane %v1150, 7
        %v1154 = vsel %vm1067, %v1129, %v1153
        %v1156 = vadd.f32 %v1076, %v1154
        %1157 = vst.msk [vmem:[#allocation3] sm:$0x3] %vm1074, %v1156
        %p1158 = scmp.eq.s32.totalorder %s22, 3
        // Predicated region
        $region57: #{mlp_forward.4} parent=47 // pred_check
          %p1159 = pneg %p1158
        $region58: #{mlp_forward.4} parent=47 // pred_check_branch
          %1161 = sbr.rel (%p1159) target = $region60
        $region59: #{mlp_forward.4} parent=47 // pred_region
          %v1162 = vld [vmem:[#allocation2] sm:$0x3]
          %v1163 = vmul.f32 %v1162, 0.001953125
          %v1164 = vld [vmem:[#allocation3] sm:$0x3]
          %v1165 = vmul.f32 %v1164, 0.001953125
          %v1166 = vmul.f32 %v1163, %v1163
          %v1167 = vsub.f32 %v1165, %v1166
          %1168 = vst.msk [vmem:[%s8] sm:$0x3] %vm1074, %v1163
          %v1169 = vadd.f32 %v1167, 1e-05
          %v1170 = vrsqrt.pop %v1169
          %v1171 = vmul.f32 %v1170, %v1169
          %v1172 = vmul.f32 %v1171, %v1170
          %v1173 = vmul.f32 0.5, %v1172
          %v1174 = vsub.f32 1.5, %v1173
          %v1175 = vmul.f32 %v1170, %v1174
          %vm1176 = vweird.f32 %v1169
          %vm1177 = vweird.f32 %v1170
          %vm1178 = vmor %vm1176, %vm1177
          %v1179 = vsel %vm1178, %v1170, %v1175
          %1180 = vst.msk [vmem:[%s9] sm:$0x3] %vm1074, %v1179
        $region60: #{mlp_forward.4} parent=47 // pred_fallthru
          _
        %s1181 = smul.u32 16, %s22
        %p1182 = scmp.lt.s32.totalorder %s1181, 63
        %s1183 = scalar_select %p1182, %s1181, 63
        %s1184 = smul.addr %s1183, 2
        %s1185 = smul.addr %s1184, 8
        %s1186 = scalar_lea.vmem %s7, %s1185
        // Predicated region
        $region61: #{mlp_forward.4} parent=47 // pred_check
          %p1187 = pneg %p192
        $region62: #{mlp_forward.4} parent=47 // pred_check_branch
          %1189 = sbr.rel (%p1187) target = $region64
        $region63: #{mlp_forward.4} parent=47 // pred_region
          %s1190 = smul.u32 16, %s22
        $region64: #{mlp_forward.4} parent=47 // pred_fallthru
          _
        // Predicated region
        $region65: #{mlp_forward.4} parent=47 // pred_check
          %p1191 = pneg %p213
        $region66: #{mlp_forward.4} parent=47 // pred_check_branch
          %1193 = sbr.rel (%p1191) target = $region68
        $region67: #{mlp_forward.4} parent=47 // pred_region
          _
        $region68: #{mlp_forward.4} parent=47 // pred_fallthru
          _
        // Predicated region
        $region69: #{mlp_forward.4} parent=47 // pred_check
          %p1194 = pneg %p234
        $region70: #{mlp_forward.4} parent=47 // pred_check_branch
          %1196 = sbr.rel (%p1194) target = $region72
        $region71: #{mlp_forward.4} parent=47 // pred_region
          _
        $region72: #{mlp_forward.4} parent=47 // pred_fallthru
          _
        // Predicated region
        $region73: #{mlp_forward.4} parent=47 // pred_check
          %p1197 = pneg %p213
        $region74: #{mlp_forward.4} parent=47 // pred_check_branch
          %1199 = sbr.rel (%p1197) target = $region76
        $region75: #{mlp_forward.4} parent=47 // pred_region
          _
        $region76: #{mlp_forward.4} parent=47 // pred_fallthru
          _
        // Predicated region
        $region77: #{mlp_forward.4} parent=47 // pred_check
          %p1200 = pneg %p234
        $region78: #{mlp_forward.4} parent=47 // pred_check_branch
          %1202 = sbr.rel (%p1200) target = $region80
        $region79: #{mlp_forward.4} parent=47 // pred_region
          _
        $region80: #{mlp_forward.4} parent=47 // pred_fallthru
          _
      $region48: #{mlp_forward.4} parent=5 // pred_fallthru
        _
      %p1203 = scmp.le.s32.totalorder 2, %s17
      // Predicated region
      $region81: #{mlp_forward.4} parent=5 // pred_check
        %p1204 = pneg %p1203
      $region82: #{mlp_forward.4} parent=5 // pred_check_branch
        %1206 = sbr.rel (%p1204) target = $region84
      $region83: #{mlp_forward.4} parent=5 // pred_region
        %s1207 = ssub.s32 %s17, 2
        // Predicated region
        $region85: #{mlp_forward.4} parent=83 // pred_check
          %p1208 = pneg %p198
        $region86: #{mlp_forward.4} parent=83 // pred_check_branch
          %1210 = sbr.rel (%p1208) target = $region88
        $region87: #{mlp_forward.4} parent=83 // pred_region
          %s1211 = smul.u32 16, %s23
          %p1212 = scmp.lt.s32.totalorder %s1211, 63
          %s1213 = scalar_select %p1212, %s1211, 63
          %s1214 = smul.addr %s1213, 2
          %s1215 = smul.addr %s1214, 8
          %s1216 = scalar_lea.vmem %s7, %s1215
        $region88: #{mlp_forward.4} parent=83 // pred_fallthru
          _
      $region84: #{mlp_forward.4} parent=5 // pred_fallthru
        _
    $region6: #{mlp_forward.4} parent=1 // loop_footer
      %s21 = sadd.s32 1, %s17
    $region7: #{mlp_forward.4} parent=1 // loop_footer_branch
      %16 = sbr.rel target = $region3
    $region8: #{mlp_forward.4} parent=1 // loop_exit
      _
    %1217 = vsyncpa [#allocation5], 1
    %s1218 = scalar_lea.sflag [#allocation5], 1
    %1219 = vsyncpa %s1218, 1

</llo_original>
